<compile_context>
chip_gen: v5e
topology: v5e:2x2
jax: 0.10.0
libtpu: 0.0.40
codegen_flags: <defaults>
</compile_context>

<pallas_src>
import math
import numpy as np
import jax
import jax.numpy as jnp
from jax import lax
from jax.experimental import pallas as pl
from jax.experimental.pallas import tpu as pltpu


def _round_up(x, m):
    return (x + m - 1) // m * m


# 48 MiB scoped VMEM: comfortably above both kernels' working sets at the default tiles,
# below v7x's 64 MiB physical VMEM and well below v5e/v6e's 128 MiB.
_VMEM_LIMIT = 48 * 1024 * 1024


def _pick_tile(total, tile, unit=16):
    """Row-tile size: multiple of `unit` (bf16 sublane packing), divides the padded total,
       and gives >= 2 grid steps when the problem is big enough (v7x has 2 TensorCores)."""
    t = min(tile, _round_up(total, unit))
    if _round_up(total, t) // t < 2 and t >= 2 * unit:
        t = _round_up(t // 2, unit)
    return _round_up(total, t), t


# ----------------------------- Pallas kernels -----------------------------

def conv_relu_pool_kernel(p_ref, w_ref, b_ref, o_ref):
    """conv1 -> relu -> maxpool2x2 for one tile of pooled output rows.
       p_ref: [4, TM, 25] bf16 im2col patches (leading 4 = positions in each 2x2 pool window)
       w_ref: [25, 8]     bf16 conv1 weights (cols 6..7 zero), b_ref: [1, 8] f32 bias.
       o_ref: [TM, 8]     bf16 = maxpool2x2(relu(conv + bias))."""
    pm = p_ref[...]
    four, tm, kp = pm.shape
    z = jnp.dot(pm.reshape(four * tm, kp), w_ref[...],
                preferred_element_type=jnp.float32)          # one tall MXU GEMM, f32 acc
    z = jnp.max(z.reshape(four, tm, -1), axis=0)             # 2x2 max-pool (VPU, leading dim)
    # max_k relu(z_k + b) == relu(max_k z_k + b): bias + ReLU once, after the max.
    o_ref[...] = jnp.maximum(z + b_ref[...], 0.0).astype(o_ref.dtype)


def conv2_mlp_kernel(p_ref, w2_ref, b2_ref, wf1_ref, bf1_ref,
                     wf2_ref, bf2_ref, wf3_ref, bf3_ref, o_ref):
    """Fused conv2 -> relu -> maxpool -> flatten -> fc1 -> relu -> fc2 -> relu -> fc3.
       p_ref  : [4, 16, TB, 150] bf16 conv2 im2col patches, grouped by pool-window position
                (4) and pooled spatial position (16 = 4x4); TB batch rows.
       w2_ref : [150, 128] bf16 conv2 weights (cols >= 16 zero), b2_ref: [1, 128] f32 bias.
       wf1_ref: [16, 128, 128] bf16 fc1 weights, one [Cin_pad, 120_pad] block per pooled
                position (PyTorch NCHW flatten permutation folded in offline).
       o_ref  : [TB, 128] f32 logits (first 10 lanes valid)."""
    pm = p_ref[...]
    four, npos, tb, kp = pm.shape
    z = jnp.dot(pm.reshape(four * npos * tb, kp), w2_ref[...],
                preferred_element_type=jnp.float32)          # [4*16*TB, 128], one GEMM
    z = jnp.max(z.reshape(four, npos * tb, -1), axis=0)      # 2x2 max-pool
    # NOTE: fc1 correctness relies on padded lanes (>= 16) of y2 being exactly zero.
    # This holds because w2_ref cols >= 16 and b2_ref lanes >= 16 are zero-padded and
    # relu(0) == 0; keep those pads zero if this kernel is modified.
    y2 = jnp.maximum(z + b2_ref[...], 0.0)                   # [16*TB, 128] f32, rows (pos, b)
    y2 = y2.reshape(npos, tb, -1).astype(jnp.bfloat16)

    # fc1: block-structured contraction over the 16 pooled spatial positions.
    acc = jnp.dot(y2[0], wf1_ref[0], preferred_element_type=jnp.float32)
    for p in range(1, npos):
        acc = acc + jnp.dot(y2[p], wf1_ref[p], preferred_element_type=jnp.float32)
    h = jnp.maximum(acc + bf1_ref[...], 0.0).astype(jnp.bfloat16)
    h = jnp.maximum(jnp.dot(h, wf2_ref[...], preferred_element_type=jnp.float32)
                    + bf2_ref[...], 0.0).astype(jnp.bfloat16)
    o_ref[...] = (jnp.dot(h, wf3_ref[...], preferred_element_type=jnp.float32)
                  + bf3_ref[...])


# ------------------------------ kernel wrappers ------------------------------

def conv_relu_pool(patches_grouped, w_mat, bias_row, tile_m=2048):
    """patches_grouped: [4, M, 25] bf16, w_mat [25, 8] bf16, bias_row [1, 8] f32.
       Returns [M, 8] bf16 = maxpool(relu(conv + bias)).  Gridded + pipelined over M."""
    _, M, P = patches_grouped.shape
    N = w_mat.shape[1]
    m_pad, tm = _pick_tile(M, tile_m)
    if m_pad != M:
        patches_grouped = jnp.pad(patches_grouped, ((0, 0), (0, m_pad - M), (0, 0)))
    out = pl.pallas_call(
        conv_relu_pool_kernel,
        out_shape=jax.ShapeDtypeStruct((m_pad, N), jnp.bfloat16),
        grid=(m_pad // tm,),
        in_specs=[pl.BlockSpec((4, tm, P), lambda i: (0, i, 0)),
                  pl.BlockSpec((P, N), lambda i: (0, 0)),
                  pl.BlockSpec((1, N), lambda i: (0, 0))],
        out_specs=pl.BlockSpec((tm, N), lambda i: (i, 0)),
        compiler_params=pltpu.CompilerParams(dimension_semantics=("parallel",),
                                             vmem_limit_bytes=_VMEM_LIMIT),
    )(patches_grouped, w_mat, bias_row)
    return out[:M]


def conv2_mlp(p2g, w2_mat, b2_row, wf1, bf1, wf2, bf2, wf3, bf3, tile_b=256):
    """p2g: [4, 16, B, 150] bf16 conv2 patches (rows ordered pooled-position-major, batch-minor).
       Returns logits [B, 128] f32 (first 10 lanes valid).  Gridded + pipelined over batch."""
    _, npos, B, P2 = p2g.shape
    b_pad, tb = _pick_tile(B, tile_b)
    if b_pad != B:
        p2g = jnp.pad(p2g, ((0, 0), (0, 0), (0, b_pad - B), (0, 0)))
    out = pl.pallas_call(
        conv2_mlp_kernel,
        out_shape=jax.ShapeDtypeStruct((b_pad, 128), jnp.float32),
        grid=(b_pad // tb,),
        in_specs=[pl.BlockSpec((4, npos, tb, P2), lambda i: (0, 0, i, 0)),
                  pl.BlockSpec(w2_mat.shape, lambda i: (0, 0)),
                  pl.BlockSpec(b2_row.shape, lambda i: (0, 0)),
                  pl.BlockSpec(wf1.shape, lambda i: (0, 0, 0)),
                  pl.BlockSpec(bf1.shape, lambda i: (0, 0)),
                  pl.BlockSpec(wf2.shape, lambda i: (0, 0)),
                  pl.BlockSpec(bf2.shape, lambda i: (0, 0)),
                  pl.BlockSpec(wf3.shape, lambda i: (0, 0)),
                  pl.BlockSpec(bf3.shape, lambda i: (0, 0))],
        out_specs=pl.BlockSpec((tb, 128), lambda i: (i, 0)),
        compiler_params=pltpu.CompilerParams(dimension_semantics=("parallel",),
                                             vmem_limit_bytes=_VMEM_LIMIT),
    )(p2g, w2_mat, b2_row, wf1, bf1, wf2, bf2, wf3, bf3)
    return out[:B]


# ------------------------------- glue (JAX) -------------------------------

def im2col(img, K):
    """img: [B, H, W, C] -> patches [B, OH, OW, K*K*C], flat order (di, dj, c)."""
    B, H, W, C = img.shape
    OH, OW = H - K + 1, W - K + 1
    cols = [img[:, di:di + OH, dj:dj + OW, :] for di in range(K) for dj in range(K)]
    p = jnp.stack(cols, axis=3)                      # [B, OH, OW, K*K, C]
    return p.reshape(B, OH, OW, K * K * C)


def pool_group(p):
    """p: [B, OH, OW, P] (OH, OW even) -> [4, B*(OH//2)*(OW//2), P]
       grouping the 4 conv-output positions of each 2x2 pool window on axis 0."""
    B, OH, OW, P = p.shape
    g = jnp.stack([p[:, a::2, b::2, :] for a in (0, 1) for b in (0, 1)], axis=0)
    return g.reshape(4, B * (OH // 2) * (OW // 2), P)


def net_forward(x, params):
    """x: [B, 1, 28, 28] (NCHW, like PyTorch) -> logits [B, 10]."""
    (w1, b1, w2, b2, f1w, f1b, f2w, f2b, f3w, f3b) = params
    B = x.shape[0]

    # ---- conv1 -> relu -> maxpool (Pallas kernel 1, gridded over B*12*12 pooled rows) ----
    img = jnp.transpose(x, (0, 2, 3, 1)).astype(jnp.bfloat16)      # [B, 28, 28, 1]
    p1 = pool_group(im2col(img, 5))                                # [4, B*144, 25] bf16
    w1m = jnp.pad(w1.reshape(6, 25).T, ((0, 0), (0, 8 - 6))).astype(jnp.bfloat16)  # [25, 8]
    b1r = jnp.pad(b1.reshape(1, 6), ((0, 0), (0, 8 - 6)))                           # [1, 8] f32
    y1 = conv_relu_pool(p1, w1m, b1r)                              # [B*144, 8] bf16, 6 real ch.

    # ---- conv2 patches (XLA glue), rows ordered (pooled position, batch) ----
    img1 = y1[:, :6].reshape(B, 12, 12, 6)                         # bf16
    p2 = im2col(img1, 5)                                           # [B, 8, 8, 150] bf16
    g = jnp.stack([p2[:, a::2, c::2, :] for a in (0, 1) for c in (0, 1)], axis=0)  # [4,B,4,4,150]
    p2g = jnp.transpose(g, (0, 2, 3, 1, 4)).reshape(4, 16, B, 150)

    # ---- weights for the fused conv2 + MLP kernel (output lanes zero-padded to 128) ----
    w2m = jnp.pad(jnp.transpose(w2, (2, 3, 1, 0)).reshape(150, 16),
                  ((0, 0), (0, 128 - 16))).astype(jnp.bfloat16)    # [150, 128], rows (di,dj,ic)
    b2r = jnp.pad(b2.reshape(1, 16), ((0, 0), (0, 128 - 16)))      # [1, 128] f32 (pads MUST be 0)
    # fc1 with the PyTorch NCHW-flatten permutation folded in:
    # feat[b, c*16 + i*4 + j] = pooled_conv2[b, c, i, j]  =>  one [16, 120] block per p=i*4+j.
    wf1 = jnp.transpose(f1w.reshape(120, 16, 4, 4), (2, 3, 1, 0)).reshape(16, 16, 120)
    wf1 = jnp.pad(wf1, ((0, 0), (0, 128 - 16), (0, 128 - 120))).astype(jnp.bfloat16)  # [16,128,128]
    bf1 = jnp.pad(f1b.reshape(1, 120), ((0, 0), (0, 128 - 120)))   # [1, 128] f32
    wf2 = jnp.pad(f2w.T, ((0, 128 - 120), (0, 128 - 84))).astype(jnp.bfloat16)        # [128, 128]
    bf2 = jnp.pad(f2b.reshape(1, 84), ((0, 0), (0, 128 - 84)))     # [1, 128] f32
    wf3 = jnp.pad(f3w.T, ((0, 128 - 84), (0, 128 - 10))).astype(jnp.bfloat16)         # [128, 128]
    bf3 = jnp.pad(f3b.reshape(1, 10), ((0, 0), (0, 128 - 10)))     # [1, 128] f32

    # ---- Pallas kernel 2: conv2 -> relu -> maxpool -> flatten -> fc1 -> fc2 -> fc3 ----
    logits = conv2_mlp(p2g, w2m, b2r, wf1, bf1, wf2, bf2, wf3, bf3)   # [B, 128] f32
    return logits[:, :10]


# --------------------------- params / reference ---------------------------

def init_params(key):
    def u(k, shape, fan_in):
        bound = 1.0 / math.sqrt(fan_in)
        return jax.random.uniform(k, shape, jnp.float32, -bound, bound)

    ks = jax.random.split(key, 10)
    w1 = u(ks[0], (6, 1, 5, 5), 25);     b1 = u(ks[1], (6,), 25)
    w2 = u(ks[2], (16, 6, 5, 5), 150);   b2 = u(ks[3], (16,), 150)
    f1w = u(ks[4], (120, 256), 256);     f1b = u(ks[5], (120,), 256)
    f2w = u(ks[6], (84, 120), 120);      f2b = u(ks[7], (84,), 120)
    f3w = u(ks[8], (10, 84), 84);        f3b = u(ks[9], (10,), 84)
    return (w1, b1, w2, b2, f1w, f1b, f2w, f2b, f3w, f3b)


def reference_forward(x, params):
    (w1, b1, w2, b2, f1w, f1b, f2w, f2b, f3w, f3b) = params
    hi = jax.lax.Precision.HIGHEST

    def conv(h, w, b):
        dn = lax.conv_dimension_numbers(h.shape, w.shape, ('NCHW', 'OIHW', 'NCHW'))
        out = lax.conv_general_dilated(h, w, (1, 1), 'VALID',
                                       dimension_numbers=dn, precision=hi)
        return out + b.reshape(1, -1, 1, 1)

    def pool(h):
        return lax.reduce_window(h, -jnp.inf, lax.max, (1, 1, 2, 2), (1, 1, 2, 2), 'VALID')

    h = pool(jnp.maximum(conv(x, w1, b1), 0.0))
    h = pool(jnp.maximum(conv(h, w2, b2), 0.0))
    h = h.reshape(x.shape[0], 16 * 4 * 4)
    h = jnp.maximum(jnp.dot(h, f1w.T, precision=hi) + f1b, 0.0)
    h = jnp.maximum(jnp.dot(h, f2w.T, precision=hi) + f2b, 0.0)
    return jnp.dot(h, f3w.T, precision=hi) + f3b


# ---------------------------------- main -----------------------------------

if __name__ == "__main__":
    key = jax.random.PRNGKey(0)
    k_param, k_x = jax.random.split(key)
    params = init_params(k_param)
    x = jax.random.normal(k_x, (2, 1, 28, 28), jnp.float32)   # batch=2, MNIST-sized

    out = jax.jit(net_forward)(x, params)
    out = jax.block_until_ready(out)
    assert out.shape == (2, 10)

    ref = jax.block_until_ready(reference_forward(x, params))
    np.testing.assert_allclose(np.asarray(out), np.asarray(ref), rtol=2e-2, atol=2e-2)

    print("KERNEL_OK")
</pallas_src>

<mosaic_0001>
module attributes {stable_mosaic.version = 11 : i64} {
  func.func @conv_relu_pool_kernel(%arg0: i32, %arg1: memref<4x144x25xbf16, #tpu.memory_space<vmem>>, %arg2: memref<25x8xbf16, #tpu.memory_space<vmem>>, %arg3: memref<1x8xf32, #tpu.memory_space<vmem>>, %arg4: memref<144x8xbf16, #tpu.memory_space<vmem>>) attributes {dimension_semantics = [#tpu.dimension_semantics<parallel>], iteration_bounds = array<i64: 2>, scalar_prefetch = 0 : i64, scratch_operands = 0 : i64, tpu.core_type = #tpu.core_type<tc>, window_params = [{transform_indices = @transform_0, window_bounds = array<i64: 4, 144, 25>}, {pipeline_mode = #tpu.pipeline_mode<synchronous>, transform_indices = @transform_1, window_bounds = array<i64: 25, 8>}, {pipeline_mode = #tpu.pipeline_mode<synchronous>, transform_indices = @transform_2, window_bounds = array<i64: 1, 8>}, {transform_indices = @transform_3, window_bounds = array<i64: 144, 8>}]} {
    %c0 = arith.constant 0 : index
    %c0_0 = arith.constant 0 : index
    %c0_1 = arith.constant 0 : index
    %0 = vector.load %arg1[%c0, %c0_0, %c0_1] : memref<4x144x25xbf16, #tpu.memory_space<vmem>>, vector<4x144x25xbf16>
    %1 = vector.shape_cast %0 : vector<4x144x25xbf16> to vector<576x25xbf16>
    %c0_2 = arith.constant 0 : index
    %c0_3 = arith.constant 0 : index
    %2 = vector.load %arg2[%c0_2, %c0_3] : memref<25x8xbf16, #tpu.memory_space<vmem>>, vector<25x8xbf16>
    %cst = arith.constant dense<0.000000e+00> : vector<576x8xf32>
    %3 = tpu.matmul %1, %2, %cst {dimension_numbers = #tpu.dot_dimension_numbers<[1], [0], [0], [1], [0, 0, 1, 1], [], []>} : vector<576x25xbf16>, vector<25x8xbf16>, vector<576x8xf32> -> vector<576x8xf32>
    %4 = vector.shape_cast %3 : vector<576x8xf32> to vector<4x144x8xf32>
    %cst_4 = arith.constant dense<0xFF800000> : vector<144x8xf32>
    %5 = vector.multi_reduction <maximumf>, %4, %cst_4 [0] : vector<4x144x8xf32> to vector<144x8xf32>
    %c0_5 = arith.constant 0 : index
    %c0_6 = arith.constant 0 : index
    %6 = vector.load %arg3[%c0_5, %c0_6] : memref<1x8xf32, #tpu.memory_space<vmem>>, vector<1x8xf32>
    %7 = vector.broadcast %6 : vector<1x8xf32> to vector<144x8xf32>
    %8 = arith.addf %5, %7 : vector<144x8xf32>
    %cst_7 = arith.constant 0.000000e+00 : f32
    %9 = vector.broadcast %cst_7 : f32 to vector<144x8xf32>
    %10 = arith.maximumf %8, %9 : vector<144x8xf32>
    %11 = arith.truncf %10 : vector<144x8xf32> to vector<144x8xbf16>
    %c0_8 = arith.constant 0 : index
    %c0_9 = arith.constant 0 : index
    %12 = vector.load %arg4[%c0_8, %c0_9] : memref<144x8xbf16, #tpu.memory_space<vmem>>, vector<144x8xbf16>
    tpu.vector_store %arg4[%c0_8, %c0_9], %11 {strides = array<i32>} : memref<144x8xbf16, #tpu.memory_space<vmem>>, vector<144x8xbf16>,
    return
  }
  func.func @transform_0(%arg0: i32) -> (i32, i32, i32) {
    %c0_i32 = arith.constant 0 : i32
    %c0_i32_0 = arith.constant 0 : i32
    %c0_i32_1 = arith.constant 0 : i32
    return %c0_i32, %arg0, %c0_i32_0 : i32, i32, i32
  }
  func.func @transform_1(%arg0: i32) -> (i32, i32) {
    %c0_i32 = arith.constant 0 : i32
    %c0_i32_0 = arith.constant 0 : i32
    %c0_i32_1 = arith.constant 0 : i32
    return %c0_i32, %c0_i32_0 : i32, i32
  }
  func.func @transform_2(%arg0: i32) -> (i32, i32) {
    %c0_i32 = arith.constant 0 : i32
    %c0_i32_0 = arith.constant 0 : i32
    %c0_i32_1 = arith.constant 0 : i32
    return %c0_i32, %c0_i32_0 : i32, i32
  }
  func.func @transform_3(%arg0: i32) -> (i32, i32) {
    %c0_i32 = arith.constant 0 : i32
    %c0_i32_0 = arith.constant 0 : i32
    return %arg0, %c0_i32 : i32, i32
  }
}

module attributes {stable_mosaic.version = 11 : i64} {
  func.func @conv2_mlp_kernel(%arg0: i32, %arg1: memref<4x16x16x150xbf16, #tpu.memory_space<vmem>>, %arg2: memref<150x128xbf16, #tpu.memory_space<vmem>>, %arg3: memref<1x128xf32, #tpu.memory_space<vmem>>, %arg4: memref<16x128x128xbf16, #tpu.memory_space<vmem>>, %arg5: memref<1x128xf32, #tpu.memory_space<vmem>>, %arg6: memref<128x128xbf16, #tpu.memory_space<vmem>>, %arg7: memref<1x128xf32, #tpu.memory_space<vmem>>, %arg8: memref<128x128xbf16, #tpu.memory_space<vmem>>, %arg9: memref<1x128xf32, #tpu.memory_space<vmem>>, %arg10: memref<16x128xf32, #tpu.memory_space<vmem>>) attributes {dimension_semantics = [#tpu.dimension_semantics<parallel>], iteration_bounds = array<i64: 1>, scalar_prefetch = 0 : i64, scratch_operands = 0 : i64, tpu.core_type = #tpu.core_type<tc>, window_params = [{transform_indices = @transform_0, window_bounds = array<i64: 4, 16, 16, 150>}, {pipeline_mode = #tpu.pipeline_mode<synchronous>, transform_indices = @transform_1, window_bounds = array<i64: 150, 128>}, {pipeline_mode = #tpu.pipeline_mode<synchronous>, transform_indices = @transform_2, window_bounds = array<i64: 1, 128>}, {pipeline_mode = #tpu.pipeline_mode<synchronous>, transform_indices = @transform_3, window_bounds = array<i64: 16, 128, 128>}, {pipeline_mode = #tpu.pipeline_mode<synchronous>, transform_indices = @transform_4, window_bounds = array<i64: 1, 128>}, {pipeline_mode = #tpu.pipeline_mode<synchronous>, transform_indices = @transform_5, window_bounds = array<i64: 128, 128>}, {pipeline_mode = #tpu.pipeline_mode<synchronous>, transform_indices = @transform_6, window_bounds = array<i64: 1, 128>}, {pipeline_mode = #tpu.pipeline_mode<synchronous>, transform_indices = @transform_7, window_bounds = array<i64: 128, 128>}, {pipeline_mode = #tpu.pipeline_mode<synchronous>, transform_indices = @transform_8, window_bounds = array<i64: 1, 128>}, {transform_indices = @transform_9, window_bounds = array<i64: 16, 128>}]} {
    %c0 = arith.constant 0 : index
    %c0_0 = arith.constant 0 : index
    %c0_1 = arith.constant 0 : index
    %c0_2 = arith.constant 0 : index
    %0 = vector.load %arg1[%c0, %c0_0, %c0_1, %c0_2] : memref<4x16x16x150xbf16, #tpu.memory_space<vmem>>, vector<4x16x16x150xbf16>
    %1 = vector.shape_cast %0 : vector<4x16x16x150xbf16> to vector<1024x150xbf16>
    %c0_3 = arith.constant 0 : index
    %c0_4 = arith.constant 0 : index
    %2 = vector.load %arg2[%c0_3, %c0_4] : memref<150x128xbf16, #tpu.memory_space<vmem>>, vector<150x128xbf16>
    %cst = arith.constant dense<0.000000e+00> : vector<1024x128xf32>
    %3 = tpu.matmul %1, %2, %cst {dimension_numbers = #tpu.dot_dimension_numbers<[1], [0], [0], [1], [0, 0, 1, 1], [], []>} : vector<1024x150xbf16>, vector<150x128xbf16>, vector<1024x128xf32> -> vector<1024x128xf32>
    %4 = vector.shape_cast %3 : vector<1024x128xf32> to vector<4x256x128xf32>
    %cst_5 = arith.constant dense<0xFF800000> : vector<256x128xf32>
    %5 = vector.multi_reduction <maximumf>, %4, %cst_5 [0] : vector<4x256x128xf32> to vector<256x128xf32>
    %c0_6 = arith.constant 0 : index
    %c0_7 = arith.constant 0 : index
    %6 = vector.load %arg3[%c0_6, %c0_7] : memref<1x128xf32, #tpu.memory_space<vmem>>, vector<1x128xf32>
    %7 = vector.broadcast %6 : vector<1x128xf32> to vector<256x128xf32>
    %8 = arith.addf %5, %7 : vector<256x128xf32>
    %cst_8 = arith.constant 0.000000e+00 : f32
    %9 = vector.broadcast %cst_8 : f32 to vector<256x128xf32>
    %10 = arith.maximumf %8, %9 : vector<256x128xf32>
    %11 = vector.shape_cast %10 : vector<256x128xf32> to vector<16x16x128xf32>
    %12 = arith.truncf %11 : vector<16x16x128xf32> to vector<16x16x128xbf16>
    %13 = vector.extract_strided_slice %12 {offsets = [0, 0, 0], sizes = [1, 16, 128], strides = [1, 1, 1]} : vector<16x16x128xbf16> to vector<1x16x128xbf16>
    %14 = vector.shape_cast %13 : vector<1x16x128xbf16> to vector<16x128xbf16>
    %c0_9 = arith.constant 0 : index
    %c0_10 = arith.constant 0 : index
    %c0_11 = arith.constant 0 : index
    %15 = vector.load %arg4[%c0_9, %c0_10, %c0_11] : memref<16x128x128xbf16, #tpu.memory_space<vmem>>, vector<1x128x128xbf16>
    %16 = vector.shape_cast %15 : vector<1x128x128xbf16> to vector<128x128xbf16>
    %cst_12 = arith.constant dense<0.000000e+00> : vector<16x128xf32>
    %17 = tpu.matmul %14, %16, %cst_12 {dimension_numbers = #tpu.dot_dimension_numbers<[1], [0], [0], [1], [0, 0, 1, 1], [], []>} : vector<16x128xbf16>, vector<128x128xbf16>, vector<16x128xf32> -> vector<16x128xf32>
    %18 = vector.extract_strided_slice %12 {offsets = [1, 0, 0], sizes = [1, 16, 128], strides = [1, 1, 1]} : vector<16x16x128xbf16> to vector<1x16x128xbf16>
    %19 = vector.shape_cast %18 : vector<1x16x128xbf16> to vector<16x128xbf16>
    %c1 = arith.constant 1 : index
    %c0_13 = arith.constant 0 : index
    %c0_14 = arith.constant 0 : index
    %20 = vector.load %arg4[%c1, %c0_13, %c0_14] : memref<16x128x128xbf16, #tpu.memory_space<vmem>>, vector<1x128x128xbf16>
    %21 = vector.shape_cast %20 : vector<1x128x128xbf16> to vector<128x128xbf16>
    %cst_15 = arith.constant dense<0.000000e+00> : vector<16x128xf32>
    %22 = tpu.matmul %19, %21, %cst_15 {dimension_numbers = #tpu.dot_dimension_numbers<[1], [0], [0], [1], [0, 0, 1, 1], [], []>} : vector<16x128xbf16>, vector<128x128xbf16>, vector<16x128xf32> -> vector<16x128xf32>
    %23 = arith.addf %17, %22 : vector<16x128xf32>
    %24 = vector.extract_strided_slice %12 {offsets = [2, 0, 0], sizes = [1, 16, 128], strides = [1, 1, 1]} : vector<16x16x128xbf16> to vector<1x16x128xbf16>
    %25 = vector.shape_cast %24 : vector<1x16x128xbf16> to vector<16x128xbf16>
    %c2 = arith.constant 2 : index
    %c0_16 = arith.constant 0 : index
    %c0_17 = arith.constant 0 : index
    %26 = vector.load %arg4[%c2, %c0_16, %c0_17] : memref<16x128x128xbf16, #tpu.memory_space<vmem>>, vector<1x128x128xbf16>
    %27 = vector.shape_cast %26 : vector<1x128x128xbf16> to vector<128x128xbf16>
    %cst_18 = arith.constant dense<0.000000e+00> : vector<16x128xf32>
    %28 = tpu.matmul %25, %27, %cst_18 {dimension_numbers = #tpu.dot_dimension_numbers<[1], [0], [0], [1], [0, 0, 1, 1], [], []>} : vector<16x128xbf16>, vector<128x128xbf16>, vector<16x128xf32> -> vector<16x128xf32>
    %29 = arith.addf %23, %28 : vector<16x128xf32>
    %30 = vector.extract_strided_slice %12 {offsets = [3, 0, 0], sizes = [1, 16, 128], strides = [1, 1, 1]} : vector<16x16x128xbf16> to vector<1x16x128xbf16>
    %31 = vector.shape_cast %30 : vector<1x16x128xbf16> to vector<16x128xbf16>
    %c3 = arith.constant 3 : index
    %c0_19 = arith.constant 0 : index
    %c0_20 = arith.constant 0 : index
    %32 = vector.load %arg4[%c3, %c0_19, %c0_20] : memref<16x128x128xbf16, #tpu.memory_space<vmem>>, vector<1x128x128xbf16>
    %33 = vector.shape_cast %32 : vector<1x128x128xbf16> to vector<128x128xbf16>
    %cst_21 = arith.constant dense<0.000000e+00> : vector<16x128xf32>
    %34 = tpu.matmul %31, %33, %cst_21 {dimension_numbers = #tpu.dot_dimension_numbers<[1], [0], [0], [1], [0, 0, 1, 1], [], []>} : vector<16x128xbf16>, vector<128x128xbf16>, vector<16x128xf32> -> vector<16x128xf32>
    %35 = arith.addf %29, %34 : vector<16x128xf32>
    %36 = vector.extract_strided_slice %12 {offsets = [4, 0, 0], sizes = [1, 16, 128], strides = [1, 1, 1]} : vector<16x16x128xbf16> to vector<1x16x128xbf16>
    %37 = vector.shape_cast %36 : vector<1x16x128xbf16> to vector<16x128xbf16>
    %c4 = arith.constant 4 : index
    %c0_22 = arith.constant 0 : index
    %c0_23 = arith.constant 0 : index
    %38 = vector.load %arg4[%c4, %c0_22, %c0_23] : memref<16x128x128xbf16, #tpu.memory_space<vmem>>, vector<1x128x128xbf16>
    %39 = vector.shape_cast %38 : vector<1x128x128xbf16> to vector<128x128xbf16>
    %cst_24 = arith.constant dense<0.000000e+00> : vector<16x128xf32>
    %40 = tpu.matmul %37, %39, %cst_24 {dimension_numbers = #tpu.dot_dimension_numbers<[1], [0], [0], [1], [0, 0, 1, 1], [], []>} : vector<16x128xbf16>, vector<128x128xbf16>, vector<16x128xf32> -> vector<16x128xf32>
    %41 = arith.addf %35, %40 : vector<16x128xf32>
    %42 = vector.extract_strided_slice %12 {offsets = [5, 0, 0], sizes = [1, 16, 128], strides = [1, 1, 1]} : vector<16x16x128xbf16> to vector<1x16x128xbf16>
    %43 = vector.shape_cast %42 : vector<1x16x128xbf16> to vector<16x128xbf16>
    %c5 = arith.constant 5 : index
    %c0_25 = arith.constant 0 : index
    %c0_26 = arith.constant 0 : index
    %44 = vector.load %arg4[%c5, %c0_25, %c0_26] : memref<16x128x128xbf16, #tpu.memory_space<vmem>>, vector<1x128x128xbf16>
    %45 = vector.shape_cast %44 : vector<1x128x128xbf16> to vector<128x128xbf16>
    %cst_27 = arith.constant dense<0.000000e+00> : vector<16x128xf32>
    %46 = tpu.matmul %43, %45, %cst_27 {dimension_numbers = #tpu.dot_dimension_numbers<[1], [0], [0], [1], [0, 0, 1, 1], [], []>} : vector<16x128xbf16>, vector<128x128xbf16>, vector<16x128xf32> -> vector<16x128xf32>
    %47 = arith.addf %41, %46 : vector<16x128xf32>
    %48 = vector.extract_strided_slice %12 {offsets = [6, 0, 0], sizes = [1, 16, 128], strides = [1, 1, 1]} : vector<16x16x128xbf16> to vector<1x16x128xbf16>
    %49 = vector.shape_cast %48 : vector<1x16x128xbf16> to vector<16x128xbf16>
    %c6 = arith.constant 6 : index
    %c0_28 = arith.constant 0 : index
    %c0_29 = arith.constant 0 : index
    %50 = vector.load %arg4[%c6, %c0_28, %c0_29] : memref<16x128x128xbf16, #tpu.memory_space<vmem>>, vector<1x128x128xbf16>
    %51 = vector.shape_cast %50 : vector<1x128x128xbf16> to vector<128x128xbf16>
    %cst_30 = arith.constant dense<0.000000e+00> : vector<16x128xf32>
    %52 = tpu.matmul %49, %51, %cst_30 {dimension_numbers = #tpu.dot_dimension_numbers<[1], [0], [0], [1], [0, 0, 1, 1], [], []>} : vector<16x128xbf16>, vector<128x128xbf16>, vector<16x128xf32> -> vector<16x128xf32>
    %53 = arith.addf %47, %52 : vector<16x128xf32>
    %54 = vector.extract_strided_slice %12 {offsets = [7, 0, 0], sizes = [1, 16, 128], strides = [1, 1, 1]} : vector<16x16x128xbf16> to vector<1x16x128xbf16>
    %55 = vector.shape_cast %54 : vector<1x16x128xbf16> to vector<16x128xbf16>
    %c7 = arith.constant 7 : index
    %c0_31 = arith.constant 0 : index
    %c0_32 = arith.constant 0 : index
    %56 = vector.load %arg4[%c7, %c0_31, %c0_32] : memref<16x128x128xbf16, #tpu.memory_space<vmem>>, vector<1x128x128xbf16>
    %57 = vector.shape_cast %56 : vector<1x128x128xbf16> to vector<128x128xbf16>
    %cst_33 = arith.constant dense<0.000000e+00> : vector<16x128xf32>
    %58 = tpu.matmul %55, %57, %cst_33 {dimension_numbers = #tpu.dot_dimension_numbers<[1], [0], [0], [1], [0, 0, 1, 1], [], []>} : vector<16x128xbf16>, vector<128x128xbf16>, vector<16x128xf32> -> vector<16x128xf32>
    %59 = arith.addf %53, %58 : vector<16x128xf32>
    %60 = vector.extract_strided_slice %12 {offsets = [8, 0, 0], sizes = [1, 16, 128], strides = [1, 1, 1]} : vector<16x16x128xbf16> to vector<1x16x128xbf16>
    %61 = vector.shape_cast %60 : vector<1x16x128xbf16> to vector<16x128xbf16>
    %c8 = arith.constant 8 : index
    %c0_34 = arith.constant 0 : index
    %c0_35 = arith.constant 0 : index
    %62 = vector.load %arg4[%c8, %c0_34, %c0_35] : memref<16x128x128xbf16, #tpu.memory_space<vmem>>, vector<1x128x128xbf16>
    %63 = vector.shape_cast %62 : vector<1x128x128xbf16> to vector<128x128xbf16>
    %cst_36 = arith.constant dense<0.000000e+00> : vector<16x128xf32>
    %64 = tpu.matmul %61, %63, %cst_36 {dimension_numbers = #tpu.dot_dimension_numbers<[1], [0], [0], [1], [0, 0, 1, 1], [], []>} : vector<16x128xbf16>, vector<128x128xbf16>, vector<16x128xf32> -> vector<16x128xf32>
    %65 = arith.addf %59, %64 : vector<16x128xf32>
    %66 = vector.extract_strided_slice %12 {offsets = [9, 0, 0], sizes = [1, 16, 128], strides = [1, 1, 1]} : vector<16x16x128xbf16> to vector<1x16x128xbf16>
    %67 = vector.shape_cast %66 : vector<1x16x128xbf16> to vector<16x128xbf16>
    %c9 = arith.constant 9 : index
    %c0_37 = arith.constant 0 : index
    %c0_38 = arith.constant 0 : index
    %68 = vector.load %arg4[%c9, %c0_37, %c0_38] : memref<16x128x128xbf16, #tpu.memory_space<vmem>>, vector<1x128x128xbf16>
    %69 = vector.shape_cast %68 : vector<1x128x128xbf16> to vector<128x128xbf16>
    %cst_39 = arith.constant dense<0.000000e+00> : vector<16x128xf32>
    %70 = tpu.matmul %67, %69, %cst_39 {dimension_numbers = #tpu.dot_dimension_numbers<[1], [0], [0], [1], [0, 0, 1, 1], [], []>} : vector<16x128xbf16>, vector<128x128xbf16>, vector<16x128xf32> -> vector<16x128xf32>
    %71 = arith.addf %65, %70 : vector<16x128xf32>
    %72 = vector.extract_strided_slice %12 {offsets = [10, 0, 0], sizes = [1, 16, 128], strides = [1, 1, 1]} : vector<16x16x128xbf16> to vector<1x16x128xbf16>
    %73 = vector.shape_cast %72 : vector<1x16x128xbf16> to vector<16x128xbf16>
    %c10 = arith.constant 10 : index
    %c0_40 = arith.constant 0 : index
    %c0_41 = arith.constant 0 : index
    %74 = vector.load %arg4[%c10, %c0_40, %c0_41] : memref<16x128x128xbf16, #tpu.memory_space<vmem>>, vector<1x128x128xbf16>
    %75 = vector.shape_cast %74 : vector<1x128x128xbf16> to vector<128x128xbf16>
    %cst_42 = arith.constant dense<0.000000e+00> : vector<16x128xf32>
    %76 = tpu.matmul %73, %75, %cst_42 {dimension_numbers = #tpu.dot_dimension_numbers<[1], [0], [0], [1], [0, 0, 1, 1], [], []>} : vector<16x128xbf16>, vector<128x128xbf16>, vector<16x128xf32> -> vector<16x128xf32>
    %77 = arith.addf %71, %76 : vector<16x128xf32>
    %78 = vector.extract_strided_slice %12 {offsets = [11, 0, 0], sizes = [1, 16, 128], strides = [1, 1, 1]} : vector<16x16x128xbf16> to vector<1x16x128xbf16>
    %79 = vector.shape_cast %78 : vector<1x16x128xbf16> to vector<16x128xbf16>
    %c11 = arith.constant 11 : index
    %c0_43 = arith.constant 0 : index
    %c0_44 = arith.constant 0 : index
    %80 = vector.load %arg4[%c11, %c0_43, %c0_44] : memref<16x128x128xbf16, #tpu.memory_space<vmem>>, vector<1x128x128xbf16>
    %81 = vector.shape_cast %80 : vector<1x128x128xbf16> to vector<128x128xbf16>
    %cst_45 = arith.constant dense<0.000000e+00> : vector<16x128xf32>
    %82 = tpu.matmul %79, %81, %cst_45 {dimension_numbers = #tpu.dot_dimension_numbers<[1], [0], [0], [1], [0, 0, 1, 1], [], []>} : vector<16x128xbf16>, vector<128x128xbf16>, vector<16x128xf32> -> vector<16x128xf32>
    %83 = arith.addf %77, %82 : vector<16x128xf32>
    %84 = vector.extract_strided_slice %12 {offsets = [12, 0, 0], sizes = [1, 16, 128], strides = [1, 1, 1]} : vector<16x16x128xbf16> to vector<1x16x128xbf16>
    %85 = vector.shape_cast %84 : vector<1x16x128xbf16> to vector<16x128xbf16>
    %c12 = arith.constant 12 : index
    %c0_46 = arith.constant 0 : index
    %c0_47 = arith.constant 0 : index
    %86 = vector.load %arg4[%c12, %c0_46, %c0_47] : memref<16x128x128xbf16, #tpu.memory_space<vmem>>, vector<1x128x128xbf16>
    %87 = vector.shape_cast %86 : vector<1x128x128xbf16> to vector<128x128xbf16>
    %cst_48 = arith.constant dense<0.000000e+00> : vector<16x128xf32>
    %88 = tpu.matmul %85, %87, %cst_48 {dimension_numbers = #tpu.dot_dimension_numbers<[1], [0], [0], [1], [0, 0, 1, 1], [], []>} : vector<16x128xbf16>, vector<128x128xbf16>, vector<16x128xf32> -> vector<16x128xf32>
    %89 = arith.addf %83, %88 : vector<16x128xf32>
    %90 = vector.extract_strided_slice %12 {offsets = [13, 0, 0], sizes = [1, 16, 128], strides = [1, 1, 1]} : vector<16x16x128xbf16> to vector<1x16x128xbf16>
    %91 = vector.shape_cast %90 : vector<1x16x128xbf16> to vector<16x128xbf16>
    %c13 = arith.constant 13 : index
    %c0_49 = arith.constant 0 : index
    %c0_50 = arith.constant 0 : index
    %92 = vector.load %arg4[%c13, %c0_49, %c0_50] : memref<16x128x128xbf16, #tpu.memory_space<vmem>>, vector<1x128x128xbf16>
    %93 = vector.shape_cast %92 : vector<1x128x128xbf16> to vector<128x128xbf16>
    %cst_51 = arith.constant dense<0.000000e+00> : vector<16x128xf32>
    %94 = tpu.matmul %91, %93, %cst_51 {dimension_numbers = #tpu.dot_dimension_numbers<[1], [0], [0], [1], [0, 0, 1, 1], [], []>} : vector<16x128xbf16>, vector<128x128xbf16>, vector<16x128xf32> -> vector<16x128xf32>
    %95 = arith.addf %89, %94 : vector<16x128xf32>
    %96 = vector.extract_strided_slice %12 {offsets = [14, 0, 0], sizes = [1, 16, 128], strides = [1, 1, 1]} : vector<16x16x128xbf16> to vector<1x16x128xbf16>
    %97 = vector.shape_cast %96 : vector<1x16x128xbf16> to vector<16x128xbf16>
    %c14 = arith.constant 14 : index
    %c0_52 = arith.constant 0 : index
    %c0_53 = arith.constant 0 : index
    %98 = vector.load %arg4[%c14, %c0_52, %c0_53] : memref<16x128x128xbf16, #tpu.memory_space<vmem>>, vector<1x128x128xbf16>
    %99 = vector.shape_cast %98 : vector<1x128x128xbf16> to vector<128x128xbf16>
    %cst_54 = arith.constant dense<0.000000e+00> : vector<16x128xf32>
    %100 = tpu.matmul %97, %99, %cst_54 {dimension_numbers = #tpu.dot_dimension_numbers<[1], [0], [0], [1], [0, 0, 1, 1], [], []>} : vector<16x128xbf16>, vector<128x128xbf16>, vector<16x128xf32> -> vector<16x128xf32>
    %101 = arith.addf %95, %100 : vector<16x128xf32>
    %102 = vector.extract_strided_slice %12 {offsets = [15, 0, 0], sizes = [1, 16, 128], strides = [1, 1, 1]} : vector<16x16x128xbf16> to vector<1x16x128xbf16>
    %103 = vector.shape_cast %102 : vector<1x16x128xbf16> to vector<16x128xbf16>
    %c15 = arith.constant 15 : index
    %c0_55 = arith.constant 0 : index
    %c0_56 = arith.constant 0 : index
    %104 = vector.load %arg4[%c15, %c0_55, %c0_56] : memref<16x128x128xbf16, #tpu.memory_space<vmem>>, vector<1x128x128xbf16>
    %105 = vector.shape_cast %104 : vector<1x128x128xbf16> to vector<128x128xbf16>
    %cst_57 = arith.constant dense<0.000000e+00> : vector<16x128xf32>
    %106 = tpu.matmul %103, %105, %cst_57 {dimension_numbers = #tpu.dot_dimension_numbers<[1], [0], [0], [1], [0, 0, 1, 1], [], []>} : vector<16x128xbf16>, vector<128x128xbf16>, vector<16x128xf32> -> vector<16x128xf32>
    %107 = arith.addf %101, %106 : vector<16x128xf32>
    %c0_58 = arith.constant 0 : index
    %c0_59 = arith.constant 0 : index
    %108 = vector.load %arg5[%c0_58, %c0_59] : memref<1x128xf32, #tpu.memory_space<vmem>>, vector<1x128xf32>
    %109 = vector.broadcast %108 : vector<1x128xf32> to vector<16x128xf32>
    %110 = arith.addf %107, %109 : vector<16x128xf32>
    %cst_60 = arith.constant 0.000000e+00 : f32
    %111 = vector.broadcast %cst_60 : f32 to vector<16x128xf32>
    %112 = arith.maximumf %110, %111 : vector<16x128xf32>
    %113 = arith.truncf %112 : vector<16x128xf32> to vector<16x128xbf16>
    %c0_61 = arith.constant 0 : index
    %c0_62 = arith.constant 0 : index
    %114 = vector.load %arg6[%c0_61, %c0_62] : memref<128x128xbf16, #tpu.memory_space<vmem>>, vector<128x128xbf16>
    %cst_63 = arith.constant dense<0.000000e+00> : vector<16x128xf32>
    %115 = tpu.matmul %113, %114, %cst_63 {dimension_numbers = #tpu.dot_dimension_numbers<[1], [0], [0], [1], [0, 0, 1, 1], [], []>} : vector<16x128xbf16>, vector<128x128xbf16>, vector<16x128xf32> -> vector<16x128xf32>
    %c0_64 = arith.constant 0 : index
    %c0_65 = arith.constant 0 : index
    %116 = vector.load %arg7[%c0_64, %c0_65] : memref<1x128xf32, #tpu.memory_space<vmem>>, vector<1x128xf32>
    %117 = vector.broadcast %116 : vector<1x128xf32> to vector<16x128xf32>
    %118 = arith.addf %115, %117 : vector<16x128xf32>
    %cst_66 = arith.constant 0.000000e+00 : f32
    %119 = vector.broadcast %cst_66 : f32 to vector<16x128xf32>
    %120 = arith.maximumf %118, %119 : vector<16x128xf32>
    %121 = arith.truncf %120 : vector<16x128xf32> to vector<16x128xbf16>
    %c0_67 = arith.constant 0 : index
    %c0_68 = arith.constant 0 : index
    %122 = vector.load %arg8[%c0_67, %c0_68] : memref<128x128xbf16, #tpu.memory_space<vmem>>, vector<128x128xbf16>
    %cst_69 = arith.constant dense<0.000000e+00> : vector<16x128xf32>
    %123 = tpu.matmul %121, %122, %cst_69 {dimension_numbers = #tpu.dot_dimension_numbers<[1], [0], [0], [1], [0, 0, 1, 1], [], []>} : vector<16x128xbf16>, vector<128x128xbf16>, vector<16x128xf32> -> vector<16x128xf32>
    %c0_70 = arith.constant 0 : index
    %c0_71 = arith.constant 0 : index
    %124 = vector.load %arg9[%c0_70, %c0_71] : memref<1x128xf32, #tpu.memory_space<vmem>>, vector<1x128xf32>
    %125 = vector.broadcast %124 : vector<1x128xf32> to vector<16x128xf32>
    %126 = arith.addf %123, %125 : vector<16x128xf32>
    %c0_72 = arith.constant 0 : index
    %c0_73 = arith.constant 0 : index
    %127 = vector.load %arg10[%c0_72, %c0_73] : memref<16x128xf32, #tpu.memory_space<vmem>>, vector<16x128xf32>
    tpu.vector_store %arg10[%c0_72, %c0_73], %126 {strides = array<i32>} : memref<16x128xf32, #tpu.memory_space<vmem>>, vector<16x128xf32>,
    return
  }
  func.func @transform_0(%arg0: i32) -> (i32, i32, i32, i32) {
    %c0_i32 = arith.constant 0 : i32
    %c0_i32_0 = arith.constant 0 : i32
    %c0_i32_1 = arith.constant 0 : i32
    %c0_i32_2 = arith.constant 0 : i32
    return %c0_i32, %c0_i32_0, %arg0, %c0_i32_1 : i32, i32, i32, i32
  }
  func.func @transform_1(%arg0: i32) -> (i32, i32) {
    %c0_i32 = arith.constant 0 : i32
    %c0_i32_0 = arith.constant 0 : i32
    %c0_i32_1 = arith.constant 0 : i32
    return %c0_i32, %c0_i32_0 : i32, i32
  }
  func.func @transform_2(%arg0: i32) -> (i32, i32) {
    %c0_i32 = arith.constant 0 : i32
    %c0_i32_0 = arith.constant 0 : i32
    %c0_i32_1 = arith.constant 0 : i32
    return %c0_i32, %c0_i32_0 : i32, i32
  }
  func.func @transform_3(%arg0: i32) -> (i32, i32, i32) {
    %c0_i32 = arith.constant 0 : i32
    %c0_i32_0 = arith.constant 0 : i32
    %c0_i32_1 = arith.constant 0 : i32
    %c0_i32_2 = arith.constant 0 : i32
    return %c0_i32, %c0_i32_0, %c0_i32_1 : i32, i32, i32
  }
  func.func @transform_4(%arg0: i32) -> (i32, i32) {
    %c0_i32 = arith.constant 0 : i32
    %c0_i32_0 = arith.constant 0 : i32
    %c0_i32_1 = arith.constant 0 : i32
    return %c0_i32, %c0_i32_0 : i32, i32
  }
  func.func @transform_5(%arg0: i32) -> (i32, i32) {
    %c0_i32 = arith.constant 0 : i32
    %c0_i32_0 = arith.constant 0 : i32
    %c0_i32_1 = arith.constant 0 : i32
    return %c0_i32, %c0_i32_0 : i32, i32
  }
  func.func @transform_6(%arg0: i32) -> (i32, i32) {
    %c0_i32 = arith.constant 0 : i32
    %c0_i32_0 = arith.constant 0 : i32
    %c0_i32_1 = arith.constant 0 : i32
    return %c0_i32, %c0_i32_0 : i32, i32
  }
  func.func @transform_7(%arg0: i32) -> (i32, i32) {
    %c0_i32 = arith.constant 0 : i32
    %c0_i32_0 = arith.constant 0 : i32
    %c0_i32_1 = arith.constant 0 : i32
    return %c0_i32, %c0_i32_0 : i32, i32
  }
  func.func @transform_8(%arg0: i32) -> (i32, i32) {
    %c0_i32 = arith.constant 0 : i32
    %c0_i32_0 = arith.constant 0 : i32
    %c0_i32_1 = arith.constant 0 : i32
    return %c0_i32, %c0_i32_0 : i32, i32
  }
  func.func @transform_9(%arg0: i32) -> (i32, i32) {
    %c0_i32 = arith.constant 0 : i32
    %c0_i32_0 = arith.constant 0 : i32
    return %arg0, %c0_i32 : i32, i32
  }
}

</mosaic_0001>

<llo_original>
// kernel: net_forward.2
$region0: #{net_forward.2}
  #allocation0 [shape = 'u32[]', space=smem, size = 0x4, offset = 0x4, fixed_abs, tag = 'smem constant byte address 0x4 - core index']
  #allocation1 [shape = 'u32[72,128]{1,0:T(1,128)}', space=vmem, size = 0x9000, scoped, tag = 'internal scratch']
  %s0 = inlined_call_operand.vmem [shape: bf16[4,288,25], index: 0, kind: input, shape index: {}]
  %s1 = inlined_call_operand.vmem [shape: bf16[25,8], index: 1, kind: input, shape index: {}]
  %s2 = inlined_call_operand.vmem [shape: f32[1,8], index: 2, kind: input, shape index: {}]
  %s3 = inlined_call_operand.vmem [shape: bf16[288,8], index: 3, kind: output, shape index: {}]
  %s4 = sld [smem:[#allocation0]]
  $region86: #{net_forward.2} parent=0
    _
  %s6 = ssub.s32 1, %s4
  %s7 = scalar_select 0, %s6, %s4
  $region1: #{net_forward.2} parent=0
    #allocation2 [shape = 'u8[294912]{0}', space=vmem, size = 0x48000, scoped, tag = 'input window, operand 0']
    loop: start=0, step=1, limit=4
    $region2: #{net_forward.2} parent=1 // loop_pre_header
      _
    $region3: #{net_forward.2} parent=1 // loop_header
      %s9 = sphi 0, %s13
      %p10 = scmp.ge.s32.totalorder %s9, 4
      %s19 = sphi 0, %s21
      %s22 = sphi 0, %s19
      %s23 = sphi 0, %s22
      %s39 = sphi 0, %s23
      %s43 = sphi 0, %s43
      %s45 = sphi 0, %s43
      %s46 = sphi 0, %s45
      %s60 = sphi 0, %s46
      %s64 = sphi 0, %s64
      %s66 = sphi 0, %s64
      %s67 = sphi 0, %s66
      %s81 = sphi 0, %s67
      %s87 = sphi 0, %s89
      %s90 = sphi 0, %s87
      %s91 = sphi 0, %s90
      %s107 = sphi 0, %s91
    $region4: #{net_forward.2} parent=1 // loop_header_branch
      %12 = sbr.rel (%p10) target = $region8
    $region5: #{net_forward.2} parent=1 // loop_body
      %s14 = ssub.s32 %s9, 1
      %s15 = ssub.s32 %s9, 2
      %s16 = sadd.s32 %s9, 1
      %s17 = ssub.s32 %s9, %s16
      %p18 = scmp.eq.s32.totalorder %s17, 0
      %s20 = sadd.s32 %s19, 1
      %s21 = scalar_select %p18, %s19, %s20
      %p24 = pneg %p18
      %p25 = scmp.eq.s32.totalorder %s9, 1
      %p26 = por %p24, %p25
      %p27 = scmp.ne.s32.totalorder %s19, %s22
      %p28 = scmp.eq.s32.totalorder %s9, 0
      %p29 = por %p27, %p28
      %p30 = scmp.ne.s32.totalorder %s19, %s22
      %p31 = scmp.eq.s32.totalorder %s14, 1
      %p32 = por %p30, %p31
      %p33 = scmp.ne.s32.totalorder %s22, %s23
      %p34 = scmp.eq.s32.totalorder %s14, 0
      %p35 = por %p33, %p34
      %p36 = scmp.ne.s32.totalorder %s22, %s23
      %p37 = scmp.eq.s32.totalorder %s15, 1
      %p38 = por %p36, %p37
      %p40 = scmp.ne.s32.totalorder %s23, %s39
      %p41 = scmp.eq.s32.totalorder %s15, 0
      %p42 = por %p40, %p41
      %s44 = sadd.s32 %s43, 1
      %p47 = scmp.eq.s32.totalorder %s9, 1
      %p48 = scmp.ne.s32.totalorder %s43, %s45
      %p49 = scmp.eq.s32.totalorder %s9, 0
      %p50 = por %p48, %p49
      %p51 = scmp.ne.s32.totalorder %s43, %s45
      %p52 = scmp.eq.s32.totalorder %s14, 1
      %p53 = por %p51, %p52
      %p54 = scmp.ne.s32.totalorder %s45, %s46
      %p55 = scmp.eq.s32.totalorder %s14, 0
      %p56 = por %p54, %p55
      %p57 = scmp.ne.s32.totalorder %s45, %s46
      %p58 = scmp.eq.s32.totalorder %s15, 1
      %p59 = por %p57, %p58
      %p61 = scmp.ne.s32.totalorder %s46, %s60
      %p62 = scmp.eq.s32.totalorder %s15, 0
      %p63 = por %p61, %p62
      %s65 = sadd.s32 %s64, 1
      %p68 = scmp.eq.s32.totalorder %s9, 1
      %p69 = scmp.ne.s32.totalorder %s64, %s66
      %p70 = scmp.eq.s32.totalorder %s9, 0
      %p71 = por %p69, %p70
      %p72 = scmp.ne.s32.totalorder %s64, %s66
      %p73 = scmp.eq.s32.totalorder %s14, 1
      %p74 = por %p72, %p73
      %p75 = scmp.ne.s32.totalorder %s66, %s67
      %p76 = scmp.eq.s32.totalorder %s14, 0
      %p77 = por %p75, %p76
      %p78 = scmp.ne.s32.totalorder %s66, %s67
      %p79 = scmp.eq.s32.totalorder %s15, 1
      %p80 = por %p78, %p79
      %p82 = scmp.ne.s32.totalorder %s67, %s81
      %p83 = scmp.eq.s32.totalorder %s15, 0
      %p84 = por %p82, %p83
      %s85 = ssub.s32 %s9, %s16
      %p86 = scmp.eq.s32.totalorder %s85, 0
      %s88 = sadd.s32 %s87, 1
      %s89 = scalar_select %p86, %s87, %s88
      %p92 = pneg %p86
      %p93 = scmp.eq.s32.totalorder %s9, 1
      %p94 = por %p92, %p93
      %p95 = scmp.ne.s32.totalorder %s87, %s90
      %p96 = scmp.eq.s32.totalorder %s9, 0
      %p97 = por %p95, %p96
      %p98 = scmp.ne.s32.totalorder %s87, %s90
      %p99 = scmp.eq.s32.totalorder %s14, 1
      %p100 = por %p98, %p99
      %p101 = scmp.ne.s32.totalorder %s90, %s91
      %p102 = scmp.eq.s32.totalorder %s14, 0
      %p103 = por %p101, %p102
      %p104 = scmp.ne.s32.totalorder %s90, %s91
      %p105 = scmp.eq.s32.totalorder %s15, 1
      %p106 = por %p104, %p105
      %p108 = scmp.ne.s32.totalorder %s91, %s107
      %p109 = scmp.eq.s32.totalorder %s15, 0
      %p110 = por %p108, %p109
      %p111 = scmp.le.s32.totalorder 1, %s9
      %p112 = scmp.lt.s32.totalorder %s9, 3
      %p113 = pnand %p111, %p112
      %p114 = pneg %p113
      // Predicated region
      $region9: #{net_forward.2} parent=5 // pred_check
        _
      $region10: #{net_forward.2} parent=5 // pred_check_branch
        %116 = sbr.rel (%p113) target = $region12
      $region11: #{net_forward.2} parent=5 // pred_region
        %s117 = ssub.s32 %s9, 1
        // Predicated region
        $region13: #{net_forward.2} parent=11 // pred_check
          %p118 = pneg %p56
        $region14: #{net_forward.2} parent=11 // pred_check_branch
          %120 = sbr.rel (%p118) target = $region16
        $region15: #{net_forward.2} parent=11 // pred_region
          _
        $region16: #{net_forward.2} parent=11 // pred_fallthru
          _
        // Predicated region
        $region17: #{net_forward.2} parent=11 // pred_check
          %p121 = pneg %p77
        $region18: #{net_forward.2} parent=11 // pred_check_branch
          %123 = sbr.rel (%p121) target = $region20
        $region19: #{net_forward.2} parent=11 // pred_region
          _
        $region20: #{net_forward.2} parent=11 // pred_fallthru
          _
      $region12: #{net_forward.2} parent=5 // pred_fallthru
        _
      %p124 = scmp.lt.s32.totalorder %s9, 2
      // Predicated region
      $region21: #{net_forward.2} parent=5 // pred_check
        %p125 = pneg %p124
      $region22: #{net_forward.2} parent=5 // pred_check_branch
        %127 = sbr.rel (%p125) target = $region24
      $region23: #{net_forward.2} parent=5 // pred_region
        // Predicated region
        $region25: #{net_forward.2} parent=23 // pred_check
          %p128 = pneg %p29
        $region26: #{net_forward.2} parent=23 // pred_check_branch
          %130 = sbr.rel (%p128) target = $region28
        $region27: #{net_forward.2} parent=23 // pred_region
          %s131 = sand.u32 %s19, 1
          %s132 = sand.u32 %s19, 1
          %s133 = smul.addr %s132, 288
          %s134 = scalar_lea.vmem [#allocation2], %s133
          %s135 = smul.u32 18, %s9
          %s136 = smul.addr %s135, 4
          %s137 = scalar_lea.vmem %s0, %s136
          // Predicated region
          $region29: #{net_forward.2} parent=27 // pred_check
            _
          $region30: #{net_forward.2} parent=27 // pred_check_branch
            %139 = sbr.rel (0) target = $region32
          $region31: #{net_forward.2} parent=27 // pred_region
            // Predicated region
            $region33: #{net_forward.2} parent=31 // pred_check
              _
            $region34: #{net_forward.2} parent=31 // pred_check_branch
              %141 = sbr.rel target = $region36
            $region35: #{net_forward.2} parent=31 // pred_region
              // Predicated region
              $region48: #{net_forward.2} parent=35 // pred_check
                _
              $region49: #{net_forward.2} parent=35 // pred_check_branch
                %299 = sbr.rel (0) target = $region51
              $region50: #{net_forward.2} parent=35 // pred_region
                loop: start=0, step=1, limit=1
                $region52: #{net_forward.2} parent=50 // loop_pre_header
                  _
                $region53: #{net_forward.2} parent=50 // loop_header
                  %s301 = sphi 0, %s305
                  %p302 = scmp.ge.s32.totalorder %s301, 1
                  %s306 = sphi %s137, %s137
                  %s307 = sphi %s134, %s134
                $region54: #{net_forward.2} parent=50 // loop_header_branch
                  %304 = sbr.rel (%p302) target = $region58
                $region55: #{net_forward.2} parent=50 // loop_body
                  _
                $region56: #{net_forward.2} parent=50 // loop_footer
                  %s305 = sadd.s32 1, %s301
                $region57: #{net_forward.2} parent=50 // loop_footer_branch
                  %300 = sbr.rel target = $region53
                $region58: #{net_forward.2} parent=50 // loop_exit
                  _
                %s309 = ssub.s32 16, 1
                loop: start=0, step=1, limit=1
                $region59: #{net_forward.2} parent=50 // loop_pre_header
                  _
                $region60: #{net_forward.2} parent=50 // loop_header
                  %s311 = sphi 0, %s315
                  %p312 = scmp.ge.s32.totalorder %s311, 1
                  %s316 = sphi %s137, %s137
                  %s317 = sphi %s134, %s134
                $region61: #{net_forward.2} parent=50 // loop_header_branch
                  %314 = sbr.rel (%p312) target = $region65
                $region62: #{net_forward.2} parent=50 // loop_body
                  %v318 = vld [vmem:[%s316] sm:%s309]
                  %319 = vst [vmem:[%s317] sm:%s309] %v318
                  %v320 = vld [vmem:[%s316 + $0x4] sm:%s309]
                  %321 = vst [vmem:[%s317 + $0x4] sm:%s309] %v320
                  %v322 = vld [vmem:[%s316 + $0x8] sm:%s309]
                  %323 = vst [vmem:[%s317 + $0x8] sm:%s309] %v322
                  %v324 = vld [vmem:[%s316 + $0xc] sm:%s309]
                  %325 = vst [vmem:[%s317 + $0xc] sm:%s309] %v324
                  %v326 = vld [vmem:[%s316 + $0x10] sm:%s309]
                  %327 = vst [vmem:[%s317 + $0x10] sm:%s309] %v326
                  %v328 = vld [vmem:[%s316 + $0x14] sm:%s309]
                  %329 = vst [vmem:[%s317 + $0x14] sm:%s309] %v328
                  %v330 = vld [vmem:[%s316 + $0x18] sm:%s309]
                  %331 = vst [vmem:[%s317 + $0x18] sm:%s309] %v330
                  %v332 = vld [vmem:[%s316 + $0x1c] sm:%s309]
                  %333 = vst [vmem:[%s317 + $0x1c] sm:%s309] %v332
                  %v334 = vld [vmem:[%s316 + $0x20] sm:%s309]
                  %335 = vst [vmem:[%s317 + $0x20] sm:%s309] %v334
                  %v336 = vld [vmem:[%s316 + $0x24] sm:%s309]
                  %337 = vst [vmem:[%s317 + $0x24] sm:%s309] %v336
                  %v338 = vld [vmem:[%s316 + $0x28] sm:%s309]
                  %339 = vst [vmem:[%s317 + $0x28] sm:%s309] %v338
                  %v340 = vld [vmem:[%s316 + $0x2c] sm:%s309]
                  %341 = vst [vmem:[%s317 + $0x2c] sm:%s309] %v340
                  %v342 = vld [vmem:[%s316 + $0x30] sm:%s309]
                  %343 = vst [vmem:[%s317 + $0x30] sm:%s309] %v342
                  %v344 = vld [vmem:[%s316 + $0x34] sm:%s309]
                  %345 = vst [vmem:[%s317 + $0x34] sm:%s309] %v344
                  %v346 = vld [vmem:[%s316 + $0x38] sm:%s309]
                  %347 = vst [vmem:[%s317 + $0x38] sm:%s309] %v346
                  %v348 = vld [vmem:[%s316 + $0x3c] sm:%s309]
                  %349 = vst [vmem:[%s317 + $0x3c] sm:%s309] %v348
                  %v350 = vld [vmem:[%s316 + $0x40] sm:%s309]
                  %351 = vst [vmem:[%s317 + $0x40] sm:%s309] %v350
                  %v352 = vld [vmem:[%s316 + $0x44] sm:%s309]
                  %353 = vst [vmem:[%s317 + $0x44] sm:%s309] %v352
                  %v354 = vld [vmem:[%s316 + $0x90] sm:%s309]
                  %355 = vst [vmem:[%s317 + $0x48] sm:%s309] %v354
                  %v356 = vld [vmem:[%s316 + $0x94] sm:%s309]
                  %357 = vst [vmem:[%s317 + $0x4c] sm:%s309] %v356
                  %v358 = vld [vmem:[%s316 + $0x98] sm:%s309]
                  %359 = vst [vmem:[%s317 + $0x50] sm:%s309] %v358
                  %v360 = vld [vmem:[%s316 + $0x9c] sm:%s309]
                  %361 = vst [vmem:[%s317 + $0x54] sm:%s309] %v360
                  %v362 = vld [vmem:[%s316 + $0xa0] sm:%s309]
                  %363 = vst [vmem:[%s317 + $0x58] sm:%s309] %v362
                  %v364 = vld [vmem:[%s316 + $0xa4] sm:%s309]
                  %365 = vst [vmem:[%s317 + $0x5c] sm:%s309] %v364
                  %v366 = vld [vmem:[%s316 + $0xa8] sm:%s309]
                  %367 = vst [vmem:[%s317 + $0x60] sm:%s309] %v366
                  %v368 = vld [vmem:[%s316 + $0xac] sm:%s309]
                  %369 = vst [vmem:[%s317 + $0x64] sm:%s309] %v368
                  %v370 = vld [vmem:[%s316 + $0xb0] sm:%s309]
                  %371 = vst [vmem:[%s317 + $0x68] sm:%s309] %v370
                  %v372 = vld [vmem:[%s316 + $0xb4] sm:%s309]
                  %373 = vst [vmem:[%s317 + $0x6c] sm:%s309] %v372
                  %v374 = vld [vmem:[%s316 + $0xb8] sm:%s309]
                  %375 = vst [vmem:[%s317 + $0x70] sm:%s309] %v374
                  %v376 = vld [vmem:[%s316 + $0xbc] sm:%s309]
                  %377 = vst [vmem:[%s317 + $0x74] sm:%s309] %v376
                  %v378 = vld [vmem:[%s316 + $0xc0] sm:%s309]
                  %379 = vst [vmem:[%s317 + $0x78] sm:%s309] %v378
                  %v380 = vld [vmem:[%s316 + $0xc4] sm:%s309]
                  %381 = vst [vmem:[%s317 + $0x7c] sm:%s309] %v380
                  %v382 = vld [vmem:[%s316 + $0xc8] sm:%s309]
                  %383 = vst [vmem:[%s317 + $0x80] sm:%s309] %v382
                  %v384 = vld [vmem:[%s316 + $0xcc] sm:%s309]
                  %385 = vst [vmem:[%s317 + $0x84] sm:%s309] %v384
                  %v386 = vld [vmem:[%s316 + $0xd0] sm:%s309]
                  %387 = vst [vmem:[%s317 + $0x88] sm:%s309] %v386
                  %v388 = vld [vmem:[%s316 + $0xd4] sm:%s309]
                  %389 = vst [vmem:[%s317 + $0x8c] sm:%s309] %v388
                  %v390 = vld [vmem:[%s316 + $0x120] sm:%s309]
                  %391 = vst [vmem:[%s317 + $0x90] sm:%s309] %v390
                  %v392 = vld [vmem:[%s316 + $0x124] sm:%s309]
                  %393 = vst [vmem:[%s317 + $0x94] sm:%s309] %v392
                  %v394 = vld [vmem:[%s316 + $0x128] sm:%s309]
                  %395 = vst [vmem:[%s317 + $0x98] sm:%s309] %v394
                  %v396 = vld [vmem:[%s316 + $0x12c] sm:%s309]
                  %397 = vst [vmem:[%s317 + $0x9c] sm:%s309] %v396
                  %v398 = vld [vmem:[%s316 + $0x130] sm:%s309]
                  %399 = vst [vmem:[%s317 + $0xa0] sm:%s309] %v398
                  %v400 = vld [vmem:[%s316 + $0x134] sm:%s309]
                  %401 = vst [vmem:[%s317 + $0xa4] sm:%s309] %v400
                  %v402 = vld [vmem:[%s316 + $0x138] sm:%s309]
                  %403 = vst [vmem:[%s317 + $0xa8] sm:%s309] %v402
                  %v404 = vld [vmem:[%s316 + $0x13c] sm:%s309]
                  %405 = vst [vmem:[%s317 + $0xac] sm:%s309] %v404
                  %v406 = vld [vmem:[%s316 + $0x140] sm:%s309]
                  %407 = vst [vmem:[%s317 + $0xb0] sm:%s309] %v406
                  %v408 = vld [vmem:[%s316 + $0x144] sm:%s309]
                  %409 = vst [vmem:[%s317 + $0xb4] sm:%s309] %v408
                  %v410 = vld [vmem:[%s316 + $0x148] sm:%s309]
                  %411 = vst [vmem:[%s317 + $0xb8] sm:%s309] %v410
                  %v412 = vld [vmem:[%s316 + $0x14c] sm:%s309]
                  %413 = vst [vmem:[%s317 + $0xbc] sm:%s309] %v412
                  %v414 = vld [vmem:[%s316 + $0x150] sm:%s309]
                  %415 = vst [vmem:[%s317 + $0xc0] sm:%s309] %v414
                  %v416 = vld [vmem:[%s316 + $0x154] sm:%s309]
                  %417 = vst [vmem:[%s317 + $0xc4] sm:%s309] %v416
                  %v418 = vld [vmem:[%s316 + $0x158] sm:%s309]
                  %419 = vst [vmem:[%s317 + $0xc8] sm:%s309] %v418
                  %v420 = vld [vmem:[%s316 + $0x15c] sm:%s309]
                  %421 = vst [vmem:[%s317 + $0xcc] sm:%s309] %v420
                  %v422 = vld [vmem:[%s316 + $0x160] sm:%s309]
                  %423 = vst [vmem:[%s317 + $0xd0] sm:%s309] %v422
                  %v424 = vld [vmem:[%s316 + $0x164] sm:%s309]
                  %425 = vst [vmem:[%s317 + $0xd4] sm:%s309] %v424
                  %v426 = vld [vmem:[%s316 + $0x1b0] sm:%s309]
                  %427 = vst [vmem:[%s317 + $0xd8] sm:%s309] %v426
                  %v428 = vld [vmem:[%s316 + $0x1b4] sm:%s309]
                  %429 = vst [vmem:[%s317 + $0xdc] sm:%s309] %v428
                  %v430 = vld [vmem:[%s316 + $0x1b8] sm:%s309]
                  %431 = vst [vmem:[%s317 + $0xe0] sm:%s309] %v430
                  %v432 = vld [vmem:[%s316 + $0x1bc] sm:%s309]
                  %433 = vst [vmem:[%s317 + $0xe4] sm:%s309] %v432
                  %v434 = vld [vmem:[%s316 + $0x1c0] sm:%s309]
                  %435 = vst [vmem:[%s317 + $0xe8] sm:%s309] %v434
                  %v436 = vld [vmem:[%s316 + $0x1c4] sm:%s309]
                  %437 = vst [vmem:[%s317 + $0xec] sm:%s309] %v436
                  %v438 = vld [vmem:[%s316 + $0x1c8] sm:%s309]
                  %439 = vst [vmem:[%s317 + $0xf0] sm:%s309] %v438
                  %v440 = vld [vmem:[%s316 + $0x1cc] sm:%s309]
                  %441 = vst [vmem:[%s317 + $0xf4] sm:%s309] %v440
                  %v442 = vld [vmem:[%s316 + $0x1d0] sm:%s309]
                  %443 = vst [vmem:[%s317 + $0xf8] sm:%s309] %v442
                  %v444 = vld [vmem:[%s316 + $0x1d4] sm:%s309]
                  %445 = vst [vmem:[%s317 + $0xfc] sm:%s309] %v444
                  %v446 = vld [vmem:[%s316 + $0x1d8] sm:%s309]
                  %447 = vst [vmem:[%s317 + $0x100] sm:%s309] %v446
                  %v448 = vld [vmem:[%s316 + $0x1dc] sm:%s309]
                  %449 = vst [vmem:[%s317 + $0x104] sm:%s309] %v448
                  %v450 = vld [vmem:[%s316 + $0x1e0] sm:%s309]
                  %451 = vst [vmem:[%s317 + $0x108] sm:%s309] %v450
                  %v452 = vld [vmem:[%s316 + $0x1e4] sm:%s309]
                  %453 = vst [vmem:[%s317 + $0x10c] sm:%s309] %v452
                  %v454 = vld [vmem:[%s316 + $0x1e8] sm:%s309]
                  %455 = vst [vmem:[%s317 + $0x110] sm:%s309] %v454
                  %v456 = vld [vmem:[%s316 + $0x1ec] sm:%s309]
                  %457 = vst [vmem:[%s317 + $0x114] sm:%s309] %v456
                  %v458 = vld [vmem:[%s316 + $0x1f0] sm:%s309]
                  %459 = vst [vmem:[%s317 + $0x118] sm:%s309] %v458
                  %v460 = vld [vmem:[%s316 + $0x1f4] sm:%s309]
                  %461 = vst [vmem:[%s317 + $0x11c] sm:%s309] %v460
                $region63: #{net_forward.2} parent=50 // loop_footer
                  %s315 = sadd.s32 1, %s311
                $region64: #{net_forward.2} parent=50 // loop_footer_branch
                  %310 = sbr.rel target = $region60
                $region65: #{net_forward.2} parent=50 // loop_exit
                  _
              $region51: #{net_forward.2} parent=35 // pred_fallthru
                _
            $region36: #{net_forward.2} parent=31 // pred_fallthru
              _
            // Predicated region
            $region37: #{net_forward.2} parent=31 // pred_check
              _
            $region38: #{net_forward.2} parent=31 // pred_check_branch
              %143 = sbr.rel (0) target = $region40
            $region39: #{net_forward.2} parent=31 // pred_region
              %s145 = ssub.s32 16, 1
              loop: start=0, step=1, limit=1
              $region41: #{net_forward.2} parent=39 // loop_pre_header
                _
              $region42: #{net_forward.2} parent=39 // loop_header
                %s147 = sphi 0, %s151
                %p148 = scmp.ge.s32.totalorder %s147, 1
                %s152 = sphi %s137, %s137
                %s153 = sphi %s134, %s134
              $region43: #{net_forward.2} parent=39 // loop_header_branch
                %150 = sbr.rel (%p148) target = $region47
              $region44: #{net_forward.2} parent=39 // loop_body
                %v154 = vld [vmem:[%s152] sm:%s145]
                %155 = vst [vmem:[%s153] sm:%s145] %v154
                %v156 = vld [vmem:[%s152 + $0x4] sm:%s145]
                %157 = vst [vmem:[%s153 + $0x4] sm:%s145] %v156
                %v158 = vld [vmem:[%s152 + $0x8] sm:%s145]
                %159 = vst [vmem:[%s153 + $0x8] sm:%s145] %v158
                %v160 = vld [vmem:[%s152 + $0xc] sm:%s145]
                %161 = vst [vmem:[%s153 + $0xc] sm:%s145] %v160
                %v162 = vld [vmem:[%s152 + $0x10] sm:%s145]
                %163 = vst [vmem:[%s153 + $0x10] sm:%s145] %v162
                %v164 = vld [vmem:[%s152 + $0x14] sm:%s145]
                %165 = vst [vmem:[%s153 + $0x14] sm:%s145] %v164
                %v166 = vld [vmem:[%s152 + $0x18] sm:%s145]
                %167 = vst [vmem:[%s153 + $0x18] sm:%s145] %v166
                %v168 = vld [vmem:[%s152 + $0x1c] sm:%s145]
                %169 = vst [vmem:[%s153 + $0x1c] sm:%s145] %v168
                %v170 = vld [vmem:[%s152 + $0x20] sm:%s145]
                %171 = vst [vmem:[%s153 + $0x20] sm:%s145] %v170
                %v172 = vld [vmem:[%s152 + $0x24] sm:%s145]
                %173 = vst [vmem:[%s153 + $0x24] sm:%s145] %v172
                %v174 = vld [vmem:[%s152 + $0x28] sm:%s145]
                %175 = vst [vmem:[%s153 + $0x28] sm:%s145] %v174
                %v176 = vld [vmem:[%s152 + $0x2c] sm:%s145]
                %177 = vst [vmem:[%s153 + $0x2c] sm:%s145] %v176
                %v178 = vld [vmem:[%s152 + $0x30] sm:%s145]
                %179 = vst [vmem:[%s153 + $0x30] sm:%s145] %v178
                %v180 = vld [vmem:[%s152 + $0x34] sm:%s145]
                %181 = vst [vmem:[%s153 + $0x34] sm:%s145] %v180
                %v182 = vld [vmem:[%s152 + $0x38] sm:%s145]
                %183 = vst [vmem:[%s153 + $0x38] sm:%s145] %v182
                %v184 = vld [vmem:[%s152 + $0x3c] sm:%s145]
                %185 = vst [vmem:[%s153 + $0x3c] sm:%s145] %v184
                %v186 = vld [vmem:[%s152 + $0x40] sm:%s145]
                %187 = vst [vmem:[%s153 + $0x40] sm:%s145] %v186
                %v188 = vld [vmem:[%s152 + $0x44] sm:%s145]
                %189 = vst [vmem:[%s153 + $0x44] sm:%s145] %v188
                %v190 = vld [vmem:[%s152 + $0x90] sm:%s145]
                %191 = vst [vmem:[%s153 + $0x48] sm:%s145] %v190
                %v192 = vld [vmem:[%s152 + $0x94] sm:%s145]
                %193 = vst [vmem:[%s153 + $0x4c] sm:%s145] %v192
                %v194 = vld [vmem:[%s152 + $0x98] sm:%s145]
                %195 = vst [vmem:[%s153 + $0x50] sm:%s145] %v194
                %v196 = vld [vmem:[%s152 + $0x9c] sm:%s145]
                %197 = vst [vmem:[%s153 + $0x54] sm:%s145] %v196
                %v198 = vld [vmem:[%s152 + $0xa0] sm:%s145]
                %199 = vst [vmem:[%s153 + $0x58] sm:%s145] %v198
                %v200 = vld [vmem:[%s152 + $0xa4] sm:%s145]
                %201 = vst [vmem:[%s153 + $0x5c] sm:%s145] %v200
                %v202 = vld [vmem:[%s152 + $0xa8] sm:%s145]
                %203 = vst [vmem:[%s153 + $0x60] sm:%s145] %v202
                %v204 = vld [vmem:[%s152 + $0xac] sm:%s145]
                %205 = vst [vmem:[%s153 + $0x64] sm:%s145] %v204
                %v206 = vld [vmem:[%s152 + $0xb0] sm:%s145]
                %207 = vst [vmem:[%s153 + $0x68] sm:%s145] %v206
                %v208 = vld [vmem:[%s152 + $0xb4] sm:%s145]
                %209 = vst [vmem:[%s153 + $0x6c] sm:%s145] %v208
                %v210 = vld [vmem:[%s152 + $0xb8] sm:%s145]
                %211 = vst [vmem:[%s153 + $0x70] sm:%s145] %v210
                %v212 = vld [vmem:[%s152 + $0xbc] sm:%s145]
                %213 = vst [vmem:[%s153 + $0x74] sm:%s145] %v212
                %v214 = vld [vmem:[%s152 + $0xc0] sm:%s145]
                %215 = vst [vmem:[%s153 + $0x78] sm:%s145] %v214
                %v216 = vld [vmem:[%s152 + $0xc4] sm:%s145]
                %217 = vst [vmem:[%s153 + $0x7c] sm:%s145] %v216
                %v218 = vld [vmem:[%s152 + $0xc8] sm:%s145]
                %219 = vst [vmem:[%s153 + $0x80] sm:%s145] %v218
                %v220 = vld [vmem:[%s152 + $0xcc] sm:%s145]
                %221 = vst [vmem:[%s153 + $0x84] sm:%s145] %v220
                %v222 = vld [vmem:[%s152 + $0xd0] sm:%s145]
                %223 = vst [vmem:[%s153 + $0x88] sm:%s145] %v222
                %v224 = vld [vmem:[%s152 + $0xd4] sm:%s145]
                %225 = vst [vmem:[%s153 + $0x8c] sm:%s145] %v224
                %v226 = vld [vmem:[%s152 + $0x120] sm:%s145]
                %227 = vst [vmem:[%s153 + $0x90] sm:%s145] %v226
                %v228 = vld [vmem:[%s152 + $0x124] sm:%s145]
                %229 = vst [vmem:[%s153 + $0x94] sm:%s145] %v228
                %v230 = vld [vmem:[%s152 + $0x128] sm:%s145]
                %231 = vst [vmem:[%s153 + $0x98] sm:%s145] %v230
                %v232 = vld [vmem:[%s152 + $0x12c] sm:%s145]
                %233 = vst [vmem:[%s153 + $0x9c] sm:%s145] %v232
                %v234 = vld [vmem:[%s152 + $0x130] sm:%s145]
                %235 = vst [vmem:[%s153 + $0xa0] sm:%s145] %v234
                %v236 = vld [vmem:[%s152 + $0x134] sm:%s145]
                %237 = vst [vmem:[%s153 + $0xa4] sm:%s145] %v236
                %v238 = vld [vmem:[%s152 + $0x138] sm:%s145]
                %239 = vst [vmem:[%s153 + $0xa8] sm:%s145] %v238
                %v240 = vld [vmem:[%s152 + $0x13c] sm:%s145]
                %241 = vst [vmem:[%s153 + $0xac] sm:%s145] %v240
                %v242 = vld [vmem:[%s152 + $0x140] sm:%s145]
                %243 = vst [vmem:[%s153 + $0xb0] sm:%s145] %v242
                %v244 = vld [vmem:[%s152 + $0x144] sm:%s145]
                %245 = vst [vmem:[%s153 + $0xb4] sm:%s145] %v244
                %v246 = vld [vmem:[%s152 + $0x148] sm:%s145]
                %247 = vst [vmem:[%s153 + $0xb8] sm:%s145] %v246
                %v248 = vld [vmem:[%s152 + $0x14c] sm:%s145]
                %249 = vst [vmem:[%s153 + $0xbc] sm:%s145] %v248
                %v250 = vld [vmem:[%s152 + $0x150] sm:%s145]
                %251 = vst [vmem:[%s153 + $0xc0] sm:%s145] %v250
                %v252 = vld [vmem:[%s152 + $0x154] sm:%s145]
                %253 = vst [vmem:[%s153 + $0xc4] sm:%s145] %v252
                %v254 = vld [vmem:[%s152 + $0x158] sm:%s145]
                %255 = vst [vmem:[%s153 + $0xc8] sm:%s145] %v254
                %v256 = vld [vmem:[%s152 + $0x15c] sm:%s145]
                %257 = vst [vmem:[%s153 + $0xcc] sm:%s145] %v256
                %v258 = vld [vmem:[%s152 + $0x160] sm:%s145]
                %259 = vst [vmem:[%s153 + $0xd0] sm:%s145] %v258
                %v260 = vld [vmem:[%s152 + $0x164] sm:%s145]
                %261 = vst [vmem:[%s153 + $0xd4] sm:%s145] %v260
                %v262 = vld [vmem:[%s152 + $0x1b0] sm:%s145]
                %263 = vst [vmem:[%s153 + $0xd8] sm:%s145] %v262
                %v264 = vld [vmem:[%s152 + $0x1b4] sm:%s145]
                %265 = vst [vmem:[%s153 + $0xdc] sm:%s145] %v264
                %v266 = vld [vmem:[%s152 + $0x1b8] sm:%s145]
                %267 = vst [vmem:[%s153 + $0xe0] sm:%s145] %v266
                %v268 = vld [vmem:[%s152 + $0x1bc] sm:%s145]
                %269 = vst [vmem:[%s153 + $0xe4] sm:%s145] %v268
                %v270 = vld [vmem:[%s152 + $0x1c0] sm:%s145]
                %271 = vst [vmem:[%s153 + $0xe8] sm:%s145] %v270
                %v272 = vld [vmem:[%s152 + $0x1c4] sm:%s145]
                %273 = vst [vmem:[%s153 + $0xec] sm:%s145] %v272
                %v274 = vld [vmem:[%s152 + $0x1c8] sm:%s145]
                %275 = vst [vmem:[%s153 + $0xf0] sm:%s145] %v274
                %v276 = vld [vmem:[%s152 + $0x1cc] sm:%s145]
                %277 = vst [vmem:[%s153 + $0xf4] sm:%s145] %v276
                %v278 = vld [vmem:[%s152 + $0x1d0] sm:%s145]
                %279 = vst [vmem:[%s153 + $0xf8] sm:%s145] %v278
                %v280 = vld [vmem:[%s152 + $0x1d4] sm:%s145]
                %281 = vst [vmem:[%s153 + $0xfc] sm:%s145] %v280
                %v282 = vld [vmem:[%s152 + $0x1d8] sm:%s145]
                %283 = vst [vmem:[%s153 + $0x100] sm:%s145] %v282
                %v284 = vld [vmem:[%s152 + $0x1dc] sm:%s145]
                %285 = vst [vmem:[%s153 + $0x104] sm:%s145] %v284
                %v286 = vld [vmem:[%s152 + $0x1e0] sm:%s145]
                %287 = vst [vmem:[%s153 + $0x108] sm:%s145] %v286
                %v288 = vld [vmem:[%s152 + $0x1e4] sm:%s145]
                %289 = vst [vmem:[%s153 + $0x10c] sm:%s145] %v288
                %v290 = vld [vmem:[%s152 + $0x1e8] sm:%s145]
                %291 = vst [vmem:[%s153 + $0x110] sm:%s145] %v290
                %v292 = vld [vmem:[%s152 + $0x1ec] sm:%s145]
                %293 = vst [vmem:[%s153 + $0x114] sm:%s145] %v292
                %v294 = vld [vmem:[%s152 + $0x1f0] sm:%s145]
                %295 = vst [vmem:[%s153 + $0x118] sm:%s145] %v294
                %v296 = vld [vmem:[%s152 + $0x1f4] sm:%s145]
                %297 = vst [vmem:[%s153 + $0x11c] sm:%s145] %v296
              $region45: #{net_forward.2} parent=39 // loop_footer
                %s151 = sadd.s32 1, %s147
              $region46: #{net_forward.2} parent=39 // loop_footer_branch
                %146 = sbr.rel target = $region42
              $region47: #{net_forward.2} parent=39 // loop_exit
                _
            $region40: #{net_forward.2} parent=31 // pred_fallthru
              _
          $region32: #{net_forward.2} parent=27 // pred_fallthru
            _
          %462 = vnop
        $region28: #{net_forward.2} parent=23 // pred_fallthru
          _
      $region24: #{net_forward.2} parent=5 // pred_fallthru
        _
      %p463 = scmp.le.s32.totalorder 1, %s9
      %p464 = scmp.lt.s32.totalorder %s9, 3
      %p465 = pnand %p463, %p464
      %p466 = pneg %p465
      // Predicated region
      $region66: #{net_forward.2} parent=5 // pred_check
        _
      $region67: #{net_forward.2} parent=5 // pred_check_branch
        %468 = sbr.rel (%p465) target = $region69
      $region68: #{net_forward.2} parent=5 // pred_region
        %s469 = ssub.s32 %s9, 1
        %s470 = sand.u32 %s22, 1
        %s471 = sand.u32 %s22, 1
        %s472 = smul.addr %s471, 288
        %s473 = scalar_lea.vmem [#allocation2], %s472
        // Predicated region
        $region70: #{net_forward.2} parent=68 // pred_check
          %p474 = pneg %p35
        $region71: #{net_forward.2} parent=68 // pred_check_branch
          %476 = sbr.rel (%p474) target = $region73
        $region72: #{net_forward.2} parent=68 // pred_region
          _
        $region73: #{net_forward.2} parent=68 // pred_fallthru
          _
        %s477 = sand.u32 %s22, 1
        %s478 = sand.u32 %s22, 1
        %s479 = smul.addr %s478, 288
        %s480 = scalar_lea.vmem [#allocation2], %s479
        %p481 = pneg %p35
        %p482 = pneg %p32
        %p483 = pneg %p56
        %p484 = pneg %p53
        %p485 = pneg %p77
        %p486 = pneg %p74
        %p487 = pneg %p103
        %p488 = pneg %p100
        %s489 = smul.u32 18, %s14
        %p490 = scmp.lt.s32.totalorder %s489, 35
        %s491 = scalar_select %p490, %s489, 35
        %s492 = smul.addr %s491, 4
        %s493 = scalar_lea.vmem %s3, %s492
        %s494 = smul.u32 18, %s14
        %s495 = smul.u32 18, %s14
        %p496 = scmp.lt.s32.totalorder %s495, 35
        %s497 = scalar_select %p496, %s495, 35
        %s498 = smul.addr %s497, 4
        %s499 = scalar_lea.vmem %s3, %s498
        %s500 = smul.u32 18, %s14
        %v502 = vld [vmem:[%s473] sm:$0xf]
        %v503 = vld [vmem:[%s473 + $0x4] sm:$0xf]
        %v504 = vld [vmem:[%s473 + $0x8] sm:$0xf]
        %v505 = vld [vmem:[%s473 + $0xc] sm:$0xf]
        %v506 = vld [vmem:[%s473 + $0x10] sm:$0xf]
        %v507 = vld [vmem:[%s473 + $0x14] sm:$0xf]
        %v508 = vld [vmem:[%s473 + $0x18] sm:$0xf]
        %v509 = vld [vmem:[%s473 + $0x1c] sm:$0xf]
        %v510 = vld [vmem:[%s473 + $0x20] sm:$0xf]
        %v511 = vld [vmem:[%s473 + $0x24] sm:$0xf]
        %v512 = vld [vmem:[%s473 + $0x28] sm:$0xf]
        %v513 = vld [vmem:[%s473 + $0x2c] sm:$0xf]
        %v514 = vld [vmem:[%s473 + $0x30] sm:$0xf]
        %v515 = vld [vmem:[%s473 + $0x34] sm:$0xf]
        %v516 = vld [vmem:[%s473 + $0x38] sm:$0xf]
        %v517 = vld [vmem:[%s473 + $0x3c] sm:$0xf]
        %v518 = vld [vmem:[%s473 + $0x40] sm:$0xf]
        %v519 = vld [vmem:[%s473 + $0x44] sm:$0xf]
        %v520 = vld [vmem:[%s473 + $0x48] sm:$0xf]
        %v521 = vld [vmem:[%s473 + $0x4c] sm:$0xf]
        %v522 = vld [vmem:[%s473 + $0x50] sm:$0xf]
        %v523 = vld [vmem:[%s473 + $0x54] sm:$0xf]
        %v524 = vld [vmem:[%s473 + $0x58] sm:$0xf]
        %v525 = vld [vmem:[%s473 + $0x5c] sm:$0xf]
        %v526 = vld [vmem:[%s473 + $0x60] sm:$0xf]
        %v527 = vld [vmem:[%s473 + $0x64] sm:$0xf]
        %v528 = vld [vmem:[%s473 + $0x68] sm:$0xf]
        %v529 = vld [vmem:[%s473 + $0x6c] sm:$0xf]
        %v530 = vld [vmem:[%s473 + $0x70] sm:$0xf]
        %v531 = vld [vmem:[%s473 + $0x74] sm:$0xf]
        %v532 = vld [vmem:[%s473 + $0x78] sm:$0xf]
        %v533 = vld [vmem:[%s473 + $0x7c] sm:$0xf]
        %v534 = vld [vmem:[%s473 + $0x80] sm:$0xf]
        %v535 = vld [vmem:[%s473 + $0x84] sm:$0xf]
        %v536 = vld [vmem:[%s473 + $0x88] sm:$0xf]
        %v537 = vld [vmem:[%s473 + $0x8c] sm:$0xf]
        %v538 = vld [vmem:[%s473 + $0x90] sm:$0xf]
        %v539 = vld [vmem:[%s473 + $0x94] sm:$0xf]
        %v540 = vld [vmem:[%s473 + $0x98] sm:$0xf]
        %v541 = vld [vmem:[%s473 + $0x9c] sm:$0xf]
        %v542 = vld [vmem:[%s473 + $0xa0] sm:$0xf]
        %v543 = vld [vmem:[%s473 + $0xa4] sm:$0xf]
        %v544 = vld [vmem:[%s473 + $0xa8] sm:$0xf]
        %v545 = vld [vmem:[%s473 + $0xac] sm:$0xf]
        %v546 = vld [vmem:[%s473 + $0xb0] sm:$0xf]
        %v547 = vld [vmem:[%s473 + $0xb4] sm:$0xf]
        %v548 = vld [vmem:[%s473 + $0xb8] sm:$0xf]
        %v549 = vld [vmem:[%s473 + $0xbc] sm:$0xf]
        %v550 = vld [vmem:[%s473 + $0xc0] sm:$0xf]
        %v551 = vld [vmem:[%s473 + $0xc4] sm:$0xf]
        %v552 = vld [vmem:[%s473 + $0xc8] sm:$0xf]
        %v553 = vld [vmem:[%s473 + $0xcc] sm:$0xf]
        %v554 = vld [vmem:[%s473 + $0xd0] sm:$0xf]
        %v555 = vld [vmem:[%s473 + $0xd4] sm:$0xf]
        %v556 = vld [vmem:[%s473 + $0xd8] sm:$0xf]
        %v557 = vld [vmem:[%s473 + $0xdc] sm:$0xf]
        %v558 = vld [vmem:[%s473 + $0xe0] sm:$0xf]
        %v559 = vld [vmem:[%s473 + $0xe4] sm:$0xf]
        %v560 = vld [vmem:[%s473 + $0xe8] sm:$0xf]
        %v561 = vld [vmem:[%s473 + $0xec] sm:$0xf]
        %v562 = vld [vmem:[%s473 + $0xf0] sm:$0xf]
        %v563 = vld [vmem:[%s473 + $0xf4] sm:$0xf]
        %v564 = vld [vmem:[%s473 + $0xf8] sm:$0xf]
        %v565 = vld [vmem:[%s473 + $0xfc] sm:$0xf]
        %v566 = vld [vmem:[%s473 + $0x100] sm:$0xf]
        %v567 = vld [vmem:[%s473 + $0x104] sm:$0xf]
        %v568 = vld [vmem:[%s473 + $0x108] sm:$0xf]
        %v569 = vld [vmem:[%s473 + $0x10c] sm:$0xf]
        %v570 = vld [vmem:[%s473 + $0x110] sm:$0xf]
        %v571 = vld [vmem:[%s473 + $0x114] sm:$0xf]
        %v572 = vld [vmem:[%s473 + $0x118] sm:$0xf]
        %v573 = vld [vmem:[%s473 + $0x11c] sm:$0xf]
        %v574 = vld [vmem:[%s1] sm:$0xf]
        %v575 = vld [vmem:[%s1 + $0x4] sm:$0xf]
        %v576 = vld [vmem:[%s1 + $0x8] sm:$0xf]
        %v577 = vld [vmem:[%s1 + $0xc] sm:$0x1]
        %v650 = vunpack.c.l.b16 %v502
        %v651 = vunpack.c.l.b16 %v503
        %v652 = vunpack.c.l.b16 %v504
        %v653 = vunpack.c.l.b16 %v505
        %v654 = vunpack.c.l.b16 %v506
        %v655 = vunpack.c.l.b16 %v507
        %v656 = vunpack.c.l.b16 %v508
        %v657 = vunpack.c.l.b16 %v509
        %v658 = vunpack.c.l.b16 %v510
        %v659 = vunpack.c.l.b16 %v511
        %v660 = vunpack.c.l.b16 %v512
        %v661 = vunpack.c.l.b16 %v513
        %v662 = vunpack.c.l.b16 %v514
        %v663 = vunpack.c.l.b16 %v515
        %v664 = vunpack.c.l.b16 %v516
        %v665 = vunpack.c.l.b16 %v517
        %v666 = vunpack.c.l.b16 %v518
        %v667 = vunpack.c.l.b16 %v519
        %v668 = vunpack.c.l.b16 %v520
        %v669 = vunpack.c.l.b16 %v521
        %v670 = vunpack.c.l.b16 %v522
        %v671 = vunpack.c.l.b16 %v523
        %v672 = vunpack.c.l.b16 %v524
        %v673 = vunpack.c.l.b16 %v525
        %v674 = vunpack.c.l.b16 %v526
        %v675 = vunpack.c.l.b16 %v527
        %v676 = vunpack.c.l.b16 %v528
        %v677 = vunpack.c.l.b16 %v529
        %v678 = vunpack.c.l.b16 %v530
        %v679 = vunpack.c.l.b16 %v531
        %v680 = vunpack.c.l.b16 %v532
        %v681 = vunpack.c.l.b16 %v533
        %v682 = vunpack.c.l.b16 %v534
        %v683 = vunpack.c.l.b16 %v535
        %v684 = vunpack.c.l.b16 %v536
        %v685 = vunpack.c.l.b16 %v537
        %v686 = vunpack.c.l.b16 %v538
        %v687 = vunpack.c.l.b16 %v539
        %v688 = vunpack.c.l.b16 %v540
        %v689 = vunpack.c.l.b16 %v541
        %v690 = vunpack.c.l.b16 %v542
        %v691 = vunpack.c.l.b16 %v543
        %v692 = vunpack.c.l.b16 %v544
        %v693 = vunpack.c.l.b16 %v545
        %v694 = vunpack.c.l.b16 %v546
        %v695 = vunpack.c.l.b16 %v547
        %v696 = vunpack.c.l.b16 %v548
        %v697 = vunpack.c.l.b16 %v549
        %v698 = vunpack.c.l.b16 %v550
        %v699 = vunpack.c.l.b16 %v551
        %v700 = vunpack.c.l.b16 %v552
        %v701 = vunpack.c.l.b16 %v553
        %v702 = vunpack.c.l.b16 %v554
        %v703 = vunpack.c.l.b16 %v555
        %v704 = vunpack.c.l.b16 %v556
        %v705 = vunpack.c.l.b16 %v557
        %v706 = vunpack.c.l.b16 %v558
        %v707 = vunpack.c.l.b16 %v559
        %v708 = vunpack.c.l.b16 %v560
        %v709 = vunpack.c.l.b16 %v561
        %v710 = vunpack.c.l.b16 %v562
        %v711 = vunpack.c.l.b16 %v563
        %v712 = vunpack.c.l.b16 %v564
        %v713 = vunpack.c.l.b16 %v565
        %v714 = vunpack.c.l.b16 %v566
        %v715 = vunpack.c.l.b16 %v567
        %v716 = vunpack.c.l.b16 %v568
        %v717 = vunpack.c.l.b16 %v569
        %v718 = vunpack.c.l.b16 %v570
        %v719 = vunpack.c.l.b16 %v571
        %v720 = vunpack.c.l.b16 %v572
        %v721 = vunpack.c.l.b16 %v573
        %v722 = vpack.c.b16 %v651, %v650
        %v723 = vpack.c.b16 %v653, %v652
        %v724 = vpack.c.b16 %v655, %v654
        %v725 = vpack.c.b16 %v657, %v656
        %v726 = vpack.c.b16 %v659, %v658
        %v727 = vpack.c.b16 %v661, %v660
        %v728 = vpack.c.b16 %v663, %v662
        %v729 = vpack.c.b16 %v665, %v664
        %v730 = vpack.c.b16 %v667, %v666
        %v731 = vpack.c.b16 %v669, %v668
        %v732 = vpack.c.b16 %v671, %v670
        %v733 = vpack.c.b16 %v673, %v672
        %v734 = vpack.c.b16 %v675, %v674
        %v735 = vpack.c.b16 %v677, %v676
        %v736 = vpack.c.b16 %v679, %v678
        %v737 = vpack.c.b16 %v681, %v680
        %v738 = vpack.c.b16 %v683, %v682
        %v739 = vpack.c.b16 %v685, %v684
        %v740 = vpack.c.b16 %v687, %v686
        %v741 = vpack.c.b16 %v689, %v688
        %v742 = vpack.c.b16 %v691, %v690
        %v743 = vpack.c.b16 %v693, %v692
        %v744 = vpack.c.b16 %v695, %v694
        %v745 = vpack.c.b16 %v697, %v696
        %v746 = vpack.c.b16 %v699, %v698
        %v747 = vpack.c.b16 %v701, %v700
        %v748 = vpack.c.b16 %v703, %v702
        %v749 = vpack.c.b16 %v705, %v704
        %v750 = vpack.c.b16 %v707, %v706
        %v751 = vpack.c.b16 %v709, %v708
        %v752 = vpack.c.b16 %v711, %v710
        %v753 = vpack.c.b16 %v713, %v712
        %v754 = vpack.c.b16 %v715, %v714
        %v755 = vpack.c.b16 %v717, %v716
        %v756 = vpack.c.b16 %v719, %v718
        %v757 = vpack.c.b16 %v721, %v720
        %v762 = vunpack.c.l.b16 %v574
        %v763 = vunpack.c.l.b16 %v575
        %v764 = vunpack.c.l.b16 %v576
        %v765 = vunpack.c.l.b16 %v577
        %v766 = vpack.c.b16 %v763, %v762
        %v767 = vpack.c.b16 %v765, %v764
        %vm769 = vcmask 203776
        %v771 = vsel %vm769, %v722, 0
        %v774 = vsel %vm769, %v723, 0
        %v777 = vsel %vm769, %v724, 0
        %v780 = vsel %vm769, %v725, 0
        %v783 = vsel %vm769, %v726, 0
        %v786 = vsel %vm769, %v727, 0
        %v789 = vsel %vm769, %v728, 0
        %v792 = vsel %vm769, %v729, 0
        %v795 = vsel %vm769, %v730, 0
        %v798 = vsel %vm769, %v731, 0
        %v801 = vsel %vm769, %v732, 0
        %v804 = vsel %vm769, %v733, 0
        %v807 = vsel %vm769, %v734, 0
        %v810 = vsel %vm769, %v735, 0
        %v813 = vsel %vm769, %v736, 0
        %v816 = vsel %vm769, %v737, 0
        %v819 = vsel %vm769, %v738, 0
        %v822 = vsel %vm769, %v739, 0
        %v825 = vsel %vm769, %v740, 0
        %v828 = vsel %vm769, %v741, 0
        %v831 = vsel %vm769, %v742, 0
        %v834 = vsel %vm769, %v743, 0
        %v837 = vsel %vm769, %v744, 0
        %v840 = vsel %vm769, %v745, 0
        %v843 = vsel %vm769, %v746, 0
        %v846 = vsel %vm769, %v747, 0
        %v849 = vsel %vm769, %v748, 0
        %v852 = vsel %vm769, %v749, 0
        %v855 = vsel %vm769, %v750, 0
        %v858 = vsel %vm769, %v751, 0
        %v861 = vsel %vm769, %v752, 0
        %v864 = vsel %vm769, %v753, 0
        %v867 = vsel %vm769, %v754, 0
        %v870 = vsel %vm769, %v755, 0
        %v873 = vsel %vm769, %v756, 0
        %v876 = vsel %vm769, %v757, 0
        %vm878 = vcmask 1043456
        %vm879 = vcmask 1044480
        %v880 = vsel %vm878, 4294967295, 65535
        %v881 = vsel %vm879, %v880, 0
        %v883 = vand.u32 %v767, %v881
        %885 = vmatpush.bf16.msra.mxu0 0
        %886 = vmatpush.bf16.msra.mxu0 0
        %887 = vmatpush.bf16.msra.mxu0 0
        %888 = vmatpush.bf16.msra.mxu0 0
        %889 = vmatpush.bf16.msra.mxu0 0
        %890 = vmatpush.bf16.msra.mxu0 0
        %891 = vmatpush.bf16.msra.mxu0 %v883
        %892 = vmatpush.bf16.msra.mxu0 %v766
        %893 = vmatmul.bf16.gmra.mxu0 %v771
        %v894 = vpop.f32.mrf.mxu0
        %v895 = vadd.f32 0.0, %v894
        %v896 = vpop.f32.mrf.mxu0
        %v897 = vadd.f32 0.0, %v896
        %898 = vmatmul.bf16.gmra.mxu0 %v774
        %v899 = vpop.f32.mrf.mxu0
        %v900 = vadd.f32 0.0, %v899
        %v901 = vpop.f32.mrf.mxu0
        %v902 = vadd.f32 0.0, %v901
        %903 = vmatmul.bf16.gmra.mxu0 %v777
        %v904 = vpop.f32.mrf.mxu0
        %v905 = vadd.f32 0.0, %v904
        %v906 = vpop.f32.mrf.mxu0
        %v907 = vadd.f32 0.0, %v906
        %908 = vmatmul.bf16.gmra.mxu0 %v780
        %v909 = vpop.f32.mrf.mxu0
        %v910 = vadd.f32 0.0, %v909
        %v911 = vpop.f32.mrf.mxu0
        %v912 = vadd.f32 0.0, %v911
        %913 = vmatmul.bf16.gmra.mxu0 %v783
        %v914 = vpop.f32.mrf.mxu0
        %v915 = vadd.f32 0.0, %v914
        %v916 = vpop.f32.mrf.mxu0
        %v917 = vadd.f32 0.0, %v916
        %918 = vmatmul.bf16.gmra.mxu0 %v786
        %v919 = vpop.f32.mrf.mxu0
        %v920 = vadd.f32 0.0, %v919
        %v921 = vpop.f32.mrf.mxu0
        %v922 = vadd.f32 0.0, %v921
        %923 = vmatmul.bf16.gmra.mxu0 %v789
        %v924 = vpop.f32.mrf.mxu0
        %v925 = vadd.f32 0.0, %v924
        %v926 = vpop.f32.mrf.mxu0
        %v927 = vadd.f32 0.0, %v926
        %928 = vmatmul.bf16.gmra.mxu0 %v792
        %v929 = vpop.f32.mrf.mxu0
        %v930 = vadd.f32 0.0, %v929
        %v931 = vpop.f32.mrf.mxu0
        %v932 = vadd.f32 0.0, %v931
        %933 = vmatmul.bf16.gmra.mxu0 %v795
        %v934 = vpop.f32.mrf.mxu0
        %v935 = vadd.f32 0.0, %v934
        %v936 = vpop.f32.mrf.mxu0
        %v937 = vadd.f32 0.0, %v936
        %938 = vmatmul.bf16.gmra.mxu0 %v798
        %v939 = vpop.f32.mrf.mxu0
        %v940 = vadd.f32 0.0, %v939
        %v941 = vpop.f32.mrf.mxu0
        %v942 = vadd.f32 0.0, %v941
        %943 = vmatmul.bf16.gmra.mxu0 %v801
        %v944 = vpop.f32.mrf.mxu0
        %v945 = vadd.f32 0.0, %v944
        %v946 = vpop.f32.mrf.mxu0
        %v947 = vadd.f32 0.0, %v946
        %948 = vmatmul.bf16.gmra.mxu0 %v804
        %v949 = vpop.f32.mrf.mxu0
        %v950 = vadd.f32 0.0, %v949
        %v951 = vpop.f32.mrf.mxu0
        %v952 = vadd.f32 0.0, %v951
        %953 = vmatmul.bf16.gmra.mxu0 %v807
        %v954 = vpop.f32.mrf.mxu0
        %v955 = vadd.f32 0.0, %v954
        %v956 = vpop.f32.mrf.mxu0
        %v957 = vadd.f32 0.0, %v956
        %958 = vmatmul.bf16.gmra.mxu0 %v810
        %v959 = vpop.f32.mrf.mxu0
        %v960 = vadd.f32 0.0, %v959
        %v961 = vpop.f32.mrf.mxu0
        %v962 = vadd.f32 0.0, %v961
        %963 = vmatmul.bf16.gmra.mxu0 %v813
        %v964 = vpop.f32.mrf.mxu0
        %v965 = vadd.f32 0.0, %v964
        %v966 = vpop.f32.mrf.mxu0
        %v967 = vadd.f32 0.0, %v966
        %968 = vmatmul.bf16.gmra.mxu0 %v816
        %v969 = vpop.f32.mrf.mxu0
        %v970 = vadd.f32 0.0, %v969
        %v971 = vpop.f32.mrf.mxu0
        %v972 = vadd.f32 0.0, %v971
        %973 = vmatmul.bf16.gmra.mxu0 %v819
        %v974 = vpop.f32.mrf.mxu0
        %v975 = vadd.f32 0.0, %v974
        %v976 = vpop.f32.mrf.mxu0
        %v977 = vadd.f32 0.0, %v976
        %978 = vmatmul.bf16.gmra.mxu0 %v822
        %v979 = vpop.f32.mrf.mxu0
        %v980 = vadd.f32 0.0, %v979
        %v981 = vpop.f32.mrf.mxu0
        %v982 = vadd.f32 0.0, %v981
        %983 = vmatmul.bf16.gmra.mxu0 %v825
        %v984 = vpop.f32.mrf.mxu0
        %v985 = vadd.f32 0.0, %v984
        %v986 = vpop.f32.mrf.mxu0
        %v987 = vadd.f32 0.0, %v986
        %988 = vmatmul.bf16.gmra.mxu0 %v828
        %v989 = vpop.f32.mrf.mxu0
        %v990 = vadd.f32 0.0, %v989
        %v991 = vpop.f32.mrf.mxu0
        %v992 = vadd.f32 0.0, %v991
        %993 = vmatmul.bf16.gmra.mxu0 %v831
        %v994 = vpop.f32.mrf.mxu0
        %v995 = vadd.f32 0.0, %v994
        %v996 = vpop.f32.mrf.mxu0
        %v997 = vadd.f32 0.0, %v996
        %998 = vmatmul.bf16.gmra.mxu0 %v834
        %v999 = vpop.f32.mrf.mxu0
        %v1000 = vadd.f32 0.0, %v999
        %v1001 = vpop.f32.mrf.mxu0
        %v1002 = vadd.f32 0.0, %v1001
        %1003 = vmatmul.bf16.gmra.mxu0 %v837
        %v1004 = vpop.f32.mrf.mxu0
        %v1005 = vadd.f32 0.0, %v1004
        %v1006 = vpop.f32.mrf.mxu0
        %v1007 = vadd.f32 0.0, %v1006
        %1008 = vmatmul.bf16.gmra.mxu0 %v840
        %v1009 = vpop.f32.mrf.mxu0
        %v1010 = vadd.f32 0.0, %v1009
        %v1011 = vpop.f32.mrf.mxu0
        %v1012 = vadd.f32 0.0, %v1011
        %1013 = vmatmul.bf16.gmra.mxu0 %v843
        %v1014 = vpop.f32.mrf.mxu0
        %v1015 = vadd.f32 0.0, %v1014
        %v1016 = vpop.f32.mrf.mxu0
        %v1017 = vadd.f32 0.0, %v1016
        %1018 = vmatmul.bf16.gmra.mxu0 %v846
        %v1019 = vpop.f32.mrf.mxu0
        %v1020 = vadd.f32 0.0, %v1019
        %v1021 = vpop.f32.mrf.mxu0
        %v1022 = vadd.f32 0.0, %v1021
        %1023 = vmatmul.bf16.gmra.mxu0 %v849
        %v1024 = vpop.f32.mrf.mxu0
        %v1025 = vadd.f32 0.0, %v1024
        %v1026 = vpop.f32.mrf.mxu0
        %v1027 = vadd.f32 0.0, %v1026
        %1028 = vmatmul.bf16.gmra.mxu0 %v852
        %v1029 = vpop.f32.mrf.mxu0
        %v1030 = vadd.f32 0.0, %v1029
        %v1031 = vpop.f32.mrf.mxu0
        %v1032 = vadd.f32 0.0, %v1031
        %1033 = vmatmul.bf16.gmra.mxu0 %v855
        %v1034 = vpop.f32.mrf.mxu0
        %v1035 = vadd.f32 0.0, %v1034
        %v1036 = vpop.f32.mrf.mxu0
        %v1037 = vadd.f32 0.0, %v1036
        %1038 = vmatmul.bf16.gmra.mxu0 %v858
        %v1039 = vpop.f32.mrf.mxu0
        %v1040 = vadd.f32 0.0, %v1039
        %v1041 = vpop.f32.mrf.mxu0
        %v1042 = vadd.f32 0.0, %v1041
        %1043 = vmatmul.bf16.gmra.mxu0 %v861
        %v1044 = vpop.f32.mrf.mxu0
        %v1045 = vadd.f32 0.0, %v1044
        %v1046 = vpop.f32.mrf.mxu0
        %v1047 = vadd.f32 0.0, %v1046
        %1048 = vmatmul.bf16.gmra.mxu0 %v864
        %v1049 = vpop.f32.mrf.mxu0
        %v1050 = vadd.f32 0.0, %v1049
        %v1051 = vpop.f32.mrf.mxu0
        %v1052 = vadd.f32 0.0, %v1051
        %1053 = vmatmul.bf16.gmra.mxu0 %v867
        %v1054 = vpop.f32.mrf.mxu0
        %v1055 = vadd.f32 0.0, %v1054
        %v1056 = vpop.f32.mrf.mxu0
        %v1057 = vadd.f32 0.0, %v1056
        %1058 = vmatmul.bf16.gmra.mxu0 %v870
        %v1059 = vpop.f32.mrf.mxu0
        %v1060 = vadd.f32 0.0, %v1059
        %v1061 = vpop.f32.mrf.mxu0
        %v1062 = vadd.f32 0.0, %v1061
        %1063 = vmatmul.bf16.gmra.mxu0 %v873
        %v1064 = vpop.f32.mrf.mxu0
        %v1065 = vadd.f32 0.0, %v1064
        %v1066 = vpop.f32.mrf.mxu0
        %v1067 = vadd.f32 0.0, %v1066
        %1068 = vmatmul.bf16.gmra.mxu0 %v876
        %v1069 = vpop.f32.mrf.mxu0
        %v1070 = vadd.f32 0.0, %v1069
        %v1071 = vpop.f32.mrf.mxu0
        %v1072 = vadd.f32 0.0, %v1071
        %1073 = vdwg.mxu0
        %vm1074 = vcmask 64512
        %v1075 = vsel %vm1074, %v895, -inf
        %v1076 = vsel %vm1074, %v940, -inf
        %v1077 = vmax.f32 %v1075, %v1076
        %v1078 = vsel %vm1074, %v985, -inf
        %v1079 = vmax.f32 %v1077, %v1078
        %v1080 = vsel %vm1074, %v1030, -inf
        %v1081 = vmax.f32 %v1079, %v1080
        %v1082 = vsel %vm1074, %v897, -inf
        %v1083 = vsel %vm1074, %v942, -inf
        %v1084 = vmax.f32 %v1082, %v1083
        %v1085 = vsel %vm1074, %v987, -inf
        %v1086 = vmax.f32 %v1084, %v1085
        %v1087 = vsel %vm1074, %v1032, -inf
        %v1088 = vmax.f32 %v1086, %v1087
        %v1089 = vsel %vm1074, %v900, -inf
        %v1090 = vsel %vm1074, %v945, -inf
        %v1091 = vmax.f32 %v1089, %v1090
        %v1092 = vsel %vm1074, %v990, -inf
        %v1093 = vmax.f32 %v1091, %v1092
        %v1094 = vsel %vm1074, %v1035, -inf
        %v1095 = vmax.f32 %v1093, %v1094
        %v1096 = vsel %vm1074, %v902, -inf
        %v1097 = vsel %vm1074, %v947, -inf
        %v1098 = vmax.f32 %v1096, %v1097
        %v1099 = vsel %vm1074, %v992, -inf
        %v1100 = vmax.f32 %v1098, %v1099
        %v1101 = vsel %vm1074, %v1037, -inf
        %v1102 = vmax.f32 %v1100, %v1101
        %v1103 = vsel %vm1074, %v905, -inf
        %v1104 = vsel %vm1074, %v950, -inf
        %v1105 = vmax.f32 %v1103, %v1104
        %v1106 = vsel %vm1074, %v995, -inf
        %v1107 = vmax.f32 %v1105, %v1106
        %v1108 = vsel %vm1074, %v1040, -inf
        %v1109 = vmax.f32 %v1107, %v1108
        %v1110 = vsel %vm1074, %v907, -inf
        %v1111 = vsel %vm1074, %v952, -inf
        %v1112 = vmax.f32 %v1110, %v1111
        %v1113 = vsel %vm1074, %v997, -inf
        %v1114 = vmax.f32 %v1112, %v1113
        %v1115 = vsel %vm1074, %v1042, -inf
        %v1116 = vmax.f32 %v1114, %v1115
        %v1117 = vsel %vm1074, %v910, -inf
        %v1118 = vsel %vm1074, %v955, -inf
        %v1119 = vmax.f32 %v1117, %v1118
        %v1120 = vsel %vm1074, %v1000, -inf
        %v1121 = vmax.f32 %v1119, %v1120
        %v1122 = vsel %vm1074, %v1045, -inf
        %v1123 = vmax.f32 %v1121, %v1122
        %v1124 = vsel %vm1074, %v912, -inf
        %v1125 = vsel %vm1074, %v957, -inf
        %v1126 = vmax.f32 %v1124, %v1125
        %v1127 = vsel %vm1074, %v1002, -inf
        %v1128 = vmax.f32 %v1126, %v1127
        %v1129 = vsel %vm1074, %v1047, -inf
        %v1130 = vmax.f32 %v1128, %v1129
        %v1131 = vsel %vm1074, %v915, -inf
        %v1132 = vsel %vm1074, %v960, -inf
        %v1133 = vmax.f32 %v1131, %v1132
        %v1134 = vsel %vm1074, %v1005, -inf
        %v1135 = vmax.f32 %v1133, %v1134
        %v1136 = vsel %vm1074, %v1050, -inf
        %v1137 = vmax.f32 %v1135, %v1136
        %v1138 = vsel %vm1074, %v917, -inf
        %v1139 = vsel %vm1074, %v962, -inf
        %v1140 = vmax.f32 %v1138, %v1139
        %v1141 = vsel %vm1074, %v1007, -inf
        %v1142 = vmax.f32 %v1140, %v1141
        %v1143 = vsel %vm1074, %v1052, -inf
        %v1144 = vmax.f32 %v1142, %v1143
        %v1145 = vsel %vm1074, %v920, -inf
        %v1146 = vsel %vm1074, %v965, -inf
        %v1147 = vmax.f32 %v1145, %v1146
        %v1148 = vsel %vm1074, %v1010, -inf
        %v1149 = vmax.f32 %v1147, %v1148
        %v1150 = vsel %vm1074, %v1055, -inf
        %v1151 = vmax.f32 %v1149, %v1150
        %v1152 = vsel %vm1074, %v922, -inf
        %v1153 = vsel %vm1074, %v967, -inf
        %v1154 = vmax.f32 %v1152, %v1153
        %v1155 = vsel %vm1074, %v1012, -inf
        %v1156 = vmax.f32 %v1154, %v1155
        %v1157 = vsel %vm1074, %v1057, -inf
        %v1158 = vmax.f32 %v1156, %v1157
        %v1159 = vsel %vm1074, %v925, -inf
        %v1160 = vsel %vm1074, %v970, -inf
        %v1161 = vmax.f32 %v1159, %v1160
        %v1162 = vsel %vm1074, %v1015, -inf
        %v1163 = vmax.f32 %v1161, %v1162
        %v1164 = vsel %vm1074, %v1060, -inf
        %v1165 = vmax.f32 %v1163, %v1164
        %v1166 = vsel %vm1074, %v927, -inf
        %v1167 = vsel %vm1074, %v972, -inf
        %v1168 = vmax.f32 %v1166, %v1167
        %v1169 = vsel %vm1074, %v1017, -inf
        %v1170 = vmax.f32 %v1168, %v1169
        %v1171 = vsel %vm1074, %v1062, -inf
        %v1172 = vmax.f32 %v1170, %v1171
        %v1173 = vsel %vm1074, %v930, -inf
        %v1174 = vsel %vm1074, %v975, -inf
        %v1175 = vmax.f32 %v1173, %v1174
        %v1176 = vsel %vm1074, %v1020, -inf
        %v1177 = vmax.f32 %v1175, %v1176
        %v1178 = vsel %vm1074, %v1065, -inf
        %v1179 = vmax.f32 %v1177, %v1178
        %v1180 = vsel %vm1074, %v932, -inf
        %v1181 = vsel %vm1074, %v977, -inf
        %v1182 = vmax.f32 %v1180, %v1181
        %v1183 = vsel %vm1074, %v1022, -inf
        %v1184 = vmax.f32 %v1182, %v1183
        %v1185 = vsel %vm1074, %v1067, -inf
        %v1186 = vmax.f32 %v1184, %v1185
        %v1187 = vsel %vm1074, %v935, -inf
        %v1188 = vsel %vm1074, %v980, -inf
        %v1189 = vmax.f32 %v1187, %v1188
        %v1190 = vsel %vm1074, %v1025, -inf
        %v1191 = vmax.f32 %v1189, %v1190
        %v1192 = vsel %vm1074, %v1070, -inf
        %v1193 = vmax.f32 %v1191, %v1192
        %v1194 = vsel %vm1074, %v937, -inf
        %v1195 = vsel %vm1074, %v982, -inf
        %v1196 = vmax.f32 %v1194, %v1195
        %v1197 = vsel %vm1074, %v1027, -inf
        %v1198 = vmax.f32 %v1196, %v1197
        %v1199 = vsel %vm1074, %v1072, -inf
        %v1200 = vmax.f32 %v1198, %v1199
        %v1201 = vld [vmem:[%s2] sm:$0x1]
        %v1203 = vperm.slane %v1201, 0
        %v1205 = vadd.f32 %v1081, %v1203
        %v1206 = vadd.f32 %v1088, %v1203
        %v1207 = vadd.f32 %v1095, %v1203
        %v1208 = vadd.f32 %v1102, %v1203
        %v1209 = vadd.f32 %v1109, %v1203
        %v1210 = vadd.f32 %v1116, %v1203
        %v1211 = vadd.f32 %v1123, %v1203
        %v1212 = vadd.f32 %v1130, %v1203
        %v1213 = vadd.f32 %v1137, %v1203
        %v1214 = vadd.f32 %v1144, %v1203
        %v1215 = vadd.f32 %v1151, %v1203
        %v1216 = vadd.f32 %v1158, %v1203
        %v1217 = vadd.f32 %v1165, %v1203
        %v1218 = vadd.f32 %v1172, %v1203
        %v1219 = vadd.f32 %v1179, %v1203
        %v1220 = vadd.f32 %v1186, %v1203
        %v1221 = vadd.f32 %v1193, %v1203
        %v1222 = vadd.f32 %v1200, %v1203
        %v1223 = vmax.f32 %v1205, 0.0
        %v1224 = vmax.f32 %v1206, 0.0
        %v1225 = vmax.f32 %v1207, 0.0
        %v1226 = vmax.f32 %v1208, 0.0
        %v1227 = vmax.f32 %v1209, 0.0
        %v1228 = vmax.f32 %v1210, 0.0
        %v1229 = vmax.f32 %v1211, 0.0
        %v1230 = vmax.f32 %v1212, 0.0
        %v1231 = vmax.f32 %v1213, 0.0
        %v1232 = vmax.f32 %v1214, 0.0
        %v1233 = vmax.f32 %v1215, 0.0
        %v1234 = vmax.f32 %v1216, 0.0
        %v1235 = vmax.f32 %v1217, 0.0
        %v1236 = vmax.f32 %v1218, 0.0
        %v1237 = vmax.f32 %v1219, 0.0
        %v1238 = vmax.f32 %v1220, 0.0
        %v1239 = vmax.f32 %v1221, 0.0
        %v1240 = vmax.f32 %v1222, 0.0
        %v1241 = vpack.c.bf16 %v1223, %v1223
        %v1242 = vpack.c.bf16 %v1224, %v1224
        %v1243 = vpack.c.bf16 %v1225, %v1225
        %v1244 = vpack.c.bf16 %v1226, %v1226
        %v1245 = vpack.c.bf16 %v1227, %v1227
        %v1246 = vpack.c.bf16 %v1228, %v1228
        %v1247 = vpack.c.bf16 %v1229, %v1229
        %v1248 = vpack.c.bf16 %v1230, %v1230
        %v1249 = vpack.c.bf16 %v1231, %v1231
        %v1250 = vpack.c.bf16 %v1232, %v1232
        %v1251 = vpack.c.bf16 %v1233, %v1233
        %v1252 = vpack.c.bf16 %v1234, %v1234
        %v1253 = vpack.c.bf16 %v1235, %v1235
        %v1254 = vpack.c.bf16 %v1236, %v1236
        %v1255 = vpack.c.bf16 %v1237, %v1237
        %v1256 = vpack.c.bf16 %v1238, %v1238
        %v1257 = vpack.c.bf16 %v1239, %v1239
        %v1258 = vpack.c.bf16 %v1240, %v1240
        %vm1259 = vcmask 60416
        %1260 = vst.msk [vmem:[%s499] sm:$0xf] %vm1259, %v1241
        %1261 = vst.msk [vmem:[%s499 + $0x4] sm:$0xf] %vm1259, %v1242
        %1262 = vst.msk [vmem:[%s499 + $0x8] sm:$0xf] %vm1259, %v1243
        %1263 = vst.msk [vmem:[%s499 + $0xc] sm:$0xf] %vm1259, %v1244
        %1264 = vst.msk [vmem:[%s499 + $0x10] sm:$0xf] %vm1259, %v1245
        %1265 = vst.msk [vmem:[%s499 + $0x14] sm:$0xf] %vm1259, %v1246
        %1266 = vst.msk [vmem:[%s499 + $0x18] sm:$0xf] %vm1259, %v1247
        %1267 = vst.msk [vmem:[%s499 + $0x1c] sm:$0xf] %vm1259, %v1248
        %1268 = vst.msk [vmem:[%s499 + $0x20] sm:$0xf] %vm1259, %v1249
        %1269 = vst.msk [vmem:[%s499 + $0x24] sm:$0xf] %vm1259, %v1250
        %1270 = vst.msk [vmem:[%s499 + $0x28] sm:$0xf] %vm1259, %v1251
        %1271 = vst.msk [vmem:[%s499 + $0x2c] sm:$0xf] %vm1259, %v1252
        %1272 = vst.msk [vmem:[%s499 + $0x30] sm:$0xf] %vm1259, %v1253
        %1273 = vst.msk [vmem:[%s499 + $0x34] sm:$0xf] %vm1259, %v1254
        %1274 = vst.msk [vmem:[%s499 + $0x38] sm:$0xf] %vm1259, %v1255
        %1275 = vst.msk [vmem:[%s499 + $0x3c] sm:$0xf] %vm1259, %v1256
        %1276 = vst.msk [vmem:[%s499 + $0x40] sm:$0xf] %vm1259, %v1257
        %1277 = vst.msk [vmem:[%s499 + $0x44] sm:$0xf] %vm1259, %v1258
        %s1278 = smul.u32 18, %s14
        %p1279 = scmp.lt.s32.totalorder %s1278, 35
        %s1280 = scalar_select %p1279, %s1278, 35
        %s1281 = smul.addr %s1280, 4
        %s1282 = scalar_lea.vmem %s3, %s1281
        // Predicated region
        $region74: #{net_forward.2} parent=68 // pred_check
          %p1283 = pneg %p100
        $region75: #{net_forward.2} parent=68 // pred_check_branch
          %1285 = sbr.rel (%p1283) target = $region77
        $region76: #{net_forward.2} parent=68 // pred_region
          %s1286 = smul.u32 18, %s14
        $region77: #{net_forward.2} parent=68 // pred_fallthru
          _
      $region69: #{net_forward.2} parent=5 // pred_fallthru
        _
      %p1287 = scmp.le.s32.totalorder 2, %s9
      // Predicated region
      $region78: #{net_forward.2} parent=5 // pred_check
        %p1288 = pneg %p1287
      $region79: #{net_forward.2} parent=5 // pred_check_branch
        %1290 = sbr.rel (%p1288) target = $region81
      $region80: #{net_forward.2} parent=5 // pred_region
        %s1291 = ssub.s32 %s9, 2
        // Predicated region
        $region82: #{net_forward.2} parent=80 // pred_check
          %p1292 = pneg %p106
        $region83: #{net_forward.2} parent=80 // pred_check_branch
          %1294 = sbr.rel (%p1292) target = $region85
        $region84: #{net_forward.2} parent=80 // pred_region
          %s1295 = smul.u32 18, %s15
          %p1296 = scmp.lt.s32.totalorder %s1295, 35
          %s1297 = scalar_select %p1296, %s1295, 35
          %s1298 = smul.addr %s1297, 4
          %s1299 = scalar_lea.vmem %s3, %s1298
        $region85: #{net_forward.2} parent=80 // pred_fallthru
          _
      $region81: #{net_forward.2} parent=5 // pred_fallthru
        _
    $region6: #{net_forward.2} parent=1 // loop_footer
      %s13 = sadd.s32 1, %s9
    $region7: #{net_forward.2} parent=1 // loop_footer_branch
      %8 = sbr.rel target = $region3
    $region8: #{net_forward.2} parent=1 // loop_exit
      _

// kernel: net_forward.3
$region0: #{net_forward.3}
  #allocation0 [shape = 'u32[]', space=smem, size = 0x4, offset = 0x4, fixed_abs, tag = 'smem constant byte address 0x4 - core index']
  #allocation1 [shape = 'u32[72,128]{1,0:T(1,128)}', space=vmem, size = 0x9000, scoped, tag = 'internal scratch']
  %s0 = inlined_call_operand.vmem [shape: bf16[4,16,16,150], index: 0, kind: input, shape index: {}]
  %s1 = inlined_call_operand.vmem [shape: bf16[150,128], index: 1, kind: input, shape index: {}]
  %s2 = inlined_call_operand.vmem [shape: f32[1,128], index: 2, kind: input, shape index: {}]
  %s3 = inlined_call_operand.vmem [shape: bf16[16,128,128], index: 3, kind: input, shape index: {}]
  %s4 = inlined_call_operand.vmem [shape: f32[1,128], index: 4, kind: input, shape index: {}]
  %s5 = inlined_call_operand.vmem [shape: bf16[128,128], index: 5, kind: input, shape index: {}]
  %s6 = inlined_call_operand.vmem [shape: f32[1,128], index: 6, kind: input, shape index: {}]
  %s7 = inlined_call_operand.vmem [shape: bf16[128,128], index: 7, kind: input, shape index: {}]
  %s8 = inlined_call_operand.vmem [shape: f32[1,128], index: 8, kind: input, shape index: {}]
  %s9 = inlined_call_operand.vmem [shape: f32[16,128], index: 9, kind: output, shape index: {}]
  %s10 = sld [smem:[#allocation0]]
  $region46: #{net_forward.3} parent=0
    _
  %s12 = ssub.s32 1, %s10
  %s13 = scalar_select 0, %s12, %s10
  // Predicated region
  $region2: #{net_forward.3} parent=0 // pred_check
    _
  $region3: #{net_forward.3} parent=0 // pred_check_branch
    %15 = sbr.rel (0) target = $region5
  $region4: #{net_forward.3} parent=0 // pred_region
    _
  $region5: #{net_forward.3} parent=0 // pred_fallthru
    _
  // Predicated region
  $region6: #{net_forward.3} parent=0 // pred_check
    _
  $region7: #{net_forward.3} parent=0 // pred_check_branch
    %17 = sbr.rel (0) target = $region9
  $region8: #{net_forward.3} parent=0 // pred_region
    _
  $region9: #{net_forward.3} parent=0 // pred_fallthru
    _
  // Predicated region
  $region10: #{net_forward.3} parent=0 // pred_check
    _
  $region11: #{net_forward.3} parent=0 // pred_check_branch
    %19 = sbr.rel (0) target = $region13
  $region12: #{net_forward.3} parent=0 // pred_region
    _
  $region13: #{net_forward.3} parent=0 // pred_fallthru
    _
  // Predicated region
  $region14: #{net_forward.3} parent=0 // pred_check
    _
  $region15: #{net_forward.3} parent=0 // pred_check_branch
    %21 = sbr.rel (0) target = $region17
  $region16: #{net_forward.3} parent=0 // pred_region
    _
  $region17: #{net_forward.3} parent=0 // pred_fallthru
    _
  // Predicated region
  $region18: #{net_forward.3} parent=0 // pred_check
    _
  $region19: #{net_forward.3} parent=0 // pred_check_branch
    %23 = sbr.rel (0) target = $region21
  $region20: #{net_forward.3} parent=0 // pred_region
    _
  $region21: #{net_forward.3} parent=0 // pred_fallthru
    _
  // Predicated region
  $region22: #{net_forward.3} parent=0 // pred_check
    _
  $region23: #{net_forward.3} parent=0 // pred_check_branch
    %25 = sbr.rel (0) target = $region25
  $region24: #{net_forward.3} parent=0 // pred_region
    _
  $region25: #{net_forward.3} parent=0 // pred_fallthru
    _
  // Predicated region
  $region26: #{net_forward.3} parent=0 // pred_check
    _
  $region27: #{net_forward.3} parent=0 // pred_check_branch
    %27 = sbr.rel (0) target = $region29
  $region28: #{net_forward.3} parent=0 // pred_region
    _
  $region29: #{net_forward.3} parent=0 // pred_fallthru
    _
  // Predicated region
  $region30: #{net_forward.3} parent=0 // pred_check
    _
  $region31: #{net_forward.3} parent=0 // pred_check_branch
    %29 = sbr.rel (0) target = $region33
  $region32: #{net_forward.3} parent=0 // pred_region
    _
  $region33: #{net_forward.3} parent=0 // pred_fallthru
    _
  // Predicated region
  $region34: #{net_forward.3} parent=0 // pred_check
    _
  $region35: #{net_forward.3} parent=0 // pred_check_branch
    %31 = sbr.rel (0) target = $region37
  $region36: #{net_forward.3} parent=0 // pred_region
    _
  $region37: #{net_forward.3} parent=0 // pred_fallthru
    _
  %v33 = vld [vmem:[%s0] sm:$0xff]
  %v34 = vld [vmem:[%s0 + $0x8] sm:$0xff]
  %v35 = vld [vmem:[%s0 + $0x10] sm:$0xff]
  %v36 = vld [vmem:[%s0 + $0x18] sm:$0xff]
  %v37 = vld [vmem:[%s0 + $0x20] sm:$0xff]
  %v38 = vld [vmem:[%s0 + $0x28] sm:$0xff]
  %v39 = vld [vmem:[%s0 + $0x30] sm:$0xff]
  %v40 = vld [vmem:[%s0 + $0x38] sm:$0xff]
  %v41 = vld [vmem:[%s0 + $0x40] sm:$0xff]
  %v42 = vld [vmem:[%s0 + $0x48] sm:$0xff]
  %v43 = vld [vmem:[%s0 + $0x50] sm:$0xff]
  %v44 = vld [vmem:[%s0 + $0x58] sm:$0xff]
  %v45 = vld [vmem:[%s0 + $0x60] sm:$0xff]
  %v46 = vld [vmem:[%s0 + $0x68] sm:$0xff]
  %v47 = vld [vmem:[%s0 + $0x70] sm:$0xff]
  %v48 = vld [vmem:[%s0 + $0x78] sm:$0xff]
  %v49 = vld [vmem:[%s0 + $0x80] sm:$0xff]
  %v50 = vld [vmem:[%s0 + $0x88] sm:$0xff]
  %v51 = vld [vmem:[%s0 + $0x90] sm:$0xff]
  %v52 = vld [vmem:[%s0 + $0x98] sm:$0xff]
  %v53 = vld [vmem:[%s0 + $0xa0] sm:$0xff]
  %v54 = vld [vmem:[%s0 + $0xa8] sm:$0xff]
  %v55 = vld [vmem:[%s0 + $0xb0] sm:$0xff]
  %v56 = vld [vmem:[%s0 + $0xb8] sm:$0xff]
  %v57 = vld [vmem:[%s0 + $0xc0] sm:$0xff]
  %v58 = vld [vmem:[%s0 + $0xc8] sm:$0xff]
  %v59 = vld [vmem:[%s0 + $0xd0] sm:$0xff]
  %v60 = vld [vmem:[%s0 + $0xd8] sm:$0xff]
  %v61 = vld [vmem:[%s0 + $0xe0] sm:$0xff]
  %v62 = vld [vmem:[%s0 + $0xe8] sm:$0xff]
  %v63 = vld [vmem:[%s0 + $0xf0] sm:$0xff]
  %v64 = vld [vmem:[%s0 + $0xf8] sm:$0xff]
  %v65 = vld [vmem:[%s0 + $0x100] sm:$0xff]
  %v66 = vld [vmem:[%s0 + $0x108] sm:$0xff]
  %v67 = vld [vmem:[%s0 + $0x110] sm:$0xff]
  %v68 = vld [vmem:[%s0 + $0x118] sm:$0xff]
  %v69 = vld [vmem:[%s0 + $0x120] sm:$0xff]
  %v70 = vld [vmem:[%s0 + $0x128] sm:$0xff]
  %v71 = vld [vmem:[%s0 + $0x130] sm:$0xff]
  %v72 = vld [vmem:[%s0 + $0x138] sm:$0xff]
  %v73 = vld [vmem:[%s0 + $0x140] sm:$0xff]
  %v74 = vld [vmem:[%s0 + $0x148] sm:$0xff]
  %v75 = vld [vmem:[%s0 + $0x150] sm:$0xff]
  %v76 = vld [vmem:[%s0 + $0x158] sm:$0xff]
  %v77 = vld [vmem:[%s0 + $0x160] sm:$0xff]
  %v78 = vld [vmem:[%s0 + $0x168] sm:$0xff]
  %v79 = vld [vmem:[%s0 + $0x170] sm:$0xff]
  %v80 = vld [vmem:[%s0 + $0x178] sm:$0xff]
  %v81 = vld [vmem:[%s0 + $0x180] sm:$0xff]
  %v82 = vld [vmem:[%s0 + $0x188] sm:$0xff]
  %v83 = vld [vmem:[%s0 + $0x190] sm:$0xff]
  %v84 = vld [vmem:[%s0 + $0x198] sm:$0xff]
  %v85 = vld [vmem:[%s0 + $0x1a0] sm:$0xff]
  %v86 = vld [vmem:[%s0 + $0x1a8] sm:$0xff]
  %v87 = vld [vmem:[%s0 + $0x1b0] sm:$0xff]
  %v88 = vld [vmem:[%s0 + $0x1b8] sm:$0xff]
  %v89 = vld [vmem:[%s0 + $0x1c0] sm:$0xff]
  %v90 = vld [vmem:[%s0 + $0x1c8] sm:$0xff]
  %v91 = vld [vmem:[%s0 + $0x1d0] sm:$0xff]
  %v92 = vld [vmem:[%s0 + $0x1d8] sm:$0xff]
  %v93 = vld [vmem:[%s0 + $0x1e0] sm:$0xff]
  %v94 = vld [vmem:[%s0 + $0x1e8] sm:$0xff]
  %v95 = vld [vmem:[%s0 + $0x1f0] sm:$0xff]
  %v96 = vld [vmem:[%s0 + $0x1f8] sm:$0xff]
  %v97 = vld [vmem:[%s0 + $0x200] sm:$0xff]
  %v98 = vld [vmem:[%s0 + $0x208] sm:$0xff]
  %v99 = vld [vmem:[%s0 + $0x210] sm:$0xff]
  %v100 = vld [vmem:[%s0 + $0x218] sm:$0xff]
  %v101 = vld [vmem:[%s0 + $0x220] sm:$0xff]
  %v102 = vld [vmem:[%s0 + $0x228] sm:$0xff]
  %v103 = vld [vmem:[%s0 + $0x230] sm:$0xff]
  %v104 = vld [vmem:[%s0 + $0x238] sm:$0xff]
  %v105 = vld [vmem:[%s0 + $0x240] sm:$0xff]
  %v106 = vld [vmem:[%s0 + $0x248] sm:$0xff]
  %v107 = vld [vmem:[%s0 + $0x250] sm:$0xff]
  %v108 = vld [vmem:[%s0 + $0x258] sm:$0xff]
  %v109 = vld [vmem:[%s0 + $0x260] sm:$0xff]
  %v110 = vld [vmem:[%s0 + $0x268] sm:$0xff]
  %v111 = vld [vmem:[%s0 + $0x270] sm:$0xff]
  %v112 = vld [vmem:[%s0 + $0x278] sm:$0xff]
  %v113 = vld [vmem:[%s0 + $0x280] sm:$0xff]
  %v114 = vld [vmem:[%s0 + $0x288] sm:$0xff]
  %v115 = vld [vmem:[%s0 + $0x290] sm:$0xff]
  %v116 = vld [vmem:[%s0 + $0x298] sm:$0xff]
  %v117 = vld [vmem:[%s0 + $0x2a0] sm:$0xff]
  %v118 = vld [vmem:[%s0 + $0x2a8] sm:$0xff]
  %v119 = vld [vmem:[%s0 + $0x2b0] sm:$0xff]
  %v120 = vld [vmem:[%s0 + $0x2b8] sm:$0xff]
  %v121 = vld [vmem:[%s0 + $0x2c0] sm:$0xff]
  %v122 = vld [vmem:[%s0 + $0x2c8] sm:$0xff]
  %v123 = vld [vmem:[%s0 + $0x2d0] sm:$0xff]
  %v124 = vld [vmem:[%s0 + $0x2d8] sm:$0xff]
  %v125 = vld [vmem:[%s0 + $0x2e0] sm:$0xff]
  %v126 = vld [vmem:[%s0 + $0x2e8] sm:$0xff]
  %v127 = vld [vmem:[%s0 + $0x2f0] sm:$0xff]
  %v128 = vld [vmem:[%s0 + $0x2f8] sm:$0xff]
  %v129 = vld [vmem:[%s0 + $0x300] sm:$0xff]
  %v130 = vld [vmem:[%s0 + $0x308] sm:$0xff]
  %v131 = vld [vmem:[%s0 + $0x310] sm:$0xff]
  %v132 = vld [vmem:[%s0 + $0x318] sm:$0xff]
  %v133 = vld [vmem:[%s0 + $0x320] sm:$0xff]
  %v134 = vld [vmem:[%s0 + $0x328] sm:$0xff]
  %v135 = vld [vmem:[%s0 + $0x330] sm:$0xff]
  %v136 = vld [vmem:[%s0 + $0x338] sm:$0xff]
  %v137 = vld [vmem:[%s0 + $0x340] sm:$0xff]
  %v138 = vld [vmem:[%s0 + $0x348] sm:$0xff]
  %v139 = vld [vmem:[%s0 + $0x350] sm:$0xff]
  %v140 = vld [vmem:[%s0 + $0x358] sm:$0xff]
  %v141 = vld [vmem:[%s0 + $0x360] sm:$0xff]
  %v142 = vld [vmem:[%s0 + $0x368] sm:$0xff]
  %v143 = vld [vmem:[%s0 + $0x370] sm:$0xff]
  %v144 = vld [vmem:[%s0 + $0x378] sm:$0xff]
  %v145 = vld [vmem:[%s0 + $0x380] sm:$0xff]
  %v146 = vld [vmem:[%s0 + $0x388] sm:$0xff]
  %v147 = vld [vmem:[%s0 + $0x390] sm:$0xff]
  %v148 = vld [vmem:[%s0 + $0x398] sm:$0xff]
  %v149 = vld [vmem:[%s0 + $0x3a0] sm:$0xff]
  %v150 = vld [vmem:[%s0 + $0x3a8] sm:$0xff]
  %v151 = vld [vmem:[%s0 + $0x3b0] sm:$0xff]
  %v152 = vld [vmem:[%s0 + $0x3b8] sm:$0xff]
  %v153 = vld [vmem:[%s0 + $0x3c0] sm:$0xff]
  %v154 = vld [vmem:[%s0 + $0x3c8] sm:$0xff]
  %v155 = vld [vmem:[%s0 + $0x3d0] sm:$0xff]
  %v156 = vld [vmem:[%s0 + $0x3d8] sm:$0xff]
  %v157 = vld [vmem:[%s0 + $0x3e0] sm:$0xff]
  %v158 = vld [vmem:[%s0 + $0x3e8] sm:$0xff]
  %v159 = vld [vmem:[%s0 + $0x3f0] sm:$0xff]
  %v160 = vld [vmem:[%s0 + $0x3f8] sm:$0xff]
  %v161 = vld [vmem:[%s1] sm:$0xf]
  %v162 = vld [vmem:[%s1 + $0x4] sm:$0xf]
  %v163 = vld [vmem:[%s1 + $0x8] sm:$0xf]
  %v164 = vld [vmem:[%s1 + $0xc] sm:$0xf]
  %v165 = vld [vmem:[%s1 + $0x10] sm:$0xf]
  %v166 = vld [vmem:[%s1 + $0x14] sm:$0xf]
  %v167 = vld [vmem:[%s1 + $0x18] sm:$0xf]
  %v168 = vld [vmem:[%s1 + $0x1c] sm:$0xf]
  %v169 = vld [vmem:[%s1 + $0x20] sm:$0xf]
  %v170 = vld [vmem:[%s1 + $0x24] sm:$0xf]
  %v171 = vld [vmem:[%s1 + $0x28] sm:$0xf]
  %v172 = vld [vmem:[%s1 + $0x2c] sm:$0xf]
  %v173 = vld [vmem:[%s1 + $0x30] sm:$0xf]
  %v174 = vld [vmem:[%s1 + $0x34] sm:$0xf]
  %v175 = vld [vmem:[%s1 + $0x38] sm:$0xf]
  %v176 = vld [vmem:[%s1 + $0x3c] sm:$0xf]
  %v177 = vld [vmem:[%s1 + $0x40] sm:$0xf]
  %v178 = vld [vmem:[%s1 + $0x44] sm:$0xf]
  %v179 = vld [vmem:[%s1 + $0x48] sm:$0x7]
  %v308 = vunpack.c.l.b16 %v33
  %v309 = vunpack.c.h.b16 %v33
  %v310 = vunpack.c.l.b16 %v34
  %v311 = vunpack.c.h.b16 %v34
  %v312 = vunpack.c.l.b16 %v35
  %v313 = vunpack.c.h.b16 %v35
  %v314 = vunpack.c.l.b16 %v36
  %v315 = vunpack.c.h.b16 %v36
  %v316 = vunpack.c.l.b16 %v37
  %v317 = vunpack.c.h.b16 %v37
  %v318 = vunpack.c.l.b16 %v38
  %v319 = vunpack.c.h.b16 %v38
  %v320 = vunpack.c.l.b16 %v39
  %v321 = vunpack.c.h.b16 %v39
  %v322 = vunpack.c.l.b16 %v40
  %v323 = vunpack.c.h.b16 %v40
  %v324 = vunpack.c.l.b16 %v41
  %v325 = vunpack.c.h.b16 %v41
  %v326 = vunpack.c.l.b16 %v42
  %v327 = vunpack.c.h.b16 %v42
  %v328 = vunpack.c.l.b16 %v43
  %v329 = vunpack.c.h.b16 %v43
  %v330 = vunpack.c.l.b16 %v44
  %v331 = vunpack.c.h.b16 %v44
  %v332 = vunpack.c.l.b16 %v45
  %v333 = vunpack.c.h.b16 %v45
  %v334 = vunpack.c.l.b16 %v46
  %v335 = vunpack.c.h.b16 %v46
  %v336 = vunpack.c.l.b16 %v47
  %v337 = vunpack.c.h.b16 %v47
  %v338 = vunpack.c.l.b16 %v48
  %v339 = vunpack.c.h.b16 %v48
  %v340 = vunpack.c.l.b16 %v49
  %v341 = vunpack.c.h.b16 %v49
  %v342 = vunpack.c.l.b16 %v50
  %v343 = vunpack.c.h.b16 %v50
  %v344 = vunpack.c.l.b16 %v51
  %v345 = vunpack.c.h.b16 %v51
  %v346 = vunpack.c.l.b16 %v52
  %v347 = vunpack.c.h.b16 %v52
  %v348 = vunpack.c.l.b16 %v53
  %v349 = vunpack.c.h.b16 %v53
  %v350 = vunpack.c.l.b16 %v54
  %v351 = vunpack.c.h.b16 %v54
  %v352 = vunpack.c.l.b16 %v55
  %v353 = vunpack.c.h.b16 %v55
  %v354 = vunpack.c.l.b16 %v56
  %v355 = vunpack.c.h.b16 %v56
  %v356 = vunpack.c.l.b16 %v57
  %v357 = vunpack.c.h.b16 %v57
  %v358 = vunpack.c.l.b16 %v58
  %v359 = vunpack.c.h.b16 %v58
  %v360 = vunpack.c.l.b16 %v59
  %v361 = vunpack.c.h.b16 %v59
  %v362 = vunpack.c.l.b16 %v60
  %v363 = vunpack.c.h.b16 %v60
  %v364 = vunpack.c.l.b16 %v61
  %v365 = vunpack.c.h.b16 %v61
  %v366 = vunpack.c.l.b16 %v62
  %v367 = vunpack.c.h.b16 %v62
  %v368 = vunpack.c.l.b16 %v63
  %v369 = vunpack.c.h.b16 %v63
  %v370 = vunpack.c.l.b16 %v64
  %v371 = vunpack.c.h.b16 %v64
  %v372 = vunpack.c.l.b16 %v65
  %v373 = vunpack.c.h.b16 %v65
  %v374 = vunpack.c.l.b16 %v66
  %v375 = vunpack.c.h.b16 %v66
  %v376 = vunpack.c.l.b16 %v67
  %v377 = vunpack.c.h.b16 %v67
  %v378 = vunpack.c.l.b16 %v68
  %v379 = vunpack.c.h.b16 %v68
  %v380 = vunpack.c.l.b16 %v69
  %v381 = vunpack.c.h.b16 %v69
  %v382 = vunpack.c.l.b16 %v70
  %v383 = vunpack.c.h.b16 %v70
  %v384 = vunpack.c.l.b16 %v71
  %v385 = vunpack.c.h.b16 %v71
  %v386 = vunpack.c.l.b16 %v72
  %v387 = vunpack.c.h.b16 %v72
  %v388 = vunpack.c.l.b16 %v73
  %v389 = vunpack.c.h.b16 %v73
  %v390 = vunpack.c.l.b16 %v74
  %v391 = vunpack.c.h.b16 %v74
  %v392 = vunpack.c.l.b16 %v75
  %v393 = vunpack.c.h.b16 %v75
  %v394 = vunpack.c.l.b16 %v76
  %v395 = vunpack.c.h.b16 %v76
  %v396 = vunpack.c.l.b16 %v77
  %v397 = vunpack.c.h.b16 %v77
  %v398 = vunpack.c.l.b16 %v78
  %v399 = vunpack.c.h.b16 %v78
  %v400 = vunpack.c.l.b16 %v79
  %v401 = vunpack.c.h.b16 %v79
  %v402 = vunpack.c.l.b16 %v80
  %v403 = vunpack.c.h.b16 %v80
  %v404 = vunpack.c.l.b16 %v81
  %v405 = vunpack.c.h.b16 %v81
  %v406 = vunpack.c.l.b16 %v82
  %v407 = vunpack.c.h.b16 %v82
  %v408 = vunpack.c.l.b16 %v83
  %v409 = vunpack.c.h.b16 %v83
  %v410 = vunpack.c.l.b16 %v84
  %v411 = vunpack.c.h.b16 %v84
  %v412 = vunpack.c.l.b16 %v85
  %v413 = vunpack.c.h.b16 %v85
  %v414 = vunpack.c.l.b16 %v86
  %v415 = vunpack.c.h.b16 %v86
  %v416 = vunpack.c.l.b16 %v87
  %v417 = vunpack.c.h.b16 %v87
  %v418 = vunpack.c.l.b16 %v88
  %v419 = vunpack.c.h.b16 %v88
  %v420 = vunpack.c.l.b16 %v89
  %v421 = vunpack.c.h.b16 %v89
  %v422 = vunpack.c.l.b16 %v90
  %v423 = vunpack.c.h.b16 %v90
  %v424 = vunpack.c.l.b16 %v91
  %v425 = vunpack.c.h.b16 %v91
  %v426 = vunpack.c.l.b16 %v92
  %v427 = vunpack.c.h.b16 %v92
  %v428 = vunpack.c.l.b16 %v93
  %v429 = vunpack.c.h.b16 %v93
  %v430 = vunpack.c.l.b16 %v94
  %v431 = vunpack.c.h.b16 %v94
  %v432 = vunpack.c.l.b16 %v95
  %v433 = vunpack.c.h.b16 %v95
  %v434 = vunpack.c.l.b16 %v96
  %v435 = vunpack.c.h.b16 %v96
  %v436 = vunpack.c.l.b16 %v97
  %v437 = vunpack.c.h.b16 %v97
  %v438 = vunpack.c.l.b16 %v98
  %v439 = vunpack.c.h.b16 %v98
  %v440 = vunpack.c.l.b16 %v99
  %v441 = vunpack.c.h.b16 %v99
  %v442 = vunpack.c.l.b16 %v100
  %v443 = vunpack.c.h.b16 %v100
  %v444 = vunpack.c.l.b16 %v101
  %v445 = vunpack.c.h.b16 %v101
  %v446 = vunpack.c.l.b16 %v102
  %v447 = vunpack.c.h.b16 %v102
  %v448 = vunpack.c.l.b16 %v103
  %v449 = vunpack.c.h.b16 %v103
  %v450 = vunpack.c.l.b16 %v104
  %v451 = vunpack.c.h.b16 %v104
  %v452 = vunpack.c.l.b16 %v105
  %v453 = vunpack.c.h.b16 %v105
  %v454 = vunpack.c.l.b16 %v106
  %v455 = vunpack.c.h.b16 %v106
  %v456 = vunpack.c.l.b16 %v107
  %v457 = vunpack.c.h.b16 %v107
  %v458 = vunpack.c.l.b16 %v108
  %v459 = vunpack.c.h.b16 %v108
  %v460 = vunpack.c.l.b16 %v109
  %v461 = vunpack.c.h.b16 %v109
  %v462 = vunpack.c.l.b16 %v110
  %v463 = vunpack.c.h.b16 %v110
  %v464 = vunpack.c.l.b16 %v111
  %v465 = vunpack.c.h.b16 %v111
  %v466 = vunpack.c.l.b16 %v112
  %v467 = vunpack.c.h.b16 %v112
  %v468 = vunpack.c.l.b16 %v113
  %v469 = vunpack.c.h.b16 %v113
  %v470 = vunpack.c.l.b16 %v114
  %v471 = vunpack.c.h.b16 %v114
  %v472 = vunpack.c.l.b16 %v115
  %v473 = vunpack.c.h.b16 %v115
  %v474 = vunpack.c.l.b16 %v116
  %v475 = vunpack.c.h.b16 %v116
  %v476 = vunpack.c.l.b16 %v117
  %v477 = vunpack.c.h.b16 %v117
  %v478 = vunpack.c.l.b16 %v118
  %v479 = vunpack.c.h.b16 %v118
  %v480 = vunpack.c.l.b16 %v119
  %v481 = vunpack.c.h.b16 %v119
  %v482 = vunpack.c.l.b16 %v120
  %v483 = vunpack.c.h.b16 %v120
  %v484 = vunpack.c.l.b16 %v121
  %v485 = vunpack.c.h.b16 %v121
  %v486 = vunpack.c.l.b16 %v122
  %v487 = vunpack.c.h.b16 %v122
  %v488 = vunpack.c.l.b16 %v123
  %v489 = vunpack.c.h.b16 %v123
  %v490 = vunpack.c.l.b16 %v124
  %v491 = vunpack.c.h.b16 %v124
  %v492 = vunpack.c.l.b16 %v125
  %v493 = vunpack.c.h.b16 %v125
  %v494 = vunpack.c.l.b16 %v126
  %v495 = vunpack.c.h.b16 %v126
  %v496 = vunpack.c.l.b16 %v127
  %v497 = vunpack.c.h.b16 %v127
  %v498 = vunpack.c.l.b16 %v128
  %v499 = vunpack.c.h.b16 %v128
  %v500 = vunpack.c.l.b16 %v129
  %v501 = vunpack.c.h.b16 %v129
  %v502 = vunpack.c.l.b16 %v130
  %v503 = vunpack.c.h.b16 %v130
  %v504 = vunpack.c.l.b16 %v131
  %v505 = vunpack.c.h.b16 %v131
  %v506 = vunpack.c.l.b16 %v132
  %v507 = vunpack.c.h.b16 %v132
  %v508 = vunpack.c.l.b16 %v133
  %v509 = vunpack.c.h.b16 %v133
  %v510 = vunpack.c.l.b16 %v134
  %v511 = vunpack.c.h.b16 %v134
  %v512 = vunpack.c.l.b16 %v135
  %v513 = vunpack.c.h.b16 %v135
  %v514 = vunpack.c.l.b16 %v136
  %v515 = vunpack.c.h.b16 %v136
  %v516 = vunpack.c.l.b16 %v137
  %v517 = vunpack.c.h.b16 %v137
  %v518 = vunpack.c.l.b16 %v138
  %v519 = vunpack.c.h.b16 %v138
  %v520 = vunpack.c.l.b16 %v139
  %v521 = vunpack.c.h.b16 %v139
  %v522 = vunpack.c.l.b16 %v140
  %v523 = vunpack.c.h.b16 %v140
  %v524 = vunpack.c.l.b16 %v141
  %v525 = vunpack.c.h.b16 %v141
  %v526 = vunpack.c.l.b16 %v142
  %v527 = vunpack.c.h.b16 %v142
  %v528 = vunpack.c.l.b16 %v143
  %v529 = vunpack.c.h.b16 %v143
  %v530 = vunpack.c.l.b16 %v144
  %v531 = vunpack.c.h.b16 %v144
  %v532 = vunpack.c.l.b16 %v145
  %v533 = vunpack.c.h.b16 %v145
  %v534 = vunpack.c.l.b16 %v146
  %v535 = vunpack.c.h.b16 %v146
  %v536 = vunpack.c.l.b16 %v147
  %v537 = vunpack.c.h.b16 %v147
  %v538 = vunpack.c.l.b16 %v148
  %v539 = vunpack.c.h.b16 %v148
  %v540 = vunpack.c.l.b16 %v149
  %v541 = vunpack.c.h.b16 %v149
  %v542 = vunpack.c.l.b16 %v150
  %v543 = vunpack.c.h.b16 %v150
  %v544 = vunpack.c.l.b16 %v151
  %v545 = vunpack.c.h.b16 %v151
  %v546 = vunpack.c.l.b16 %v152
  %v547 = vunpack.c.h.b16 %v152
  %v548 = vunpack.c.l.b16 %v153
  %v549 = vunpack.c.h.b16 %v153
  %v550 = vunpack.c.l.b16 %v154
  %v551 = vunpack.c.h.b16 %v154
  %v552 = vunpack.c.l.b16 %v155
  %v553 = vunpack.c.h.b16 %v155
  %v554 = vunpack.c.l.b16 %v156
  %v555 = vunpack.c.h.b16 %v156
  %v556 = vunpack.c.l.b16 %v157
  %v557 = vunpack.c.h.b16 %v157
  %v558 = vunpack.c.l.b16 %v158
  %v559 = vunpack.c.h.b16 %v158
  %v560 = vunpack.c.l.b16 %v159
  %v561 = vunpack.c.h.b16 %v159
  %v562 = vunpack.c.l.b16 %v160
  %v563 = vunpack.c.h.b16 %v160
  %v564 = vpack.c.b16 %v310, %v308
  %v565 = vpack.c.b16 %v311, %v309
  %v566 = vpack.c.b16 %v314, %v312
  %v567 = vpack.c.b16 %v315, %v313
  %v568 = vpack.c.b16 %v318, %v316
  %v569 = vpack.c.b16 %v319, %v317
  %v570 = vpack.c.b16 %v322, %v320
  %v571 = vpack.c.b16 %v323, %v321
  %v572 = vpack.c.b16 %v326, %v324
  %v573 = vpack.c.b16 %v327, %v325
  %v574 = vpack.c.b16 %v330, %v328
  %v575 = vpack.c.b16 %v331, %v329
  %v576 = vpack.c.b16 %v334, %v332
  %v577 = vpack.c.b16 %v335, %v333
  %v578 = vpack.c.b16 %v338, %v336
  %v579 = vpack.c.b16 %v339, %v337
  %v580 = vpack.c.b16 %v342, %v340
  %v581 = vpack.c.b16 %v343, %v341
  %v582 = vpack.c.b16 %v346, %v344
  %v583 = vpack.c.b16 %v347, %v345
  %v584 = vpack.c.b16 %v350, %v348
  %v585 = vpack.c.b16 %v351, %v349
  %v586 = vpack.c.b16 %v354, %v352
  %v587 = vpack.c.b16 %v355, %v353
  %v588 = vpack.c.b16 %v358, %v356
  %v589 = vpack.c.b16 %v359, %v357
  %v590 = vpack.c.b16 %v362, %v360
  %v591 = vpack.c.b16 %v363, %v361
  %v592 = vpack.c.b16 %v366, %v364
  %v593 = vpack.c.b16 %v367, %v365
  %v594 = vpack.c.b16 %v370, %v368
  %v595 = vpack.c.b16 %v371, %v369
  %v596 = vpack.c.b16 %v374, %v372
  %v597 = vpack.c.b16 %v375, %v373
  %v598 = vpack.c.b16 %v378, %v376
  %v599 = vpack.c.b16 %v379, %v377
  %v600 = vpack.c.b16 %v382, %v380
  %v601 = vpack.c.b16 %v383, %v381
  %v602 = vpack.c.b16 %v386, %v384
  %v603 = vpack.c.b16 %v387, %v385
  %v604 = vpack.c.b16 %v390, %v388
  %v605 = vpack.c.b16 %v391, %v389
  %v606 = vpack.c.b16 %v394, %v392
  %v607 = vpack.c.b16 %v395, %v393
  %v608 = vpack.c.b16 %v398, %v396
  %v609 = vpack.c.b16 %v399, %v397
  %v610 = vpack.c.b16 %v402, %v400
  %v611 = vpack.c.b16 %v403, %v401
  %v612 = vpack.c.b16 %v406, %v404
  %v613 = vpack.c.b16 %v407, %v405
  %v614 = vpack.c.b16 %v410, %v408
  %v615 = vpack.c.b16 %v411, %v409
  %v616 = vpack.c.b16 %v414, %v412
  %v617 = vpack.c.b16 %v415, %v413
  %v618 = vpack.c.b16 %v418, %v416
  %v619 = vpack.c.b16 %v419, %v417
  %v620 = vpack.c.b16 %v422, %v420
  %v621 = vpack.c.b16 %v423, %v421
  %v622 = vpack.c.b16 %v426, %v424
  %v623 = vpack.c.b16 %v427, %v425
  %v624 = vpack.c.b16 %v430, %v428
  %v625 = vpack.c.b16 %v431, %v429
  %v626 = vpack.c.b16 %v434, %v432
  %v627 = vpack.c.b16 %v435, %v433
  %v628 = vpack.c.b16 %v438, %v436
  %v629 = vpack.c.b16 %v439, %v437
  %v630 = vpack.c.b16 %v442, %v440
  %v631 = vpack.c.b16 %v443, %v441
  %v632 = vpack.c.b16 %v446, %v444
  %v633 = vpack.c.b16 %v447, %v445
  %v634 = vpack.c.b16 %v450, %v448
  %v635 = vpack.c.b16 %v451, %v449
  %v636 = vpack.c.b16 %v454, %v452
  %v637 = vpack.c.b16 %v455, %v453
  %v638 = vpack.c.b16 %v458, %v456
  %v639 = vpack.c.b16 %v459, %v457
  %v640 = vpack.c.b16 %v462, %v460
  %v641 = vpack.c.b16 %v463, %v461
  %v642 = vpack.c.b16 %v466, %v464
  %v643 = vpack.c.b16 %v467, %v465
  %v644 = vpack.c.b16 %v470, %v468
  %v645 = vpack.c.b16 %v471, %v469
  %v646 = vpack.c.b16 %v474, %v472
  %v647 = vpack.c.b16 %v475, %v473
  %v648 = vpack.c.b16 %v478, %v476
  %v649 = vpack.c.b16 %v479, %v477
  %v650 = vpack.c.b16 %v482, %v480
  %v651 = vpack.c.b16 %v483, %v481
  %v652 = vpack.c.b16 %v486, %v484
  %v653 = vpack.c.b16 %v487, %v485
  %v654 = vpack.c.b16 %v490, %v488
  %v655 = vpack.c.b16 %v491, %v489
  %v656 = vpack.c.b16 %v494, %v492
  %v657 = vpack.c.b16 %v495, %v493
  %v658 = vpack.c.b16 %v498, %v496
  %v659 = vpack.c.b16 %v499, %v497
  %v660 = vpack.c.b16 %v502, %v500
  %v661 = vpack.c.b16 %v503, %v501
  %v662 = vpack.c.b16 %v506, %v504
  %v663 = vpack.c.b16 %v507, %v505
  %v664 = vpack.c.b16 %v510, %v508
  %v665 = vpack.c.b16 %v511, %v509
  %v666 = vpack.c.b16 %v514, %v512
  %v667 = vpack.c.b16 %v515, %v513
  %v668 = vpack.c.b16 %v518, %v516
  %v669 = vpack.c.b16 %v519, %v517
  %v670 = vpack.c.b16 %v522, %v520
  %v671 = vpack.c.b16 %v523, %v521
  %v672 = vpack.c.b16 %v526, %v524
  %v673 = vpack.c.b16 %v527, %v525
  %v674 = vpack.c.b16 %v530, %v528
  %v675 = vpack.c.b16 %v531, %v529
  %v676 = vpack.c.b16 %v534, %v532
  %v677 = vpack.c.b16 %v535, %v533
  %v678 = vpack.c.b16 %v538, %v536
  %v679 = vpack.c.b16 %v539, %v537
  %v680 = vpack.c.b16 %v542, %v540
  %v681 = vpack.c.b16 %v543, %v541
  %v682 = vpack.c.b16 %v546, %v544
  %v683 = vpack.c.b16 %v547, %v545
  %v684 = vpack.c.b16 %v550, %v548
  %v685 = vpack.c.b16 %v551, %v549
  %v686 = vpack.c.b16 %v554, %v552
  %v687 = vpack.c.b16 %v555, %v553
  %v688 = vpack.c.b16 %v558, %v556
  %v689 = vpack.c.b16 %v559, %v557
  %v690 = vpack.c.b16 %v562, %v560
  %v691 = vpack.c.b16 %v563, %v561
  %v775 = vunpack.c.l.b16 %v161
  %v776 = vunpack.c.l.b16 %v162
  %v777 = vunpack.c.l.b16 %v163
  %v778 = vunpack.c.l.b16 %v164
  %v779 = vunpack.c.l.b16 %v165
  %v780 = vunpack.c.l.b16 %v166
  %v781 = vunpack.c.l.b16 %v167
  %v782 = vunpack.c.l.b16 %v168
  %v783 = vunpack.c.l.b16 %v169
  %v784 = vunpack.c.l.b16 %v170
  %v785 = vunpack.c.l.b16 %v171
  %v786 = vunpack.c.l.b16 %v172
  %v787 = vunpack.c.l.b16 %v173
  %v788 = vunpack.c.l.b16 %v174
  %v789 = vunpack.c.l.b16 %v175
  %v790 = vunpack.c.l.b16 %v176
  %v791 = vunpack.c.l.b16 %v177
  %v792 = vunpack.c.l.b16 %v178
  %v793 = vunpack.c.l.b16 %v179
  %v794 = vpack.c.b16 %v776, %v775
  %v795 = vpack.c.b16 %v778, %v777
  %v796 = vpack.c.b16 %v780, %v779
  %v797 = vpack.c.b16 %v782, %v781
  %v798 = vpack.c.b16 %v784, %v783
  %v799 = vpack.c.b16 %v786, %v785
  %v800 = vpack.c.b16 %v788, %v787
  %v801 = vpack.c.b16 %v790, %v789
  %v802 = vpack.c.b16 %v792, %v791
  %v803 = vpack.c.b16 %v793, %v793
  %vm813 = vcmask 179200
  %v815 = vsel %vm813, %v565, 0
  %v818 = vsel %vm813, %v567, 0
  %v821 = vsel %vm813, %v569, 0
  %v824 = vsel %vm813, %v571, 0
  %v827 = vsel %vm813, %v573, 0
  %v830 = vsel %vm813, %v575, 0
  %v833 = vsel %vm813, %v577, 0
  %v836 = vsel %vm813, %v579, 0
  %v839 = vsel %vm813, %v581, 0
  %v842 = vsel %vm813, %v583, 0
  %v845 = vsel %vm813, %v585, 0
  %v848 = vsel %vm813, %v587, 0
  %v851 = vsel %vm813, %v589, 0
  %v854 = vsel %vm813, %v591, 0
  %v857 = vsel %vm813, %v593, 0
  %v860 = vsel %vm813, %v595, 0
  %v863 = vsel %vm813, %v597, 0
  %v866 = vsel %vm813, %v599, 0
  %v869 = vsel %vm813, %v601, 0
  %v872 = vsel %vm813, %v603, 0
  %v875 = vsel %vm813, %v605, 0
  %v878 = vsel %vm813, %v607, 0
  %v881 = vsel %vm813, %v609, 0
  %v884 = vsel %vm813, %v611, 0
  %v887 = vsel %vm813, %v613, 0
  %v890 = vsel %vm813, %v615, 0
  %v893 = vsel %vm813, %v617, 0
  %v896 = vsel %vm813, %v619, 0
  %v899 = vsel %vm813, %v621, 0
  %v902 = vsel %vm813, %v623, 0
  %v905 = vsel %vm813, %v625, 0
  %v908 = vsel %vm813, %v627, 0
  %v911 = vsel %vm813, %v629, 0
  %v914 = vsel %vm813, %v631, 0
  %v917 = vsel %vm813, %v633, 0
  %v920 = vsel %vm813, %v635, 0
  %v923 = vsel %vm813, %v637, 0
  %v926 = vsel %vm813, %v639, 0
  %v929 = vsel %vm813, %v641, 0
  %v932 = vsel %vm813, %v643, 0
  %v935 = vsel %vm813, %v645, 0
  %v938 = vsel %vm813, %v647, 0
  %v941 = vsel %vm813, %v649, 0
  %v944 = vsel %vm813, %v651, 0
  %v947 = vsel %vm813, %v653, 0
  %v950 = vsel %vm813, %v655, 0
  %v953 = vsel %vm813, %v657, 0
  %v956 = vsel %vm813, %v659, 0
  %v959 = vsel %vm813, %v661, 0
  %v962 = vsel %vm813, %v663, 0
  %v965 = vsel %vm813, %v665, 0
  %v968 = vsel %vm813, %v667, 0
  %v971 = vsel %vm813, %v669, 0
  %v974 = vsel %vm813, %v671, 0
  %v977 = vsel %vm813, %v673, 0
  %v980 = vsel %vm813, %v675, 0
  %v983 = vsel %vm813, %v677, 0
  %v986 = vsel %vm813, %v679, 0
  %v989 = vsel %vm813, %v681, 0
  %v992 = vsel %vm813, %v683, 0
  %v995 = vsel %vm813, %v685, 0
  %v998 = vsel %vm813, %v687, 0
  %v1001 = vsel %vm813, %v689, 0
  %v1004 = vsel %vm813, %v691, 0
  %vm1006 = vcmask 1042432
  %v1008 = vsel %vm1006, %v803, 0
  %1010 = vmatpush.bf16.msra.mxu0 %v801
  %1011 = vmatpush.bf16.msra.mxu0 %v800
  %1012 = vmatpush.bf16.msra.mxu0 %v799
  %1013 = vmatpush.bf16.msra.mxu0 %v798
  %1014 = vmatpush.bf16.msra.mxu0 %v797
  %1015 = vmatpush.bf16.msra.mxu0 %v796
  %1016 = vmatpush.bf16.msra.mxu0 %v795
  %1017 = vmatpush.bf16.msra.mxu0 %v794
  %1018 = vmatmul.bf16.gmra.mxu0 %v564
  %v1019 = vpop.f32.mrf.mxu0
  %v1020 = vadd.f32 0.0, %v1019
  %v1021 = vpop.f32.mrf.mxu0
  %v1022 = vadd.f32 0.0, %v1021
  %1023 = vmatmul.bf16.gmra.mxu0 %v566
  %v1024 = vpop.f32.mrf.mxu0
  %v1025 = vadd.f32 0.0, %v1024
  %v1026 = vpop.f32.mrf.mxu0
  %v1027 = vadd.f32 0.0, %v1026
  %1028 = vmatmul.bf16.gmra.mxu0 %v568
  %v1029 = vpop.f32.mrf.mxu0
  %v1030 = vadd.f32 0.0, %v1029
  %v1031 = vpop.f32.mrf.mxu0
  %v1032 = vadd.f32 0.0, %v1031
  %1033 = vmatmul.bf16.gmra.mxu0 %v570
  %v1034 = vpop.f32.mrf.mxu0
  %v1035 = vadd.f32 0.0, %v1034
  %v1036 = vpop.f32.mrf.mxu0
  %v1037 = vadd.f32 0.0, %v1036
  %1038 = vmatmul.bf16.gmra.mxu0 %v572
  %v1039 = vpop.f32.mrf.mxu0
  %v1040 = vadd.f32 0.0, %v1039
  %v1041 = vpop.f32.mrf.mxu0
  %v1042 = vadd.f32 0.0, %v1041
  %1043 = vmatmul.bf16.gmra.mxu0 %v574
  %v1044 = vpop.f32.mrf.mxu0
  %v1045 = vadd.f32 0.0, %v1044
  %v1046 = vpop.f32.mrf.mxu0
  %v1047 = vadd.f32 0.0, %v1046
  %1048 = vmatmul.bf16.gmra.mxu0 %v576
  %v1049 = vpop.f32.mrf.mxu0
  %v1050 = vadd.f32 0.0, %v1049
  %v1051 = vpop.f32.mrf.mxu0
  %v1052 = vadd.f32 0.0, %v1051
  %1053 = vmatmul.bf16.gmra.mxu0 %v578
  %v1054 = vpop.f32.mrf.mxu0
  %v1055 = vadd.f32 0.0, %v1054
  %v1056 = vpop.f32.mrf.mxu0
  %v1057 = vadd.f32 0.0, %v1056
  %1058 = vmatmul.bf16.gmra.mxu0 %v580
  %v1059 = vpop.f32.mrf.mxu0
  %v1060 = vadd.f32 0.0, %v1059
  %v1061 = vpop.f32.mrf.mxu0
  %v1062 = vadd.f32 0.0, %v1061
  %1063 = vmatmul.bf16.gmra.mxu0 %v582
  %v1064 = vpop.f32.mrf.mxu0
  %v1065 = vadd.f32 0.0, %v1064
  %v1066 = vpop.f32.mrf.mxu0
  %v1067 = vadd.f32 0.0, %v1066
  %1068 = vmatmul.bf16.gmra.mxu0 %v584
  %v1069 = vpop.f32.mrf.mxu0
  %v1070 = vadd.f32 0.0, %v1069
  %v1071 = vpop.f32.mrf.mxu0
  %v1072 = vadd.f32 0.0, %v1071
  %1073 = vmatmul.bf16.gmra.mxu0 %v586
  %v1074 = vpop.f32.mrf.mxu0
  %v1075 = vadd.f32 0.0, %v1074
  %v1076 = vpop.f32.mrf.mxu0
  %v1077 = vadd.f32 0.0, %v1076
  %1078 = vmatmul.bf16.gmra.mxu0 %v588
  %v1079 = vpop.f32.mrf.mxu0
  %v1080 = vadd.f32 0.0, %v1079
  %v1081 = vpop.f32.mrf.mxu0
  %v1082 = vadd.f32 0.0, %v1081
  %1083 = vmatmul.bf16.gmra.mxu0 %v590
  %v1084 = vpop.f32.mrf.mxu0
  %v1085 = vadd.f32 0.0, %v1084
  %v1086 = vpop.f32.mrf.mxu0
  %v1087 = vadd.f32 0.0, %v1086
  %1088 = vmatmul.bf16.gmra.mxu0 %v592
  %v1089 = vpop.f32.mrf.mxu0
  %v1090 = vadd.f32 0.0, %v1089
  %v1091 = vpop.f32.mrf.mxu0
  %v1092 = vadd.f32 0.0, %v1091
  %1093 = vmatmul.bf16.gmra.mxu0 %v594
  %v1094 = vpop.f32.mrf.mxu0
  %v1095 = vadd.f32 0.0, %v1094
  %v1096 = vpop.f32.mrf.mxu0
  %v1097 = vadd.f32 0.0, %v1096
  %1098 = vmatmul.bf16.gmra.mxu0 %v596
  %v1099 = vpop.f32.mrf.mxu0
  %v1100 = vadd.f32 0.0, %v1099
  %v1101 = vpop.f32.mrf.mxu0
  %v1102 = vadd.f32 0.0, %v1101
  %1103 = vmatmul.bf16.gmra.mxu0 %v598
  %v1104 = vpop.f32.mrf.mxu0
  %v1105 = vadd.f32 0.0, %v1104
  %v1106 = vpop.f32.mrf.mxu0
  %v1107 = vadd.f32 0.0, %v1106
  %1108 = vmatmul.bf16.gmra.mxu0 %v600
  %v1109 = vpop.f32.mrf.mxu0
  %v1110 = vadd.f32 0.0, %v1109
  %v1111 = vpop.f32.mrf.mxu0
  %v1112 = vadd.f32 0.0, %v1111
  %1113 = vmatmul.bf16.gmra.mxu0 %v602
  %v1114 = vpop.f32.mrf.mxu0
  %v1115 = vadd.f32 0.0, %v1114
  %v1116 = vpop.f32.mrf.mxu0
  %v1117 = vadd.f32 0.0, %v1116
  %1118 = vmatmul.bf16.gmra.mxu0 %v604
  %v1119 = vpop.f32.mrf.mxu0
  %v1120 = vadd.f32 0.0, %v1119
  %v1121 = vpop.f32.mrf.mxu0
  %v1122 = vadd.f32 0.0, %v1121
  %1123 = vmatmul.bf16.gmra.mxu0 %v606
  %v1124 = vpop.f32.mrf.mxu0
  %v1125 = vadd.f32 0.0, %v1124
  %v1126 = vpop.f32.mrf.mxu0
  %v1127 = vadd.f32 0.0, %v1126
  %1128 = vmatmul.bf16.gmra.mxu0 %v608
  %v1129 = vpop.f32.mrf.mxu0
  %v1130 = vadd.f32 0.0, %v1129
  %v1131 = vpop.f32.mrf.mxu0
  %v1132 = vadd.f32 0.0, %v1131
  %1133 = vmatmul.bf16.gmra.mxu0 %v610
  %v1134 = vpop.f32.mrf.mxu0
  %v1135 = vadd.f32 0.0, %v1134
  %v1136 = vpop.f32.mrf.mxu0
  %v1137 = vadd.f32 0.0, %v1136
  %1138 = vmatmul.bf16.gmra.mxu0 %v612
  %v1139 = vpop.f32.mrf.mxu0
  %v1140 = vadd.f32 0.0, %v1139
  %v1141 = vpop.f32.mrf.mxu0
  %v1142 = vadd.f32 0.0, %v1141
  %1143 = vmatmul.bf16.gmra.mxu0 %v614
  %v1144 = vpop.f32.mrf.mxu0
  %v1145 = vadd.f32 0.0, %v1144
  %v1146 = vpop.f32.mrf.mxu0
  %v1147 = vadd.f32 0.0, %v1146
  %1148 = vmatmul.bf16.gmra.mxu0 %v616
  %v1149 = vpop.f32.mrf.mxu0
  %v1150 = vadd.f32 0.0, %v1149
  %v1151 = vpop.f32.mrf.mxu0
  %v1152 = vadd.f32 0.0, %v1151
  %1153 = vmatmul.bf16.gmra.mxu0 %v618
  %v1154 = vpop.f32.mrf.mxu0
  %v1155 = vadd.f32 0.0, %v1154
  %v1156 = vpop.f32.mrf.mxu0
  %v1157 = vadd.f32 0.0, %v1156
  %1158 = vmatmul.bf16.gmra.mxu0 %v620
  %v1159 = vpop.f32.mrf.mxu0
  %v1160 = vadd.f32 0.0, %v1159
  %v1161 = vpop.f32.mrf.mxu0
  %v1162 = vadd.f32 0.0, %v1161
  %1163 = vmatmul.bf16.gmra.mxu0 %v622
  %v1164 = vpop.f32.mrf.mxu0
  %v1165 = vadd.f32 0.0, %v1164
  %v1166 = vpop.f32.mrf.mxu0
  %v1167 = vadd.f32 0.0, %v1166
  %1168 = vmatmul.bf16.gmra.mxu0 %v624
  %v1169 = vpop.f32.mrf.mxu0
  %v1170 = vadd.f32 0.0, %v1169
  %v1171 = vpop.f32.mrf.mxu0
  %v1172 = vadd.f32 0.0, %v1171
  %1173 = vmatmul.bf16.gmra.mxu0 %v626
  %v1174 = vpop.f32.mrf.mxu0
  %v1175 = vadd.f32 0.0, %v1174
  %v1176 = vpop.f32.mrf.mxu0
  %v1177 = vadd.f32 0.0, %v1176
  %1178 = vmatmul.bf16.gmra.mxu0 %v628
  %v1179 = vpop.f32.mrf.mxu0
  %v1180 = vadd.f32 0.0, %v1179
  %v1181 = vpop.f32.mrf.mxu0
  %v1182 = vadd.f32 0.0, %v1181
  %1183 = vmatmul.bf16.gmra.mxu0 %v630
  %v1184 = vpop.f32.mrf.mxu0
  %v1185 = vadd.f32 0.0, %v1184
  %v1186 = vpop.f32.mrf.mxu0
  %v1187 = vadd.f32 0.0, %v1186
  %1188 = vmatmul.bf16.gmra.mxu0 %v632
  %v1189 = vpop.f32.mrf.mxu0
  %v1190 = vadd.f32 0.0, %v1189
  %v1191 = vpop.f32.mrf.mxu0
  %v1192 = vadd.f32 0.0, %v1191
  %1193 = vmatmul.bf16.gmra.mxu0 %v634
  %v1194 = vpop.f32.mrf.mxu0
  %v1195 = vadd.f32 0.0, %v1194
  %v1196 = vpop.f32.mrf.mxu0
  %v1197 = vadd.f32 0.0, %v1196
  %1198 = vmatmul.bf16.gmra.mxu0 %v636
  %v1199 = vpop.f32.mrf.mxu0
  %v1200 = vadd.f32 0.0, %v1199
  %v1201 = vpop.f32.mrf.mxu0
  %v1202 = vadd.f32 0.0, %v1201
  %1203 = vmatmul.bf16.gmra.mxu0 %v638
  %v1204 = vpop.f32.mrf.mxu0
  %v1205 = vadd.f32 0.0, %v1204
  %v1206 = vpop.f32.mrf.mxu0
  %v1207 = vadd.f32 0.0, %v1206
  %1208 = vmatmul.bf16.gmra.mxu0 %v640
  %v1209 = vpop.f32.mrf.mxu0
  %v1210 = vadd.f32 0.0, %v1209
  %v1211 = vpop.f32.mrf.mxu0
  %v1212 = vadd.f32 0.0, %v1211
  %1213 = vmatmul.bf16.gmra.mxu0 %v642
  %v1214 = vpop.f32.mrf.mxu0
  %v1215 = vadd.f32 0.0, %v1214
  %v1216 = vpop.f32.mrf.mxu0
  %v1217 = vadd.f32 0.0, %v1216
  %1218 = vmatmul.bf16.gmra.mxu0 %v644
  %v1219 = vpop.f32.mrf.mxu0
  %v1220 = vadd.f32 0.0, %v1219
  %v1221 = vpop.f32.mrf.mxu0
  %v1222 = vadd.f32 0.0, %v1221
  %1223 = vmatmul.bf16.gmra.mxu0 %v646
  %v1224 = vpop.f32.mrf.mxu0
  %v1225 = vadd.f32 0.0, %v1224
  %v1226 = vpop.f32.mrf.mxu0
  %v1227 = vadd.f32 0.0, %v1226
  %1228 = vmatmul.bf16.gmra.mxu0 %v648
  %v1229 = vpop.f32.mrf.mxu0
  %v1230 = vadd.f32 0.0, %v1229
  %v1231 = vpop.f32.mrf.mxu0
  %v1232 = vadd.f32 0.0, %v1231
  %1233 = vmatmul.bf16.gmra.mxu0 %v650
  %v1234 = vpop.f32.mrf.mxu0
  %v1235 = vadd.f32 0.0, %v1234
  %v1236 = vpop.f32.mrf.mxu0
  %v1237 = vadd.f32 0.0, %v1236
  %1238 = vmatmul.bf16.gmra.mxu0 %v652
  %v1239 = vpop.f32.mrf.mxu0
  %v1240 = vadd.f32 0.0, %v1239
  %v1241 = vpop.f32.mrf.mxu0
  %v1242 = vadd.f32 0.0, %v1241
  %1243 = vmatmul.bf16.gmra.mxu0 %v654
  %v1244 = vpop.f32.mrf.mxu0
  %v1245 = vadd.f32 0.0, %v1244
  %v1246 = vpop.f32.mrf.mxu0
  %v1247 = vadd.f32 0.0, %v1246
  %1248 = vmatmul.bf16.gmra.mxu0 %v656
  %v1249 = vpop.f32.mrf.mxu0
  %v1250 = vadd.f32 0.0, %v1249
  %v1251 = vpop.f32.mrf.mxu0
  %v1252 = vadd.f32 0.0, %v1251
  %1253 = vmatmul.bf16.gmra.mxu0 %v658
  %v1254 = vpop.f32.mrf.mxu0
  %v1255 = vadd.f32 0.0, %v1254
  %v1256 = vpop.f32.mrf.mxu0
  %v1257 = vadd.f32 0.0, %v1256
  %1258 = vmatmul.bf16.gmra.mxu0 %v660
  %v1259 = vpop.f32.mrf.mxu0
  %v1260 = vadd.f32 0.0, %v1259
  %v1261 = vpop.f32.mrf.mxu0
  %v1262 = vadd.f32 0.0, %v1261
  %1263 = vmatmul.bf16.gmra.mxu0 %v662
  %v1264 = vpop.f32.mrf.mxu0
  %v1265 = vadd.f32 0.0, %v1264
  %v1266 = vpop.f32.mrf.mxu0
  %v1267 = vadd.f32 0.0, %v1266
  %1268 = vmatmul.bf16.gmra.mxu0 %v664
  %v1269 = vpop.f32.mrf.mxu0
  %v1270 = vadd.f32 0.0, %v1269
  %v1271 = vpop.f32.mrf.mxu0
  %v1272 = vadd.f32 0.0, %v1271
  %1273 = vmatmul.bf16.gmra.mxu0 %v666
  %v1274 = vpop.f32.mrf.mxu0
  %v1275 = vadd.f32 0.0, %v1274
  %v1276 = vpop.f32.mrf.mxu0
  %v1277 = vadd.f32 0.0, %v1276
  %1278 = vmatmul.bf16.gmra.mxu0 %v668
  %v1279 = vpop.f32.mrf.mxu0
  %v1280 = vadd.f32 0.0, %v1279
  %v1281 = vpop.f32.mrf.mxu0
  %v1282 = vadd.f32 0.0, %v1281
  %1283 = vmatmul.bf16.gmra.mxu0 %v670
  %v1284 = vpop.f32.mrf.mxu0
  %v1285 = vadd.f32 0.0, %v1284
  %v1286 = vpop.f32.mrf.mxu0
  %v1287 = vadd.f32 0.0, %v1286
  %1288 = vmatmul.bf16.gmra.mxu0 %v672
  %v1289 = vpop.f32.mrf.mxu0
  %v1290 = vadd.f32 0.0, %v1289
  %v1291 = vpop.f32.mrf.mxu0
  %v1292 = vadd.f32 0.0, %v1291
  %1293 = vmatmul.bf16.gmra.mxu0 %v674
  %v1294 = vpop.f32.mrf.mxu0
  %v1295 = vadd.f32 0.0, %v1294
  %v1296 = vpop.f32.mrf.mxu0
  %v1297 = vadd.f32 0.0, %v1296
  %1298 = vmatmul.bf16.gmra.mxu0 %v676
  %v1299 = vpop.f32.mrf.mxu0
  %v1300 = vadd.f32 0.0, %v1299
  %v1301 = vpop.f32.mrf.mxu0
  %v1302 = vadd.f32 0.0, %v1301
  %1303 = vmatmul.bf16.gmra.mxu0 %v678
  %v1304 = vpop.f32.mrf.mxu0
  %v1305 = vadd.f32 0.0, %v1304
  %v1306 = vpop.f32.mrf.mxu0
  %v1307 = vadd.f32 0.0, %v1306
  %1308 = vmatmul.bf16.gmra.mxu0 %v680
  %v1309 = vpop.f32.mrf.mxu0
  %v1310 = vadd.f32 0.0, %v1309
  %v1311 = vpop.f32.mrf.mxu0
  %v1312 = vadd.f32 0.0, %v1311
  %1313 = vmatmul.bf16.gmra.mxu0 %v682
  %v1314 = vpop.f32.mrf.mxu0
  %v1315 = vadd.f32 0.0, %v1314
  %v1316 = vpop.f32.mrf.mxu0
  %v1317 = vadd.f32 0.0, %v1316
  %1318 = vmatmul.bf16.gmra.mxu0 %v684
  %v1319 = vpop.f32.mrf.mxu0
  %v1320 = vadd.f32 0.0, %v1319
  %v1321 = vpop.f32.mrf.mxu0
  %v1322 = vadd.f32 0.0, %v1321
  %1323 = vmatmul.bf16.gmra.mxu0 %v686
  %v1324 = vpop.f32.mrf.mxu0
  %v1325 = vadd.f32 0.0, %v1324
  %v1326 = vpop.f32.mrf.mxu0
  %v1327 = vadd.f32 0.0, %v1326
  %1328 = vmatmul.bf16.gmra.mxu0 %v688
  %v1329 = vpop.f32.mrf.mxu0
  %v1330 = vadd.f32 0.0, %v1329
  %v1331 = vpop.f32.mrf.mxu0
  %v1332 = vadd.f32 0.0, %v1331
  %1333 = vmatmul.bf16.gmra.mxu0 %v690
  %v1334 = vpop.f32.mrf.mxu0
  %v1335 = vadd.f32 0.0, %v1334
  %v1336 = vpop.f32.mrf.mxu0
  %v1337 = vadd.f32 0.0, %v1336
  %1338 = vdwg.mxu0
  %1339 = vmatpush.bf16.msra.mxu0 0
  %1340 = vmatpush.bf16.msra.mxu0 0
  %1341 = vmatpush.bf16.msra.mxu0 0
  %1342 = vmatpush.bf16.msra.mxu0 0
  %1343 = vmatpush.bf16.msra.mxu0 0
  %1344 = vmatpush.bf16.msra.mxu0 0
  %1345 = vmatpush.bf16.msra.mxu0 %v1008
  %1346 = vmatpush.bf16.msra.mxu0 %v802
  %1347 = vmatmul.bf16.gmra.mxu0 %v815
  %v1348 = vpop.f32.mrf.mxu0
  %v1349 = vadd.f32 %v1020, %v1348
  %v1350 = vpop.f32.mrf.mxu0
  %v1351 = vadd.f32 %v1022, %v1350
  %1352 = vmatmul.bf16.gmra.mxu0 %v818
  %v1353 = vpop.f32.mrf.mxu0
  %v1354 = vadd.f32 %v1025, %v1353
  %v1355 = vpop.f32.mrf.mxu0
  %v1356 = vadd.f32 %v1027, %v1355
  %1357 = vmatmul.bf16.gmra.mxu0 %v821
  %v1358 = vpop.f32.mrf.mxu0
  %v1359 = vadd.f32 %v1030, %v1358
  %v1360 = vpop.f32.mrf.mxu0
  %v1361 = vadd.f32 %v1032, %v1360
  %1362 = vmatmul.bf16.gmra.mxu0 %v824
  %v1363 = vpop.f32.mrf.mxu0
  %v1364 = vadd.f32 %v1035, %v1363
  %v1365 = vpop.f32.mrf.mxu0
  %v1366 = vadd.f32 %v1037, %v1365
  %1367 = vmatmul.bf16.gmra.mxu0 %v827
  %v1368 = vpop.f32.mrf.mxu0
  %v1369 = vadd.f32 %v1040, %v1368
  %v1370 = vpop.f32.mrf.mxu0
  %v1371 = vadd.f32 %v1042, %v1370
  %1372 = vmatmul.bf16.gmra.mxu0 %v830
  %v1373 = vpop.f32.mrf.mxu0
  %v1374 = vadd.f32 %v1045, %v1373
  %v1375 = vpop.f32.mrf.mxu0
  %v1376 = vadd.f32 %v1047, %v1375
  %1377 = vmatmul.bf16.gmra.mxu0 %v833
  %v1378 = vpop.f32.mrf.mxu0
  %v1379 = vadd.f32 %v1050, %v1378
  %v1380 = vpop.f32.mrf.mxu0
  %v1381 = vadd.f32 %v1052, %v1380
  %1382 = vmatmul.bf16.gmra.mxu0 %v836
  %v1383 = vpop.f32.mrf.mxu0
  %v1384 = vadd.f32 %v1055, %v1383
  %v1385 = vpop.f32.mrf.mxu0
  %v1386 = vadd.f32 %v1057, %v1385
  %1387 = vmatmul.bf16.gmra.mxu0 %v839
  %v1388 = vpop.f32.mrf.mxu0
  %v1389 = vadd.f32 %v1060, %v1388
  %v1390 = vpop.f32.mrf.mxu0
  %v1391 = vadd.f32 %v1062, %v1390
  %1392 = vmatmul.bf16.gmra.mxu0 %v842
  %v1393 = vpop.f32.mrf.mxu0
  %v1394 = vadd.f32 %v1065, %v1393
  %v1395 = vpop.f32.mrf.mxu0
  %v1396 = vadd.f32 %v1067, %v1395
  %1397 = vmatmul.bf16.gmra.mxu0 %v845
  %v1398 = vpop.f32.mrf.mxu0
  %v1399 = vadd.f32 %v1070, %v1398
  %v1400 = vpop.f32.mrf.mxu0
  %v1401 = vadd.f32 %v1072, %v1400
  %1402 = vmatmul.bf16.gmra.mxu0 %v848
  %v1403 = vpop.f32.mrf.mxu0
  %v1404 = vadd.f32 %v1075, %v1403
  %v1405 = vpop.f32.mrf.mxu0
  %v1406 = vadd.f32 %v1077, %v1405
  %1407 = vmatmul.bf16.gmra.mxu0 %v851
  %v1408 = vpop.f32.mrf.mxu0
  %v1409 = vadd.f32 %v1080, %v1408
  %v1410 = vpop.f32.mrf.mxu0
  %v1411 = vadd.f32 %v1082, %v1410
  %1412 = vmatmul.bf16.gmra.mxu0 %v854
  %v1413 = vpop.f32.mrf.mxu0
  %v1414 = vadd.f32 %v1085, %v1413
  %v1415 = vpop.f32.mrf.mxu0
  %v1416 = vadd.f32 %v1087, %v1415
  %1417 = vmatmul.bf16.gmra.mxu0 %v857
  %v1418 = vpop.f32.mrf.mxu0
  %v1419 = vadd.f32 %v1090, %v1418
  %v1420 = vpop.f32.mrf.mxu0
  %v1421 = vadd.f32 %v1092, %v1420
  %1422 = vmatmul.bf16.gmra.mxu0 %v860
  %v1423 = vpop.f32.mrf.mxu0
  %v1424 = vadd.f32 %v1095, %v1423
  %v1425 = vpop.f32.mrf.mxu0
  %v1426 = vadd.f32 %v1097, %v1425
  %1427 = vmatmul.bf16.gmra.mxu0 %v863
  %v1428 = vpop.f32.mrf.mxu0
  %v1429 = vadd.f32 %v1100, %v1428
  %v1430 = vpop.f32.mrf.mxu0
  %v1431 = vadd.f32 %v1102, %v1430
  %1432 = vmatmul.bf16.gmra.mxu0 %v866
  %v1433 = vpop.f32.mrf.mxu0
  %v1434 = vadd.f32 %v1105, %v1433
  %v1435 = vpop.f32.mrf.mxu0
  %v1436 = vadd.f32 %v1107, %v1435
  %1437 = vmatmul.bf16.gmra.mxu0 %v869
  %v1438 = vpop.f32.mrf.mxu0
  %v1439 = vadd.f32 %v1110, %v1438
  %v1440 = vpop.f32.mrf.mxu0
  %v1441 = vadd.f32 %v1112, %v1440
  %1442 = vmatmul.bf16.gmra.mxu0 %v872
  %v1443 = vpop.f32.mrf.mxu0
  %v1444 = vadd.f32 %v1115, %v1443
  %v1445 = vpop.f32.mrf.mxu0
  %v1446 = vadd.f32 %v1117, %v1445
  %1447 = vmatmul.bf16.gmra.mxu0 %v875
  %v1448 = vpop.f32.mrf.mxu0
  %v1449 = vadd.f32 %v1120, %v1448
  %v1450 = vpop.f32.mrf.mxu0
  %v1451 = vadd.f32 %v1122, %v1450
  %1452 = vmatmul.bf16.gmra.mxu0 %v878
  %v1453 = vpop.f32.mrf.mxu0
  %v1454 = vadd.f32 %v1125, %v1453
  %v1455 = vpop.f32.mrf.mxu0
  %v1456 = vadd.f32 %v1127, %v1455
  %1457 = vmatmul.bf16.gmra.mxu0 %v881
  %v1458 = vpop.f32.mrf.mxu0
  %v1459 = vadd.f32 %v1130, %v1458
  %v1460 = vpop.f32.mrf.mxu0
  %v1461 = vadd.f32 %v1132, %v1460
  %1462 = vmatmul.bf16.gmra.mxu0 %v884
  %v1463 = vpop.f32.mrf.mxu0
  %v1464 = vadd.f32 %v1135, %v1463
  %v1465 = vpop.f32.mrf.mxu0
  %v1466 = vadd.f32 %v1137, %v1465
  %1467 = vmatmul.bf16.gmra.mxu0 %v887
  %v1468 = vpop.f32.mrf.mxu0
  %v1469 = vadd.f32 %v1140, %v1468
  %v1470 = vpop.f32.mrf.mxu0
  %v1471 = vadd.f32 %v1142, %v1470
  %1472 = vmatmul.bf16.gmra.mxu0 %v890
  %v1473 = vpop.f32.mrf.mxu0
  %v1474 = vadd.f32 %v1145, %v1473
  %v1475 = vpop.f32.mrf.mxu0
  %v1476 = vadd.f32 %v1147, %v1475
  %1477 = vmatmul.bf16.gmra.mxu0 %v893
  %v1478 = vpop.f32.mrf.mxu0
  %v1479 = vadd.f32 %v1150, %v1478
  %v1480 = vpop.f32.mrf.mxu0
  %v1481 = vadd.f32 %v1152, %v1480
  %1482 = vmatmul.bf16.gmra.mxu0 %v896
  %v1483 = vpop.f32.mrf.mxu0
  %v1484 = vadd.f32 %v1155, %v1483
  %v1485 = vpop.f32.mrf.mxu0
  %v1486 = vadd.f32 %v1157, %v1485
  %1487 = vmatmul.bf16.gmra.mxu0 %v899
  %v1488 = vpop.f32.mrf.mxu0
  %v1489 = vadd.f32 %v1160, %v1488
  %v1490 = vpop.f32.mrf.mxu0
  %v1491 = vadd.f32 %v1162, %v1490
  %1492 = vmatmul.bf16.gmra.mxu0 %v902
  %v1493 = vpop.f32.mrf.mxu0
  %v1494 = vadd.f32 %v1165, %v1493
  %v1495 = vpop.f32.mrf.mxu0
  %v1496 = vadd.f32 %v1167, %v1495
  %1497 = vmatmul.bf16.gmra.mxu0 %v905
  %v1498 = vpop.f32.mrf.mxu0
  %v1499 = vadd.f32 %v1170, %v1498
  %v1500 = vpop.f32.mrf.mxu0
  %v1501 = vadd.f32 %v1172, %v1500
  %1502 = vmatmul.bf16.gmra.mxu0 %v908
  %v1503 = vpop.f32.mrf.mxu0
  %v1504 = vadd.f32 %v1175, %v1503
  %v1505 = vpop.f32.mrf.mxu0
  %v1506 = vadd.f32 %v1177, %v1505
  %1507 = vmatmul.bf16.gmra.mxu0 %v911
  %v1508 = vpop.f32.mrf.mxu0
  %v1509 = vadd.f32 %v1180, %v1508
  %v1510 = vpop.f32.mrf.mxu0
  %v1511 = vadd.f32 %v1182, %v1510
  %1512 = vmatmul.bf16.gmra.mxu0 %v914
  %v1513 = vpop.f32.mrf.mxu0
  %v1514 = vadd.f32 %v1185, %v1513
  %v1515 = vpop.f32.mrf.mxu0
  %v1516 = vadd.f32 %v1187, %v1515
  %1517 = vmatmul.bf16.gmra.mxu0 %v917
  %v1518 = vpop.f32.mrf.mxu0
  %v1519 = vadd.f32 %v1190, %v1518
  %v1520 = vpop.f32.mrf.mxu0
  %v1521 = vadd.f32 %v1192, %v1520
  %1522 = vmatmul.bf16.gmra.mxu0 %v920
  %v1523 = vpop.f32.mrf.mxu0
  %v1524 = vadd.f32 %v1195, %v1523
  %v1525 = vpop.f32.mrf.mxu0
  %v1526 = vadd.f32 %v1197, %v1525
  %1527 = vmatmul.bf16.gmra.mxu0 %v923
  %v1528 = vpop.f32.mrf.mxu0
  %v1529 = vadd.f32 %v1200, %v1528
  %v1530 = vpop.f32.mrf.mxu0
  %v1531 = vadd.f32 %v1202, %v1530
  %1532 = vmatmul.bf16.gmra.mxu0 %v926
  %v1533 = vpop.f32.mrf.mxu0
  %v1534 = vadd.f32 %v1205, %v1533
  %v1535 = vpop.f32.mrf.mxu0
  %v1536 = vadd.f32 %v1207, %v1535
  %1537 = vmatmul.bf16.gmra.mxu0 %v929
  %v1538 = vpop.f32.mrf.mxu0
  %v1539 = vadd.f32 %v1210, %v1538
  %v1540 = vpop.f32.mrf.mxu0
  %v1541 = vadd.f32 %v1212, %v1540
  %1542 = vmatmul.bf16.gmra.mxu0 %v932
  %v1543 = vpop.f32.mrf.mxu0
  %v1544 = vadd.f32 %v1215, %v1543
  %v1545 = vpop.f32.mrf.mxu0
  %v1546 = vadd.f32 %v1217, %v1545
  %1547 = vmatmul.bf16.gmra.mxu0 %v935
  %v1548 = vpop.f32.mrf.mxu0
  %v1549 = vadd.f32 %v1220, %v1548
  %v1550 = vpop.f32.mrf.mxu0
  %v1551 = vadd.f32 %v1222, %v1550
  %1552 = vmatmul.bf16.gmra.mxu0 %v938
  %v1553 = vpop.f32.mrf.mxu0
  %v1554 = vadd.f32 %v1225, %v1553
  %v1555 = vpop.f32.mrf.mxu0
  %v1556 = vadd.f32 %v1227, %v1555
  %1557 = vmatmul.bf16.gmra.mxu0 %v941
  %v1558 = vpop.f32.mrf.mxu0
  %v1559 = vadd.f32 %v1230, %v1558
  %v1560 = vpop.f32.mrf.mxu0
  %v1561 = vadd.f32 %v1232, %v1560
  %1562 = vmatmul.bf16.gmra.mxu0 %v944
  %v1563 = vpop.f32.mrf.mxu0
  %v1564 = vadd.f32 %v1235, %v1563
  %v1565 = vpop.f32.mrf.mxu0
  %v1566 = vadd.f32 %v1237, %v1565
  %1567 = vmatmul.bf16.gmra.mxu0 %v947
  %v1568 = vpop.f32.mrf.mxu0
  %v1569 = vadd.f32 %v1240, %v1568
  %v1570 = vpop.f32.mrf.mxu0
  %v1571 = vadd.f32 %v1242, %v1570
  %1572 = vmatmul.bf16.gmra.mxu0 %v950
  %v1573 = vpop.f32.mrf.mxu0
  %v1574 = vadd.f32 %v1245, %v1573
  %v1575 = vpop.f32.mrf.mxu0
  %v1576 = vadd.f32 %v1247, %v1575
  %1577 = vmatmul.bf16.gmra.mxu0 %v953
  %v1578 = vpop.f32.mrf.mxu0
  %v1579 = vadd.f32 %v1250, %v1578
  %v1580 = vpop.f32.mrf.mxu0
  %v1581 = vadd.f32 %v1252, %v1580
  %1582 = vmatmul.bf16.gmra.mxu0 %v956
  %v1583 = vpop.f32.mrf.mxu0
  %v1584 = vadd.f32 %v1255, %v1583
  %v1585 = vpop.f32.mrf.mxu0
  %v1586 = vadd.f32 %v1257, %v1585
  %1587 = vmatmul.bf16.gmra.mxu0 %v959
  %v1588 = vpop.f32.mrf.mxu0
  %v1589 = vadd.f32 %v1260, %v1588
  %v1590 = vpop.f32.mrf.mxu0
  %v1591 = vadd.f32 %v1262, %v1590
  %1592 = vmatmul.bf16.gmra.mxu0 %v962
  %v1593 = vpop.f32.mrf.mxu0
  %v1594 = vadd.f32 %v1265, %v1593
  %v1595 = vpop.f32.mrf.mxu0
  %v1596 = vadd.f32 %v1267, %v1595
  %1597 = vmatmul.bf16.gmra.mxu0 %v965
  %v1598 = vpop.f32.mrf.mxu0
  %v1599 = vadd.f32 %v1270, %v1598
  %v1600 = vpop.f32.mrf.mxu0
  %v1601 = vadd.f32 %v1272, %v1600
  %1602 = vmatmul.bf16.gmra.mxu0 %v968
  %v1603 = vpop.f32.mrf.mxu0
  %v1604 = vadd.f32 %v1275, %v1603
  %v1605 = vpop.f32.mrf.mxu0
  %v1606 = vadd.f32 %v1277, %v1605
  %1607 = vmatmul.bf16.gmra.mxu0 %v971
  %v1608 = vpop.f32.mrf.mxu0
  %v1609 = vadd.f32 %v1280, %v1608
  %v1610 = vpop.f32.mrf.mxu0
  %v1611 = vadd.f32 %v1282, %v1610
  %1612 = vmatmul.bf16.gmra.mxu0 %v974
  %v1613 = vpop.f32.mrf.mxu0
  %v1614 = vadd.f32 %v1285, %v1613
  %v1615 = vpop.f32.mrf.mxu0
  %v1616 = vadd.f32 %v1287, %v1615
  %1617 = vmatmul.bf16.gmra.mxu0 %v977
  %v1618 = vpop.f32.mrf.mxu0
  %v1619 = vadd.f32 %v1290, %v1618
  %v1620 = vpop.f32.mrf.mxu0
  %v1621 = vadd.f32 %v1292, %v1620
  %1622 = vmatmul.bf16.gmra.mxu0 %v980
  %v1623 = vpop.f32.mrf.mxu0
  %v1624 = vadd.f32 %v1295, %v1623
  %v1625 = vpop.f32.mrf.mxu0
  %v1626 = vadd.f32 %v1297, %v1625
  %1627 = vmatmul.bf16.gmra.mxu0 %v983
  %v1628 = vpop.f32.mrf.mxu0
  %v1629 = vadd.f32 %v1300, %v1628
  %v1630 = vpop.f32.mrf.mxu0
  %v1631 = vadd.f32 %v1302, %v1630
  %1632 = vmatmul.bf16.gmra.mxu0 %v986
  %v1633 = vpop.f32.mrf.mxu0
  %v1634 = vadd.f32 %v1305, %v1633
  %v1635 = vpop.f32.mrf.mxu0
  %v1636 = vadd.f32 %v1307, %v1635
  %1637 = vmatmul.bf16.gmra.mxu0 %v989
  %v1638 = vpop.f32.mrf.mxu0
  %v1639 = vadd.f32 %v1310, %v1638
  %v1640 = vpop.f32.mrf.mxu0
  %v1641 = vadd.f32 %v1312, %v1640
  %1642 = vmatmul.bf16.gmra.mxu0 %v992
  %v1643 = vpop.f32.mrf.mxu0
  %v1644 = vadd.f32 %v1315, %v1643
  %v1645 = vpop.f32.mrf.mxu0
  %v1646 = vadd.f32 %v1317, %v1645
  %1647 = vmatmul.bf16.gmra.mxu0 %v995
  %v1648 = vpop.f32.mrf.mxu0
  %v1649 = vadd.f32 %v1320, %v1648
  %v1650 = vpop.f32.mrf.mxu0
  %v1651 = vadd.f32 %v1322, %v1650
  %1652 = vmatmul.bf16.gmra.mxu0 %v998
  %v1653 = vpop.f32.mrf.mxu0
  %v1654 = vadd.f32 %v1325, %v1653
  %v1655 = vpop.f32.mrf.mxu0
  %v1656 = vadd.f32 %v1327, %v1655
  %1657 = vmatmul.bf16.gmra.mxu0 %v1001
  %v1658 = vpop.f32.mrf.mxu0
  %v1659 = vadd.f32 %v1330, %v1658
  %v1660 = vpop.f32.mrf.mxu0
  %v1661 = vadd.f32 %v1332, %v1660
  %1662 = vmatmul.bf16.gmra.mxu0 %v1004
  %v1663 = vpop.f32.mrf.mxu0
  %v1664 = vadd.f32 %v1335, %v1663
  %v1665 = vpop.f32.mrf.mxu0
  %v1666 = vadd.f32 %v1337, %v1665
  %1667 = vdwg.mxu0
  %v1668 = vmax.f32 %v1349, %v1429
  %v1669 = vmax.f32 %v1668, %v1509
  %v1670 = vmax.f32 %v1669, %v1589
  %v1671 = vmax.f32 %v1351, %v1431
  %v1672 = vmax.f32 %v1671, %v1511
  %v1673 = vmax.f32 %v1672, %v1591
  %v1674 = vmax.f32 %v1354, %v1434
  %v1675 = vmax.f32 %v1674, %v1514
  %v1676 = vmax.f32 %v1675, %v1594
  %v1677 = vmax.f32 %v1356, %v1436
  %v1678 = vmax.f32 %v1677, %v1516
  %v1679 = vmax.f32 %v1678, %v1596
  %v1680 = vmax.f32 %v1359, %v1439
  %v1681 = vmax.f32 %v1680, %v1519
  %v1682 = vmax.f32 %v1681, %v1599
  %v1683 = vmax.f32 %v1361, %v1441
  %v1684 = vmax.f32 %v1683, %v1521
  %v1685 = vmax.f32 %v1684, %v1601
  %v1686 = vmax.f32 %v1364, %v1444
  %v1687 = vmax.f32 %v1686, %v1524
  %v1688 = vmax.f32 %v1687, %v1604
  %v1689 = vmax.f32 %v1366, %v1446
  %v1690 = vmax.f32 %v1689, %v1526
  %v1691 = vmax.f32 %v1690, %v1606
  %v1692 = vmax.f32 %v1369, %v1449
  %v1693 = vmax.f32 %v1692, %v1529
  %v1694 = vmax.f32 %v1693, %v1609
  %v1695 = vmax.f32 %v1371, %v1451
  %v1696 = vmax.f32 %v1695, %v1531
  %v1697 = vmax.f32 %v1696, %v1611
  %v1698 = vmax.f32 %v1374, %v1454
  %v1699 = vmax.f32 %v1698, %v1534
  %v1700 = vmax.f32 %v1699, %v1614
  %v1701 = vmax.f32 %v1376, %v1456
  %v1702 = vmax.f32 %v1701, %v1536
  %v1703 = vmax.f32 %v1702, %v1616
  %v1704 = vmax.f32 %v1379, %v1459
  %v1705 = vmax.f32 %v1704, %v1539
  %v1706 = vmax.f32 %v1705, %v1619
  %v1707 = vmax.f32 %v1381, %v1461
  %v1708 = vmax.f32 %v1707, %v1541
  %v1709 = vmax.f32 %v1708, %v1621
  %v1710 = vmax.f32 %v1384, %v1464
  %v1711 = vmax.f32 %v1710, %v1544
  %v1712 = vmax.f32 %v1711, %v1624
  %v1713 = vmax.f32 %v1386, %v1466
  %v1714 = vmax.f32 %v1713, %v1546
  %v1715 = vmax.f32 %v1714, %v1626
  %v1716 = vmax.f32 %v1389, %v1469
  %v1717 = vmax.f32 %v1716, %v1549
  %v1718 = vmax.f32 %v1717, %v1629
  %v1719 = vmax.f32 %v1391, %v1471
  %v1720 = vmax.f32 %v1719, %v1551
  %v1721 = vmax.f32 %v1720, %v1631
  %v1722 = vmax.f32 %v1394, %v1474
  %v1723 = vmax.f32 %v1722, %v1554
  %v1724 = vmax.f32 %v1723, %v1634
  %v1725 = vmax.f32 %v1396, %v1476
  %v1726 = vmax.f32 %v1725, %v1556
  %v1727 = vmax.f32 %v1726, %v1636
  %v1728 = vmax.f32 %v1399, %v1479
  %v1729 = vmax.f32 %v1728, %v1559
  %v1730 = vmax.f32 %v1729, %v1639
  %v1731 = vmax.f32 %v1401, %v1481
  %v1732 = vmax.f32 %v1731, %v1561
  %v1733 = vmax.f32 %v1732, %v1641
  %v1734 = vmax.f32 %v1404, %v1484
  %v1735 = vmax.f32 %v1734, %v1564
  %v1736 = vmax.f32 %v1735, %v1644
  %v1737 = vmax.f32 %v1406, %v1486
  %v1738 = vmax.f32 %v1737, %v1566
  %v1739 = vmax.f32 %v1738, %v1646
  %v1740 = vmax.f32 %v1409, %v1489
  %v1741 = vmax.f32 %v1740, %v1569
  %v1742 = vmax.f32 %v1741, %v1649
  %v1743 = vmax.f32 %v1411, %v1491
  %v1744 = vmax.f32 %v1743, %v1571
  %v1745 = vmax.f32 %v1744, %v1651
  %v1746 = vmax.f32 %v1414, %v1494
  %v1747 = vmax.f32 %v1746, %v1574
  %v1748 = vmax.f32 %v1747, %v1654
  %v1749 = vmax.f32 %v1416, %v1496
  %v1750 = vmax.f32 %v1749, %v1576
  %v1751 = vmax.f32 %v1750, %v1656
  %v1752 = vmax.f32 %v1419, %v1499
  %v1753 = vmax.f32 %v1752, %v1579
  %v1754 = vmax.f32 %v1753, %v1659
  %v1755 = vmax.f32 %v1421, %v1501
  %v1756 = vmax.f32 %v1755, %v1581
  %v1757 = vmax.f32 %v1756, %v1661
  %v1758 = vmax.f32 %v1424, %v1504
  %v1759 = vmax.f32 %v1758, %v1584
  %v1760 = vmax.f32 %v1759, %v1664
  %v1761 = vmax.f32 %v1426, %v1506
  %v1762 = vmax.f32 %v1761, %v1586
  %v1763 = vmax.f32 %v1762, %v1666
  %v1764 = vld [vmem:[%s2] sm:$0x1]
  %v1766 = vperm.slane %v1764, 0
  %v1768 = vadd.f32 %v1670, %v1766
  %v1769 = vadd.f32 %v1673, %v1766
  %v1770 = vadd.f32 %v1676, %v1766
  %v1771 = vadd.f32 %v1679, %v1766
  %v1772 = vadd.f32 %v1682, %v1766
  %v1773 = vadd.f32 %v1685, %v1766
  %v1774 = vadd.f32 %v1688, %v1766
  %v1775 = vadd.f32 %v1691, %v1766
  %v1776 = vadd.f32 %v1694, %v1766
  %v1777 = vadd.f32 %v1697, %v1766
  %v1778 = vadd.f32 %v1700, %v1766
  %v1779 = vadd.f32 %v1703, %v1766
  %v1780 = vadd.f32 %v1706, %v1766
  %v1781 = vadd.f32 %v1709, %v1766
  %v1782 = vadd.f32 %v1712, %v1766
  %v1783 = vadd.f32 %v1715, %v1766
  %v1784 = vadd.f32 %v1718, %v1766
  %v1785 = vadd.f32 %v1721, %v1766
  %v1786 = vadd.f32 %v1724, %v1766
  %v1787 = vadd.f32 %v1727, %v1766
  %v1788 = vadd.f32 %v1730, %v1766
  %v1789 = vadd.f32 %v1733, %v1766
  %v1790 = vadd.f32 %v1736, %v1766
  %v1791 = vadd.f32 %v1739, %v1766
  %v1792 = vadd.f32 %v1742, %v1766
  %v1793 = vadd.f32 %v1745, %v1766
  %v1794 = vadd.f32 %v1748, %v1766
  %v1795 = vadd.f32 %v1751, %v1766
  %v1796 = vadd.f32 %v1754, %v1766
  %v1797 = vadd.f32 %v1757, %v1766
  %v1798 = vadd.f32 %v1760, %v1766
  %v1799 = vadd.f32 %v1763, %v1766
  %v1800 = vmax.f32 %v1768, 0.0
  %v1801 = vmax.f32 %v1769, 0.0
  %v1802 = vmax.f32 %v1770, 0.0
  %v1803 = vmax.f32 %v1771, 0.0
  %v1804 = vmax.f32 %v1772, 0.0
  %v1805 = vmax.f32 %v1773, 0.0
  %v1806 = vmax.f32 %v1774, 0.0
  %v1807 = vmax.f32 %v1775, 0.0
  %v1808 = vmax.f32 %v1776, 0.0
  %v1809 = vmax.f32 %v1777, 0.0
  %v1810 = vmax.f32 %v1778, 0.0
  %v1811 = vmax.f32 %v1779, 0.0
  %v1812 = vmax.f32 %v1780, 0.0
  %v1813 = vmax.f32 %v1781, 0.0
  %v1814 = vmax.f32 %v1782, 0.0
  %v1815 = vmax.f32 %v1783, 0.0
  %v1816 = vmax.f32 %v1784, 0.0
  %v1817 = vmax.f32 %v1785, 0.0
  %v1818 = vmax.f32 %v1786, 0.0
  %v1819 = vmax.f32 %v1787, 0.0
  %v1820 = vmax.f32 %v1788, 0.0
  %v1821 = vmax.f32 %v1789, 0.0
  %v1822 = vmax.f32 %v1790, 0.0
  %v1823 = vmax.f32 %v1791, 0.0
  %v1824 = vmax.f32 %v1792, 0.0
  %v1825 = vmax.f32 %v1793, 0.0
  %v1826 = vmax.f32 %v1794, 0.0
  %v1827 = vmax.f32 %v1795, 0.0
  %v1828 = vmax.f32 %v1796, 0.0
  %v1829 = vmax.f32 %v1797, 0.0
  %v1830 = vmax.f32 %v1798, 0.0
  %v1831 = vmax.f32 %v1799, 0.0
  %v1832 = vpack.c.bf16 %v1800, %v1800
  %v1833 = vpack.c.bf16 %v1801, %v1801
  %v1834 = vpack.c.bf16 %v1802, %v1802
  %v1835 = vpack.c.bf16 %v1803, %v1803
  %v1836 = vpack.c.bf16 %v1804, %v1804
  %v1837 = vpack.c.bf16 %v1805, %v1805
  %v1838 = vpack.c.bf16 %v1806, %v1806
  %v1839 = vpack.c.bf16 %v1807, %v1807
  %v1840 = vpack.c.bf16 %v1808, %v1808
  %v1841 = vpack.c.bf16 %v1809, %v1809
  %v1842 = vpack.c.bf16 %v1810, %v1810
  %v1843 = vpack.c.bf16 %v1811, %v1811
  %v1844 = vpack.c.bf16 %v1812, %v1812
  %v1845 = vpack.c.bf16 %v1813, %v1813
  %v1846 = vpack.c.bf16 %v1814, %v1814
  %v1847 = vpack.c.bf16 %v1815, %v1815
  %v1848 = vpack.c.bf16 %v1816, %v1816
  %v1849 = vpack.c.bf16 %v1817, %v1817
  %v1850 = vpack.c.bf16 %v1818, %v1818
  %v1851 = vpack.c.bf16 %v1819, %v1819
  %v1852 = vpack.c.bf16 %v1820, %v1820
  %v1853 = vpack.c.bf16 %v1821, %v1821
  %v1854 = vpack.c.bf16 %v1822, %v1822
  %v1855 = vpack.c.bf16 %v1823, %v1823
  %v1856 = vpack.c.bf16 %v1824, %v1824
  %v1857 = vpack.c.bf16 %v1825, %v1825
  %v1858 = vpack.c.bf16 %v1826, %v1826
  %v1859 = vpack.c.bf16 %v1827, %v1827
  %v1860 = vpack.c.bf16 %v1828, %v1828
  %v1861 = vpack.c.bf16 %v1829, %v1829
  %v1862 = vpack.c.bf16 %v1830, %v1830
  %v1863 = vpack.c.bf16 %v1831, %v1831
  %v1864 = vld [vmem:[%s3] sm:$0xf]
  %v1865 = vld [vmem:[%s3 + $0x4] sm:$0xf]
  %v1866 = vld [vmem:[%s3 + $0x8] sm:$0xf]
  %v1867 = vld [vmem:[%s3 + $0xc] sm:$0xf]
  %v1868 = vld [vmem:[%s3 + $0x10] sm:$0xf]
  %v1869 = vld [vmem:[%s3 + $0x14] sm:$0xf]
  %v1870 = vld [vmem:[%s3 + $0x18] sm:$0xf]
  %v1871 = vld [vmem:[%s3 + $0x1c] sm:$0xf]
  %v1872 = vld [vmem:[%s3 + $0x20] sm:$0xf]
  %v1873 = vld [vmem:[%s3 + $0x24] sm:$0xf]
  %v1874 = vld [vmem:[%s3 + $0x28] sm:$0xf]
  %v1875 = vld [vmem:[%s3 + $0x2c] sm:$0xf]
  %v1876 = vld [vmem:[%s3 + $0x30] sm:$0xf]
  %v1877 = vld [vmem:[%s3 + $0x34] sm:$0xf]
  %v1878 = vld [vmem:[%s3 + $0x38] sm:$0xf]
  %v1879 = vld [vmem:[%s3 + $0x3c] sm:$0xf]
  %s1880 = scalar_lea.vmem %s3, 64
  %v1881 = vld [vmem:[%s1880] sm:$0xf]
  %v1882 = vld [vmem:[%s1880 + $0x4] sm:$0xf]
  %v1883 = vld [vmem:[%s1880 + $0x8] sm:$0xf]
  %v1884 = vld [vmem:[%s1880 + $0xc] sm:$0xf]
  %v1885 = vld [vmem:[%s1880 + $0x10] sm:$0xf]
  %v1886 = vld [vmem:[%s1880 + $0x14] sm:$0xf]
  %v1887 = vld [vmem:[%s1880 + $0x18] sm:$0xf]
  %v1888 = vld [vmem:[%s1880 + $0x1c] sm:$0xf]
  %v1889 = vld [vmem:[%s1880 + $0x20] sm:$0xf]
  %v1890 = vld [vmem:[%s1880 + $0x24] sm:$0xf]
  %v1891 = vld [vmem:[%s1880 + $0x28] sm:$0xf]
  %v1892 = vld [vmem:[%s1880 + $0x2c] sm:$0xf]
  %v1893 = vld [vmem:[%s1880 + $0x30] sm:$0xf]
  %v1894 = vld [vmem:[%s1880 + $0x34] sm:$0xf]
  %v1895 = vld [vmem:[%s1880 + $0x38] sm:$0xf]
  %v1896 = vld [vmem:[%s1880 + $0x3c] sm:$0xf]
  %v1899 = vunpack.c.l.b16 %v1834
  %v1900 = vunpack.c.l.b16 %v1835
  %v1901 = vpack.c.b16 %v1900, %v1899
  %v1919 = vunpack.c.l.b16 %v1881
  %v1920 = vunpack.c.l.b16 %v1882
  %v1921 = vunpack.c.l.b16 %v1883
  %v1922 = vunpack.c.l.b16 %v1884
  %v1923 = vunpack.c.l.b16 %v1885
  %v1924 = vunpack.c.l.b16 %v1886
  %v1925 = vunpack.c.l.b16 %v1887
  %v1926 = vunpack.c.l.b16 %v1888
  %v1927 = vunpack.c.l.b16 %v1889
  %v1928 = vunpack.c.l.b16 %v1890
  %v1929 = vunpack.c.l.b16 %v1891
  %v1930 = vunpack.c.l.b16 %v1892
  %v1931 = vunpack.c.l.b16 %v1893
  %v1932 = vunpack.c.l.b16 %v1894
  %v1933 = vunpack.c.l.b16 %v1895
  %v1934 = vunpack.c.l.b16 %v1896
  %v1935 = vpack.c.b16 %v1920, %v1919
  %v1936 = vpack.c.b16 %v1922, %v1921
  %v1937 = vpack.c.b16 %v1924, %v1923
  %v1938 = vpack.c.b16 %v1926, %v1925
  %v1939 = vpack.c.b16 %v1928, %v1927
  %v1940 = vpack.c.b16 %v1930, %v1929
  %v1941 = vpack.c.b16 %v1932, %v1931
  %v1942 = vpack.c.b16 %v1934, %v1933
  %1951 = vmatpush.bf16.msra.mxu0 %v1942
  %1952 = vmatpush.bf16.msra.mxu0 %v1941
  %1953 = vmatpush.bf16.msra.mxu0 %v1940
  %1954 = vmatpush.bf16.msra.mxu0 %v1939
  %1955 = vmatpush.bf16.msra.mxu0 %v1938
  %1956 = vmatpush.bf16.msra.mxu0 %v1937
  %1957 = vmatpush.bf16.msra.mxu0 %v1936
  %1958 = vmatpush.bf16.msra.mxu0 %v1935
  %1959 = vmatmul.bf16.gmra.mxu0 %v1901
  %v1960 = vpop.f32.mrf.mxu0
  %v1961 = vadd.f32 0.0, %v1960
  %v1962 = vpop.f32.mrf.mxu0
  %v1963 = vadd.f32 0.0, %v1962
  %1964 = vdwg.mxu0
  %v1967 = vunpack.c.l.b16 %v1832
  %v1968 = vunpack.c.l.b16 %v1833
  %v1969 = vpack.c.b16 %v1968, %v1967
  %v1987 = vunpack.c.l.b16 %v1864
  %v1988 = vunpack.c.l.b16 %v1865
  %v1989 = vunpack.c.l.b16 %v1866
  %v1990 = vunpack.c.l.b16 %v1867
  %v1991 = vunpack.c.l.b16 %v1868
  %v1992 = vunpack.c.l.b16 %v1869
  %v1993 = vunpack.c.l.b16 %v1870
  %v1994 = vunpack.c.l.b16 %v1871
  %v1995 = vunpack.c.l.b16 %v1872
  %v1996 = vunpack.c.l.b16 %v1873
  %v1997 = vunpack.c.l.b16 %v1874
  %v1998 = vunpack.c.l.b16 %v1875
  %v1999 = vunpack.c.l.b16 %v1876
  %v2000 = vunpack.c.l.b16 %v1877
  %v2001 = vunpack.c.l.b16 %v1878
  %v2002 = vunpack.c.l.b16 %v1879
  %v2003 = vpack.c.b16 %v1988, %v1987
  %v2004 = vpack.c.b16 %v1990, %v1989
  %v2005 = vpack.c.b16 %v1992, %v1991
  %v2006 = vpack.c.b16 %v1994, %v1993
  %v2007 = vpack.c.b16 %v1996, %v1995
  %v2008 = vpack.c.b16 %v1998, %v1997
  %v2009 = vpack.c.b16 %v2000, %v1999
  %v2010 = vpack.c.b16 %v2002, %v2001
  %2019 = vmatpush.bf16.msra.mxu0 %v2010
  %2020 = vmatpush.bf16.msra.mxu0 %v2009
  %2021 = vmatpush.bf16.msra.mxu0 %v2008
  %2022 = vmatpush.bf16.msra.mxu0 %v2007
  %2023 = vmatpush.bf16.msra.mxu0 %v2006
  %2024 = vmatpush.bf16.msra.mxu0 %v2005
  %2025 = vmatpush.bf16.msra.mxu0 %v2004
  %2026 = vmatpush.bf16.msra.mxu0 %v2003
  %2027 = vmatmul.bf16.gmra.mxu0 %v1969
  %v2028 = vpop.f32.mrf.mxu0
  %v2029 = vadd.f32 %v1961, %v2028
  %v2030 = vpop.f32.mrf.mxu0
  %v2031 = vadd.f32 %v1963, %v2030
  %2032 = vdwg.mxu0
  %s2033 = scalar_lea.vmem %s3, 128
  %v2034 = vld [vmem:[%s2033] sm:$0xf]
  %v2035 = vld [vmem:[%s2033 + $0x4] sm:$0xf]
  %v2036 = vld [vmem:[%s2033 + $0x8] sm:$0xf]
  %v2037 = vld [vmem:[%s2033 + $0xc] sm:$0xf]
  %v2038 = vld [vmem:[%s2033 + $0x10] sm:$0xf]
  %v2039 = vld [vmem:[%s2033 + $0x14] sm:$0xf]
  %v2040 = vld [vmem:[%s2033 + $0x18] sm:$0xf]
  %v2041 = vld [vmem:[%s2033 + $0x1c] sm:$0xf]
  %v2042 = vld [vmem:[%s2033 + $0x20] sm:$0xf]
  %v2043 = vld [vmem:[%s2033 + $0x24] sm:$0xf]
  %v2044 = vld [vmem:[%s2033 + $0x28] sm:$0xf]
  %v2045 = vld [vmem:[%s2033 + $0x2c] sm:$0xf]
  %v2046 = vld [vmem:[%s2033 + $0x30] sm:$0xf]
  %v2047 = vld [vmem:[%s2033 + $0x34] sm:$0xf]
  %v2048 = vld [vmem:[%s2033 + $0x38] sm:$0xf]
  %v2049 = vld [vmem:[%s2033 + $0x3c] sm:$0xf]
  %v2052 = vunpack.c.l.b16 %v1836
  %v2053 = vunpack.c.l.b16 %v1837
  %v2054 = vpack.c.b16 %v2053, %v2052
  %v2072 = vunpack.c.l.b16 %v2034
  %v2073 = vunpack.c.l.b16 %v2035
  %v2074 = vunpack.c.l.b16 %v2036
  %v2075 = vunpack.c.l.b16 %v2037
  %v2076 = vunpack.c.l.b16 %v2038
  %v2077 = vunpack.c.l.b16 %v2039
  %v2078 = vunpack.c.l.b16 %v2040
  %v2079 = vunpack.c.l.b16 %v2041
  %v2080 = vunpack.c.l.b16 %v2042
  %v2081 = vunpack.c.l.b16 %v2043
  %v2082 = vunpack.c.l.b16 %v2044
  %v2083 = vunpack.c.l.b16 %v2045
  %v2084 = vunpack.c.l.b16 %v2046
  %v2085 = vunpack.c.l.b16 %v2047
  %v2086 = vunpack.c.l.b16 %v2048
  %v2087 = vunpack.c.l.b16 %v2049
  %v2088 = vpack.c.b16 %v2073, %v2072
  %v2089 = vpack.c.b16 %v2075, %v2074
  %v2090 = vpack.c.b16 %v2077, %v2076
  %v2091 = vpack.c.b16 %v2079, %v2078
  %v2092 = vpack.c.b16 %v2081, %v2080
  %v2093 = vpack.c.b16 %v2083, %v2082
  %v2094 = vpack.c.b16 %v2085, %v2084
  %v2095 = vpack.c.b16 %v2087, %v2086
  %2104 = vmatpush.bf16.msra.mxu0 %v2095
  %2105 = vmatpush.bf16.msra.mxu0 %v2094
  %2106 = vmatpush.bf16.msra.mxu0 %v2093
  %2107 = vmatpush.bf16.msra.mxu0 %v2092
  %2108 = vmatpush.bf16.msra.mxu0 %v2091
  %2109 = vmatpush.bf16.msra.mxu0 %v2090
  %2110 = vmatpush.bf16.msra.mxu0 %v2089
  %2111 = vmatpush.bf16.msra.mxu0 %v2088
  %2112 = vmatmul.bf16.gmra.mxu0 %v2054
  %v2113 = vpop.f32.mrf.mxu0
  %v2114 = vadd.f32 0.0, %v2113
  %v2115 = vpop.f32.mrf.mxu0
  %v2116 = vadd.f32 0.0, %v2115
  %2117 = vdwg.mxu0
  %v2118 = vadd.f32 %v2029, %v2114
  %v2119 = vadd.f32 %v2031, %v2116
  %s2120 = scalar_lea.vmem %s3, 192
  %v2121 = vld [vmem:[%s2120] sm:$0xf]
  %v2122 = vld [vmem:[%s2120 + $0x4] sm:$0xf]
  %v2123 = vld [vmem:[%s2120 + $0x8] sm:$0xf]
  %v2124 = vld [vmem:[%s2120 + $0xc] sm:$0xf]
  %v2125 = vld [vmem:[%s2120 + $0x10] sm:$0xf]
  %v2126 = vld [vmem:[%s2120 + $0x14] sm:$0xf]
  %v2127 = vld [vmem:[%s2120 + $0x18] sm:$0xf]
  %v2128 = vld [vmem:[%s2120 + $0x1c] sm:$0xf]
  %v2129 = vld [vmem:[%s2120 + $0x20] sm:$0xf]
  %v2130 = vld [vmem:[%s2120 + $0x24] sm:$0xf]
  %v2131 = vld [vmem:[%s2120 + $0x28] sm:$0xf]
  %v2132 = vld [vmem:[%s2120 + $0x2c] sm:$0xf]
  %v2133 = vld [vmem:[%s2120 + $0x30] sm:$0xf]
  %v2134 = vld [vmem:[%s2120 + $0x34] sm:$0xf]
  %v2135 = vld [vmem:[%s2120 + $0x38] sm:$0xf]
  %v2136 = vld [vmem:[%s2120 + $0x3c] sm:$0xf]
  %v2139 = vunpack.c.l.b16 %v1838
  %v2140 = vunpack.c.l.b16 %v1839
  %v2141 = vpack.c.b16 %v2140, %v2139
  %v2159 = vunpack.c.l.b16 %v2121
  %v2160 = vunpack.c.l.b16 %v2122
  %v2161 = vunpack.c.l.b16 %v2123
  %v2162 = vunpack.c.l.b16 %v2124
  %v2163 = vunpack.c.l.b16 %v2125
  %v2164 = vunpack.c.l.b16 %v2126
  %v2165 = vunpack.c.l.b16 %v2127
  %v2166 = vunpack.c.l.b16 %v2128
  %v2167 = vunpack.c.l.b16 %v2129
  %v2168 = vunpack.c.l.b16 %v2130
  %v2169 = vunpack.c.l.b16 %v2131
  %v2170 = vunpack.c.l.b16 %v2132
  %v2171 = vunpack.c.l.b16 %v2133
  %v2172 = vunpack.c.l.b16 %v2134
  %v2173 = vunpack.c.l.b16 %v2135
  %v2174 = vunpack.c.l.b16 %v2136
  %v2175 = vpack.c.b16 %v2160, %v2159
  %v2176 = vpack.c.b16 %v2162, %v2161
  %v2177 = vpack.c.b16 %v2164, %v2163
  %v2178 = vpack.c.b16 %v2166, %v2165
  %v2179 = vpack.c.b16 %v2168, %v2167
  %v2180 = vpack.c.b16 %v2170, %v2169
  %v2181 = vpack.c.b16 %v2172, %v2171
  %v2182 = vpack.c.b16 %v2174, %v2173
  %2191 = vmatpush.bf16.msra.mxu0 %v2182
  %2192 = vmatpush.bf16.msra.mxu0 %v2181
  %2193 = vmatpush.bf16.msra.mxu0 %v2180
  %2194 = vmatpush.bf16.msra.mxu0 %v2179
  %2195 = vmatpush.bf16.msra.mxu0 %v2178
  %2196 = vmatpush.bf16.msra.mxu0 %v2177
  %2197 = vmatpush.bf16.msra.mxu0 %v2176
  %2198 = vmatpush.bf16.msra.mxu0 %v2175
  %2199 = vmatmul.bf16.gmra.mxu0 %v2141
  %v2200 = vpop.f32.mrf.mxu0
  %v2201 = vadd.f32 0.0, %v2200
  %v2202 = vpop.f32.mrf.mxu0
  %v2203 = vadd.f32 0.0, %v2202
  %2204 = vdwg.mxu0
  %v2205 = vadd.f32 %v2118, %v2201
  %v2206 = vadd.f32 %v2119, %v2203
  %s2207 = scalar_lea.vmem %s3, 256
  %v2208 = vld [vmem:[%s2207] sm:$0xf]
  %v2209 = vld [vmem:[%s2207 + $0x4] sm:$0xf]
  %v2210 = vld [vmem:[%s2207 + $0x8] sm:$0xf]
  %v2211 = vld [vmem:[%s2207 + $0xc] sm:$0xf]
  %v2212 = vld [vmem:[%s2207 + $0x10] sm:$0xf]
  %v2213 = vld [vmem:[%s2207 + $0x14] sm:$0xf]
  %v2214 = vld [vmem:[%s2207 + $0x18] sm:$0xf]
  %v2215 = vld [vmem:[%s2207 + $0x1c] sm:$0xf]
  %v2216 = vld [vmem:[%s2207 + $0x20] sm:$0xf]
  %v2217 = vld [vmem:[%s2207 + $0x24] sm:$0xf]
  %v2218 = vld [vmem:[%s2207 + $0x28] sm:$0xf]
  %v2219 = vld [vmem:[%s2207 + $0x2c] sm:$0xf]
  %v2220 = vld [vmem:[%s2207 + $0x30] sm:$0xf]
  %v2221 = vld [vmem:[%s2207 + $0x34] sm:$0xf]
  %v2222 = vld [vmem:[%s2207 + $0x38] sm:$0xf]
  %v2223 = vld [vmem:[%s2207 + $0x3c] sm:$0xf]
  %v2226 = vunpack.c.l.b16 %v1840
  %v2227 = vunpack.c.l.b16 %v1841
  %v2228 = vpack.c.b16 %v2227, %v2226
  %v2246 = vunpack.c.l.b16 %v2208
  %v2247 = vunpack.c.l.b16 %v2209
  %v2248 = vunpack.c.l.b16 %v2210
  %v2249 = vunpack.c.l.b16 %v2211
  %v2250 = vunpack.c.l.b16 %v2212
  %v2251 = vunpack.c.l.b16 %v2213
  %v2252 = vunpack.c.l.b16 %v2214
  %v2253 = vunpack.c.l.b16 %v2215
  %v2254 = vunpack.c.l.b16 %v2216
  %v2255 = vunpack.c.l.b16 %v2217
  %v2256 = vunpack.c.l.b16 %v2218
  %v2257 = vunpack.c.l.b16 %v2219
  %v2258 = vunpack.c.l.b16 %v2220
  %v2259 = vunpack.c.l.b16 %v2221
  %v2260 = vunpack.c.l.b16 %v2222
  %v2261 = vunpack.c.l.b16 %v2223
  %v2262 = vpack.c.b16 %v2247, %v2246
  %v2263 = vpack.c.b16 %v2249, %v2248
  %v2264 = vpack.c.b16 %v2251, %v2250
  %v2265 = vpack.c.b16 %v2253, %v2252
  %v2266 = vpack.c.b16 %v2255, %v2254
  %v2267 = vpack.c.b16 %v2257, %v2256
  %v2268 = vpack.c.b16 %v2259, %v2258
  %v2269 = vpack.c.b16 %v2261, %v2260
  %2278 = vmatpush.bf16.msra.mxu0 %v2269
  %2279 = vmatpush.bf16.msra.mxu0 %v2268
  %2280 = vmatpush.bf16.msra.mxu0 %v2267
  %2281 = vmatpush.bf16.msra.mxu0 %v2266
  %2282 = vmatpush.bf16.msra.mxu0 %v2265
  %2283 = vmatpush.bf16.msra.mxu0 %v2264
  %2284 = vmatpush.bf16.msra.mxu0 %v2263
  %2285 = vmatpush.bf16.msra.mxu0 %v2262
  %2286 = vmatmul.bf16.gmra.mxu0 %v2228
  %v2287 = vpop.f32.mrf.mxu0
  %v2288 = vadd.f32 0.0, %v2287
  %v2289 = vpop.f32.mrf.mxu0
  %v2290 = vadd.f32 0.0, %v2289
  %2291 = vdwg.mxu0
  %v2292 = vadd.f32 %v2205, %v2288
  %v2293 = vadd.f32 %v2206, %v2290
  %s2294 = scalar_lea.vmem %s3, 320
  %v2295 = vld [vmem:[%s2294] sm:$0xf]
  %v2296 = vld [vmem:[%s2294 + $0x4] sm:$0xf]
  %v2297 = vld [vmem:[%s2294 + $0x8] sm:$0xf]
  %v2298 = vld [vmem:[%s2294 + $0xc] sm:$0xf]
  %v2299 = vld [vmem:[%s2294 + $0x10] sm:$0xf]
  %v2300 = vld [vmem:[%s2294 + $0x14] sm:$0xf]
  %v2301 = vld [vmem:[%s2294 + $0x18] sm:$0xf]
  %v2302 = vld [vmem:[%s2294 + $0x1c] sm:$0xf]
  %v2303 = vld [vmem:[%s2294 + $0x20] sm:$0xf]
  %v2304 = vld [vmem:[%s2294 + $0x24] sm:$0xf]
  %v2305 = vld [vmem:[%s2294 + $0x28] sm:$0xf]
  %v2306 = vld [vmem:[%s2294 + $0x2c] sm:$0xf]
  %v2307 = vld [vmem:[%s2294 + $0x30] sm:$0xf]
  %v2308 = vld [vmem:[%s2294 + $0x34] sm:$0xf]
  %v2309 = vld [vmem:[%s2294 + $0x38] sm:$0xf]
  %v2310 = vld [vmem:[%s2294 + $0x3c] sm:$0xf]
  %v2313 = vunpack.c.l.b16 %v1842
  %v2314 = vunpack.c.l.b16 %v1843
  %v2315 = vpack.c.b16 %v2314, %v2313
  %v2333 = vunpack.c.l.b16 %v2295
  %v2334 = vunpack.c.l.b16 %v2296
  %v2335 = vunpack.c.l.b16 %v2297
  %v2336 = vunpack.c.l.b16 %v2298
  %v2337 = vunpack.c.l.b16 %v2299
  %v2338 = vunpack.c.l.b16 %v2300
  %v2339 = vunpack.c.l.b16 %v2301
  %v2340 = vunpack.c.l.b16 %v2302
  %v2341 = vunpack.c.l.b16 %v2303
  %v2342 = vunpack.c.l.b16 %v2304
  %v2343 = vunpack.c.l.b16 %v2305
  %v2344 = vunpack.c.l.b16 %v2306
  %v2345 = vunpack.c.l.b16 %v2307
  %v2346 = vunpack.c.l.b16 %v2308
  %v2347 = vunpack.c.l.b16 %v2309
  %v2348 = vunpack.c.l.b16 %v2310
  %v2349 = vpack.c.b16 %v2334, %v2333
  %v2350 = vpack.c.b16 %v2336, %v2335
  %v2351 = vpack.c.b16 %v2338, %v2337
  %v2352 = vpack.c.b16 %v2340, %v2339
  %v2353 = vpack.c.b16 %v2342, %v2341
  %v2354 = vpack.c.b16 %v2344, %v2343
  %v2355 = vpack.c.b16 %v2346, %v2345
  %v2356 = vpack.c.b16 %v2348, %v2347
  %2365 = vmatpush.bf16.msra.mxu0 %v2356
  %2366 = vmatpush.bf16.msra.mxu0 %v2355
  %2367 = vmatpush.bf16.msra.mxu0 %v2354
  %2368 = vmatpush.bf16.msra.mxu0 %v2353
  %2369 = vmatpush.bf16.msra.mxu0 %v2352
  %2370 = vmatpush.bf16.msra.mxu0 %v2351
  %2371 = vmatpush.bf16.msra.mxu0 %v2350
  %2372 = vmatpush.bf16.msra.mxu0 %v2349
  %2373 = vmatmul.bf16.gmra.mxu0 %v2315
  %v2374 = vpop.f32.mrf.mxu0
  %v2375 = vadd.f32 0.0, %v2374
  %v2376 = vpop.f32.mrf.mxu0
  %v2377 = vadd.f32 0.0, %v2376
  %2378 = vdwg.mxu0
  %v2379 = vadd.f32 %v2292, %v2375
  %v2380 = vadd.f32 %v2293, %v2377
  %s2381 = scalar_lea.vmem %s3, 384
  %v2382 = vld [vmem:[%s2381] sm:$0xf]
  %v2383 = vld [vmem:[%s2381 + $0x4] sm:$0xf]
  %v2384 = vld [vmem:[%s2381 + $0x8] sm:$0xf]
  %v2385 = vld [vmem:[%s2381 + $0xc] sm:$0xf]
  %v2386 = vld [vmem:[%s2381 + $0x10] sm:$0xf]
  %v2387 = vld [vmem:[%s2381 + $0x14] sm:$0xf]
  %v2388 = vld [vmem:[%s2381 + $0x18] sm:$0xf]
  %v2389 = vld [vmem:[%s2381 + $0x1c] sm:$0xf]
  %v2390 = vld [vmem:[%s2381 + $0x20] sm:$0xf]
  %v2391 = vld [vmem:[%s2381 + $0x24] sm:$0xf]
  %v2392 = vld [vmem:[%s2381 + $0x28] sm:$0xf]
  %v2393 = vld [vmem:[%s2381 + $0x2c] sm:$0xf]
  %v2394 = vld [vmem:[%s2381 + $0x30] sm:$0xf]
  %v2395 = vld [vmem:[%s2381 + $0x34] sm:$0xf]
  %v2396 = vld [vmem:[%s2381 + $0x38] sm:$0xf]
  %v2397 = vld [vmem:[%s2381 + $0x3c] sm:$0xf]
  %v2400 = vunpack.c.l.b16 %v1844
  %v2401 = vunpack.c.l.b16 %v1845
  %v2402 = vpack.c.b16 %v2401, %v2400
  %v2420 = vunpack.c.l.b16 %v2382
  %v2421 = vunpack.c.l.b16 %v2383
  %v2422 = vunpack.c.l.b16 %v2384
  %v2423 = vunpack.c.l.b16 %v2385
  %v2424 = vunpack.c.l.b16 %v2386
  %v2425 = vunpack.c.l.b16 %v2387
  %v2426 = vunpack.c.l.b16 %v2388
  %v2427 = vunpack.c.l.b16 %v2389
  %v2428 = vunpack.c.l.b16 %v2390
  %v2429 = vunpack.c.l.b16 %v2391
  %v2430 = vunpack.c.l.b16 %v2392
  %v2431 = vunpack.c.l.b16 %v2393
  %v2432 = vunpack.c.l.b16 %v2394
  %v2433 = vunpack.c.l.b16 %v2395
  %v2434 = vunpack.c.l.b16 %v2396
  %v2435 = vunpack.c.l.b16 %v2397
  %v2436 = vpack.c.b16 %v2421, %v2420
  %v2437 = vpack.c.b16 %v2423, %v2422
  %v2438 = vpack.c.b16 %v2425, %v2424
  %v2439 = vpack.c.b16 %v2427, %v2426
  %v2440 = vpack.c.b16 %v2429, %v2428
  %v2441 = vpack.c.b16 %v2431, %v2430
  %v2442 = vpack.c.b16 %v2433, %v2432
  %v2443 = vpack.c.b16 %v2435, %v2434
  %2452 = vmatpush.bf16.msra.mxu0 %v2443
  %2453 = vmatpush.bf16.msra.mxu0 %v2442
  %2454 = vmatpush.bf16.msra.mxu0 %v2441
  %2455 = vmatpush.bf16.msra.mxu0 %v2440
  %2456 = vmatpush.bf16.msra.mxu0 %v2439
  %2457 = vmatpush.bf16.msra.mxu0 %v2438
  %2458 = vmatpush.bf16.msra.mxu0 %v2437
  %2459 = vmatpush.bf16.msra.mxu0 %v2436
  %2460 = vmatmul.bf16.gmra.mxu0 %v2402
  %v2461 = vpop.f32.mrf.mxu0
  %v2462 = vadd.f32 0.0, %v2461
  %v2463 = vpop.f32.mrf.mxu0
  %v2464 = vadd.f32 0.0, %v2463
  %2465 = vdwg.mxu0
  %v2466 = vadd.f32 %v2379, %v2462
  %v2467 = vadd.f32 %v2380, %v2464
  %s2468 = scalar_lea.vmem %s3, 448
  %v2469 = vld [vmem:[%s2468] sm:$0xf]
  %v2470 = vld [vmem:[%s2468 + $0x4] sm:$0xf]
  %v2471 = vld [vmem:[%s2468 + $0x8] sm:$0xf]
  %v2472 = vld [vmem:[%s2468 + $0xc] sm:$0xf]
  %v2473 = vld [vmem:[%s2468 + $0x10] sm:$0xf]
  %v2474 = vld [vmem:[%s2468 + $0x14] sm:$0xf]
  %v2475 = vld [vmem:[%s2468 + $0x18] sm:$0xf]
  %v2476 = vld [vmem:[%s2468 + $0x1c] sm:$0xf]
  %v2477 = vld [vmem:[%s2468 + $0x20] sm:$0xf]
  %v2478 = vld [vmem:[%s2468 + $0x24] sm:$0xf]
  %v2479 = vld [vmem:[%s2468 + $0x28] sm:$0xf]
  %v2480 = vld [vmem:[%s2468 + $0x2c] sm:$0xf]
  %v2481 = vld [vmem:[%s2468 + $0x30] sm:$0xf]
  %v2482 = vld [vmem:[%s2468 + $0x34] sm:$0xf]
  %v2483 = vld [vmem:[%s2468 + $0x38] sm:$0xf]
  %v2484 = vld [vmem:[%s2468 + $0x3c] sm:$0xf]
  %v2487 = vunpack.c.l.b16 %v1846
  %v2488 = vunpack.c.l.b16 %v1847
  %v2489 = vpack.c.b16 %v2488, %v2487
  %v2507 = vunpack.c.l.b16 %v2469
  %v2508 = vunpack.c.l.b16 %v2470
  %v2509 = vunpack.c.l.b16 %v2471
  %v2510 = vunpack.c.l.b16 %v2472
  %v2511 = vunpack.c.l.b16 %v2473
  %v2512 = vunpack.c.l.b16 %v2474
  %v2513 = vunpack.c.l.b16 %v2475
  %v2514 = vunpack.c.l.b16 %v2476
  %v2515 = vunpack.c.l.b16 %v2477
  %v2516 = vunpack.c.l.b16 %v2478
  %v2517 = vunpack.c.l.b16 %v2479
  %v2518 = vunpack.c.l.b16 %v2480
  %v2519 = vunpack.c.l.b16 %v2481
  %v2520 = vunpack.c.l.b16 %v2482
  %v2521 = vunpack.c.l.b16 %v2483
  %v2522 = vunpack.c.l.b16 %v2484
  %v2523 = vpack.c.b16 %v2508, %v2507
  %v2524 = vpack.c.b16 %v2510, %v2509
  %v2525 = vpack.c.b16 %v2512, %v2511
  %v2526 = vpack.c.b16 %v2514, %v2513
  %v2527 = vpack.c.b16 %v2516, %v2515
  %v2528 = vpack.c.b16 %v2518, %v2517
  %v2529 = vpack.c.b16 %v2520, %v2519
  %v2530 = vpack.c.b16 %v2522, %v2521
  %2539 = vmatpush.bf16.msra.mxu0 %v2530
  %2540 = vmatpush.bf16.msra.mxu0 %v2529
  %2541 = vmatpush.bf16.msra.mxu0 %v2528
  %2542 = vmatpush.bf16.msra.mxu0 %v2527
  %2543 = vmatpush.bf16.msra.mxu0 %v2526
  %2544 = vmatpush.bf16.msra.mxu0 %v2525
  %2545 = vmatpush.bf16.msra.mxu0 %v2524
  %2546 = vmatpush.bf16.msra.mxu0 %v2523
  %2547 = vmatmul.bf16.gmra.mxu0 %v2489
  %v2548 = vpop.f32.mrf.mxu0
  %v2549 = vadd.f32 0.0, %v2548
  %v2550 = vpop.f32.mrf.mxu0
  %v2551 = vadd.f32 0.0, %v2550
  %2552 = vdwg.mxu0
  %v2553 = vadd.f32 %v2466, %v2549
  %v2554 = vadd.f32 %v2467, %v2551
  %s2555 = scalar_lea.vmem %s3, 512
  %v2556 = vld [vmem:[%s2555] sm:$0xf]
  %v2557 = vld [vmem:[%s2555 + $0x4] sm:$0xf]
  %v2558 = vld [vmem:[%s2555 + $0x8] sm:$0xf]
  %v2559 = vld [vmem:[%s2555 + $0xc] sm:$0xf]
  %v2560 = vld [vmem:[%s2555 + $0x10] sm:$0xf]
  %v2561 = vld [vmem:[%s2555 + $0x14] sm:$0xf]
  %v2562 = vld [vmem:[%s2555 + $0x18] sm:$0xf]
  %v2563 = vld [vmem:[%s2555 + $0x1c] sm:$0xf]
  %v2564 = vld [vmem:[%s2555 + $0x20] sm:$0xf]
  %v2565 = vld [vmem:[%s2555 + $0x24] sm:$0xf]
  %v2566 = vld [vmem:[%s2555 + $0x28] sm:$0xf]
  %v2567 = vld [vmem:[%s2555 + $0x2c] sm:$0xf]
  %v2568 = vld [vmem:[%s2555 + $0x30] sm:$0xf]
  %v2569 = vld [vmem:[%s2555 + $0x34] sm:$0xf]
  %v2570 = vld [vmem:[%s2555 + $0x38] sm:$0xf]
  %v2571 = vld [vmem:[%s2555 + $0x3c] sm:$0xf]
  %v2574 = vunpack.c.l.b16 %v1848
  %v2575 = vunpack.c.l.b16 %v1849
  %v2576 = vpack.c.b16 %v2575, %v2574
  %v2594 = vunpack.c.l.b16 %v2556
  %v2595 = vunpack.c.l.b16 %v2557
  %v2596 = vunpack.c.l.b16 %v2558
  %v2597 = vunpack.c.l.b16 %v2559
  %v2598 = vunpack.c.l.b16 %v2560
  %v2599 = vunpack.c.l.b16 %v2561
  %v2600 = vunpack.c.l.b16 %v2562
  %v2601 = vunpack.c.l.b16 %v2563
  %v2602 = vunpack.c.l.b16 %v2564
  %v2603 = vunpack.c.l.b16 %v2565
  %v2604 = vunpack.c.l.b16 %v2566
  %v2605 = vunpack.c.l.b16 %v2567
  %v2606 = vunpack.c.l.b16 %v2568
  %v2607 = vunpack.c.l.b16 %v2569
  %v2608 = vunpack.c.l.b16 %v2570
  %v2609 = vunpack.c.l.b16 %v2571
  %v2610 = vpack.c.b16 %v2595, %v2594
  %v2611 = vpack.c.b16 %v2597, %v2596
  %v2612 = vpack.c.b16 %v2599, %v2598
  %v2613 = vpack.c.b16 %v2601, %v2600
  %v2614 = vpack.c.b16 %v2603, %v2602
  %v2615 = vpack.c.b16 %v2605, %v2604
  %v2616 = vpack.c.b16 %v2607, %v2606
  %v2617 = vpack.c.b16 %v2609, %v2608
  %2626 = vmatpush.bf16.msra.mxu0 %v2617
  %2627 = vmatpush.bf16.msra.mxu0 %v2616
  %2628 = vmatpush.bf16.msra.mxu0 %v2615
  %2629 = vmatpush.bf16.msra.mxu0 %v2614
  %2630 = vmatpush.bf16.msra.mxu0 %v2613
  %2631 = vmatpush.bf16.msra.mxu0 %v2612
  %2632 = vmatpush.bf16.msra.mxu0 %v2611
  %2633 = vmatpush.bf16.msra.mxu0 %v2610
  %2634 = vmatmul.bf16.gmra.mxu0 %v2576
  %v2635 = vpop.f32.mrf.mxu0
  %v2636 = vadd.f32 0.0, %v2635
  %v2637 = vpop.f32.mrf.mxu0
  %v2638 = vadd.f32 0.0, %v2637
  %2639 = vdwg.mxu0
  %v2640 = vadd.f32 %v2553, %v2636
  %v2641 = vadd.f32 %v2554, %v2638
  %s2642 = scalar_lea.vmem %s3, 576
  %v2643 = vld [vmem:[%s2642] sm:$0xf]
  %v2644 = vld [vmem:[%s2642 + $0x4] sm:$0xf]
  %v2645 = vld [vmem:[%s2642 + $0x8] sm:$0xf]
  %v2646 = vld [vmem:[%s2642 + $0xc] sm:$0xf]
  %v2647 = vld [vmem:[%s2642 + $0x10] sm:$0xf]
  %v2648 = vld [vmem:[%s2642 + $0x14] sm:$0xf]
  %v2649 = vld [vmem:[%s2642 + $0x18] sm:$0xf]
  %v2650 = vld [vmem:[%s2642 + $0x1c] sm:$0xf]
  %v2651 = vld [vmem:[%s2642 + $0x20] sm:$0xf]
  %v2652 = vld [vmem:[%s2642 + $0x24] sm:$0xf]
  %v2653 = vld [vmem:[%s2642 + $0x28] sm:$0xf]
  %v2654 = vld [vmem:[%s2642 + $0x2c] sm:$0xf]
  %v2655 = vld [vmem:[%s2642 + $0x30] sm:$0xf]
  %v2656 = vld [vmem:[%s2642 + $0x34] sm:$0xf]
  %v2657 = vld [vmem:[%s2642 + $0x38] sm:$0xf]
  %v2658 = vld [vmem:[%s2642 + $0x3c] sm:$0xf]
  %v2661 = vunpack.c.l.b16 %v1850
  %v2662 = vunpack.c.l.b16 %v1851
  %v2663 = vpack.c.b16 %v2662, %v2661
  %v2681 = vunpack.c.l.b16 %v2643
  %v2682 = vunpack.c.l.b16 %v2644
  %v2683 = vunpack.c.l.b16 %v2645
  %v2684 = vunpack.c.l.b16 %v2646
  %v2685 = vunpack.c.l.b16 %v2647
  %v2686 = vunpack.c.l.b16 %v2648
  %v2687 = vunpack.c.l.b16 %v2649
  %v2688 = vunpack.c.l.b16 %v2650
  %v2689 = vunpack.c.l.b16 %v2651
  %v2690 = vunpack.c.l.b16 %v2652
  %v2691 = vunpack.c.l.b16 %v2653
  %v2692 = vunpack.c.l.b16 %v2654
  %v2693 = vunpack.c.l.b16 %v2655
  %v2694 = vunpack.c.l.b16 %v2656
  %v2695 = vunpack.c.l.b16 %v2657
  %v2696 = vunpack.c.l.b16 %v2658
  %v2697 = vpack.c.b16 %v2682, %v2681
  %v2698 = vpack.c.b16 %v2684, %v2683
  %v2699 = vpack.c.b16 %v2686, %v2685
  %v2700 = vpack.c.b16 %v2688, %v2687
  %v2701 = vpack.c.b16 %v2690, %v2689
  %v2702 = vpack.c.b16 %v2692, %v2691
  %v2703 = vpack.c.b16 %v2694, %v2693
  %v2704 = vpack.c.b16 %v2696, %v2695
  %2713 = vmatpush.bf16.msra.mxu0 %v2704
  %2714 = vmatpush.bf16.msra.mxu0 %v2703
  %2715 = vmatpush.bf16.msra.mxu0 %v2702
  %2716 = vmatpush.bf16.msra.mxu0 %v2701
  %2717 = vmatpush.bf16.msra.mxu0 %v2700
  %2718 = vmatpush.bf16.msra.mxu0 %v2699
  %2719 = vmatpush.bf16.msra.mxu0 %v2698
  %2720 = vmatpush.bf16.msra.mxu0 %v2697
  %2721 = vmatmul.bf16.gmra.mxu0 %v2663
  %v2722 = vpop.f32.mrf.mxu0
  %v2723 = vadd.f32 0.0, %v2722
  %v2724 = vpop.f32.mrf.mxu0
  %v2725 = vadd.f32 0.0, %v2724
  %2726 = vdwg.mxu0
  %v2727 = vadd.f32 %v2640, %v2723
  %v2728 = vadd.f32 %v2641, %v2725
  %s2729 = scalar_lea.vmem %s3, 640
  %v2730 = vld [vmem:[%s2729] sm:$0xf]
  %v2731 = vld [vmem:[%s2729 + $0x4] sm:$0xf]
  %v2732 = vld [vmem:[%s2729 + $0x8] sm:$0xf]
  %v2733 = vld [vmem:[%s2729 + $0xc] sm:$0xf]
  %v2734 = vld [vmem:[%s2729 + $0x10] sm:$0xf]
  %v2735 = vld [vmem:[%s2729 + $0x14] sm:$0xf]
  %v2736 = vld [vmem:[%s2729 + $0x18] sm:$0xf]
  %v2737 = vld [vmem:[%s2729 + $0x1c] sm:$0xf]
  %v2738 = vld [vmem:[%s2729 + $0x20] sm:$0xf]
  %v2739 = vld [vmem:[%s2729 + $0x24] sm:$0xf]
  %v2740 = vld [vmem:[%s2729 + $0x28] sm:$0xf]
  %v2741 = vld [vmem:[%s2729 + $0x2c] sm:$0xf]
  %v2742 = vld [vmem:[%s2729 + $0x30] sm:$0xf]
  %v2743 = vld [vmem:[%s2729 + $0x34] sm:$0xf]
  %v2744 = vld [vmem:[%s2729 + $0x38] sm:$0xf]
  %v2745 = vld [vmem:[%s2729 + $0x3c] sm:$0xf]
  %v2748 = vunpack.c.l.b16 %v1852
  %v2749 = vunpack.c.l.b16 %v1853
  %v2750 = vpack.c.b16 %v2749, %v2748
  %v2768 = vunpack.c.l.b16 %v2730
  %v2769 = vunpack.c.l.b16 %v2731
  %v2770 = vunpack.c.l.b16 %v2732
  %v2771 = vunpack.c.l.b16 %v2733
  %v2772 = vunpack.c.l.b16 %v2734
  %v2773 = vunpack.c.l.b16 %v2735
  %v2774 = vunpack.c.l.b16 %v2736
  %v2775 = vunpack.c.l.b16 %v2737
  %v2776 = vunpack.c.l.b16 %v2738
  %v2777 = vunpack.c.l.b16 %v2739
  %v2778 = vunpack.c.l.b16 %v2740
  %v2779 = vunpack.c.l.b16 %v2741
  %v2780 = vunpack.c.l.b16 %v2742
  %v2781 = vunpack.c.l.b16 %v2743
  %v2782 = vunpack.c.l.b16 %v2744
  %v2783 = vunpack.c.l.b16 %v2745
  %v2784 = vpack.c.b16 %v2769, %v2768
  %v2785 = vpack.c.b16 %v2771, %v2770
  %v2786 = vpack.c.b16 %v2773, %v2772
  %v2787 = vpack.c.b16 %v2775, %v2774
  %v2788 = vpack.c.b16 %v2777, %v2776
  %v2789 = vpack.c.b16 %v2779, %v2778
  %v2790 = vpack.c.b16 %v2781, %v2780
  %v2791 = vpack.c.b16 %v2783, %v2782
  %2800 = vmatpush.bf16.msra.mxu0 %v2791
  %2801 = vmatpush.bf16.msra.mxu0 %v2790
  %2802 = vmatpush.bf16.msra.mxu0 %v2789
  %2803 = vmatpush.bf16.msra.mxu0 %v2788
  %2804 = vmatpush.bf16.msra.mxu0 %v2787
  %2805 = vmatpush.bf16.msra.mxu0 %v2786
  %2806 = vmatpush.bf16.msra.mxu0 %v2785
  %2807 = vmatpush.bf16.msra.mxu0 %v2784
  %2808 = vmatmul.bf16.gmra.mxu0 %v2750
  %v2809 = vpop.f32.mrf.mxu0
  %v2810 = vadd.f32 0.0, %v2809
  %v2811 = vpop.f32.mrf.mxu0
  %v2812 = vadd.f32 0.0, %v2811
  %2813 = vdwg.mxu0
  %v2814 = vadd.f32 %v2727, %v2810
  %v2815 = vadd.f32 %v2728, %v2812
  %s2816 = scalar_lea.vmem %s3, 704
  %v2817 = vld [vmem:[%s2816] sm:$0xf]
  %v2818 = vld [vmem:[%s2816 + $0x4] sm:$0xf]
  %v2819 = vld [vmem:[%s2816 + $0x8] sm:$0xf]
  %v2820 = vld [vmem:[%s2816 + $0xc] sm:$0xf]
  %v2821 = vld [vmem:[%s2816 + $0x10] sm:$0xf]
  %v2822 = vld [vmem:[%s2816 + $0x14] sm:$0xf]
  %v2823 = vld [vmem:[%s2816 + $0x18] sm:$0xf]
  %v2824 = vld [vmem:[%s2816 + $0x1c] sm:$0xf]
  %v2825 = vld [vmem:[%s2816 + $0x20] sm:$0xf]
  %v2826 = vld [vmem:[%s2816 + $0x24] sm:$0xf]
  %v2827 = vld [vmem:[%s2816 + $0x28] sm:$0xf]
  %v2828 = vld [vmem:[%s2816 + $0x2c] sm:$0xf]
  %v2829 = vld [vmem:[%s2816 + $0x30] sm:$0xf]
  %v2830 = vld [vmem:[%s2816 + $0x34] sm:$0xf]
  %v2831 = vld [vmem:[%s2816 + $0x38] sm:$0xf]
  %v2832 = vld [vmem:[%s2816 + $0x3c] sm:$0xf]
  %v2835 = vunpack.c.l.b16 %v1854
  %v2836 = vunpack.c.l.b16 %v1855
  %v2837 = vpack.c.b16 %v2836, %v2835
  %v2855 = vunpack.c.l.b16 %v2817
  %v2856 = vunpack.c.l.b16 %v2818
  %v2857 = vunpack.c.l.b16 %v2819
  %v2858 = vunpack.c.l.b16 %v2820
  %v2859 = vunpack.c.l.b16 %v2821
  %v2860 = vunpack.c.l.b16 %v2822
  %v2861 = vunpack.c.l.b16 %v2823
  %v2862 = vunpack.c.l.b16 %v2824
  %v2863 = vunpack.c.l.b16 %v2825
  %v2864 = vunpack.c.l.b16 %v2826
  %v2865 = vunpack.c.l.b16 %v2827
  %v2866 = vunpack.c.l.b16 %v2828
  %v2867 = vunpack.c.l.b16 %v2829
  %v2868 = vunpack.c.l.b16 %v2830
  %v2869 = vunpack.c.l.b16 %v2831
  %v2870 = vunpack.c.l.b16 %v2832
  %v2871 = vpack.c.b16 %v2856, %v2855
  %v2872 = vpack.c.b16 %v2858, %v2857
  %v2873 = vpack.c.b16 %v2860, %v2859
  %v2874 = vpack.c.b16 %v2862, %v2861
  %v2875 = vpack.c.b16 %v2864, %v2863
  %v2876 = vpack.c.b16 %v2866, %v2865
  %v2877 = vpack.c.b16 %v2868, %v2867
  %v2878 = vpack.c.b16 %v2870, %v2869
  %2887 = vmatpush.bf16.msra.mxu0 %v2878
  %2888 = vmatpush.bf16.msra.mxu0 %v2877
  %2889 = vmatpush.bf16.msra.mxu0 %v2876
  %2890 = vmatpush.bf16.msra.mxu0 %v2875
  %2891 = vmatpush.bf16.msra.mxu0 %v2874
  %2892 = vmatpush.bf16.msra.mxu0 %v2873
  %2893 = vmatpush.bf16.msra.mxu0 %v2872
  %2894 = vmatpush.bf16.msra.mxu0 %v2871
  %2895 = vmatmul.bf16.gmra.mxu0 %v2837
  %v2896 = vpop.f32.mrf.mxu0
  %v2897 = vadd.f32 0.0, %v2896
  %v2898 = vpop.f32.mrf.mxu0
  %v2899 = vadd.f32 0.0, %v2898
  %2900 = vdwg.mxu0
  %v2901 = vadd.f32 %v2814, %v2897
  %v2902 = vadd.f32 %v2815, %v2899
  %s2903 = scalar_lea.vmem %s3, 768
  %v2904 = vld [vmem:[%s2903] sm:$0xf]
  %v2905 = vld [vmem:[%s2903 + $0x4] sm:$0xf]
  %v2906 = vld [vmem:[%s2903 + $0x8] sm:$0xf]
  %v2907 = vld [vmem:[%s2903 + $0xc] sm:$0xf]
  %v2908 = vld [vmem:[%s2903 + $0x10] sm:$0xf]
  %v2909 = vld [vmem:[%s2903 + $0x14] sm:$0xf]
  %v2910 = vld [vmem:[%s2903 + $0x18] sm:$0xf]
  %v2911 = vld [vmem:[%s2903 + $0x1c] sm:$0xf]
  %v2912 = vld [vmem:[%s2903 + $0x20] sm:$0xf]
  %v2913 = vld [vmem:[%s2903 + $0x24] sm:$0xf]
  %v2914 = vld [vmem:[%s2903 + $0x28] sm:$0xf]
  %v2915 = vld [vmem:[%s2903 + $0x2c] sm:$0xf]
  %v2916 = vld [vmem:[%s2903 + $0x30] sm:$0xf]
  %v2917 = vld [vmem:[%s2903 + $0x34] sm:$0xf]
  %v2918 = vld [vmem:[%s2903 + $0x38] sm:$0xf]
  %v2919 = vld [vmem:[%s2903 + $0x3c] sm:$0xf]
  %v2922 = vunpack.c.l.b16 %v1856
  %v2923 = vunpack.c.l.b16 %v1857
  %v2924 = vpack.c.b16 %v2923, %v2922
  %v2942 = vunpack.c.l.b16 %v2904
  %v2943 = vunpack.c.l.b16 %v2905
  %v2944 = vunpack.c.l.b16 %v2906
  %v2945 = vunpack.c.l.b16 %v2907
  %v2946 = vunpack.c.l.b16 %v2908
  %v2947 = vunpack.c.l.b16 %v2909
  %v2948 = vunpack.c.l.b16 %v2910
  %v2949 = vunpack.c.l.b16 %v2911
  %v2950 = vunpack.c.l.b16 %v2912
  %v2951 = vunpack.c.l.b16 %v2913
  %v2952 = vunpack.c.l.b16 %v2914
  %v2953 = vunpack.c.l.b16 %v2915
  %v2954 = vunpack.c.l.b16 %v2916
  %v2955 = vunpack.c.l.b16 %v2917
  %v2956 = vunpack.c.l.b16 %v2918
  %v2957 = vunpack.c.l.b16 %v2919
  %v2958 = vpack.c.b16 %v2943, %v2942
  %v2959 = vpack.c.b16 %v2945, %v2944
  %v2960 = vpack.c.b16 %v2947, %v2946
  %v2961 = vpack.c.b16 %v2949, %v2948
  %v2962 = vpack.c.b16 %v2951, %v2950
  %v2963 = vpack.c.b16 %v2953, %v2952
  %v2964 = vpack.c.b16 %v2955, %v2954
  %v2965 = vpack.c.b16 %v2957, %v2956
  %2974 = vmatpush.bf16.msra.mxu0 %v2965
  %2975 = vmatpush.bf16.msra.mxu0 %v2964
  %2976 = vmatpush.bf16.msra.mxu0 %v2963
  %2977 = vmatpush.bf16.msra.mxu0 %v2962
  %2978 = vmatpush.bf16.msra.mxu0 %v2961
  %2979 = vmatpush.bf16.msra.mxu0 %v2960
  %2980 = vmatpush.bf16.msra.mxu0 %v2959
  %2981 = vmatpush.bf16.msra.mxu0 %v2958
  %2982 = vmatmul.bf16.gmra.mxu0 %v2924
  %v2983 = vpop.f32.mrf.mxu0
  %v2984 = vadd.f32 0.0, %v2983
  %v2985 = vpop.f32.mrf.mxu0
  %v2986 = vadd.f32 0.0, %v2985
  %2987 = vdwg.mxu0
  %v2988 = vadd.f32 %v2901, %v2984
  %v2989 = vadd.f32 %v2902, %v2986
  %s2990 = scalar_lea.vmem %s3, 832
  %v2991 = vld [vmem:[%s2990] sm:$0xf]
  %v2992 = vld [vmem:[%s2990 + $0x4] sm:$0xf]
  %v2993 = vld [vmem:[%s2990 + $0x8] sm:$0xf]
  %v2994 = vld [vmem:[%s2990 + $0xc] sm:$0xf]
  %v2995 = vld [vmem:[%s2990 + $0x10] sm:$0xf]
  %v2996 = vld [vmem:[%s2990 + $0x14] sm:$0xf]
  %v2997 = vld [vmem:[%s2990 + $0x18] sm:$0xf]
  %v2998 = vld [vmem:[%s2990 + $0x1c] sm:$0xf]
  %v2999 = vld [vmem:[%s2990 + $0x20] sm:$0xf]
  %v3000 = vld [vmem:[%s2990 + $0x24] sm:$0xf]
  %v3001 = vld [vmem:[%s2990 + $0x28] sm:$0xf]
  %v3002 = vld [vmem:[%s2990 + $0x2c] sm:$0xf]
  %v3003 = vld [vmem:[%s2990 + $0x30] sm:$0xf]
  %v3004 = vld [vmem:[%s2990 + $0x34] sm:$0xf]
  %v3005 = vld [vmem:[%s2990 + $0x38] sm:$0xf]
  %v3006 = vld [vmem:[%s2990 + $0x3c] sm:$0xf]
  %v3009 = vunpack.c.l.b16 %v1858
  %v3010 = vunpack.c.l.b16 %v1859
  %v3011 = vpack.c.b16 %v3010, %v3009
  %v3029 = vunpack.c.l.b16 %v2991
  %v3030 = vunpack.c.l.b16 %v2992
  %v3031 = vunpack.c.l.b16 %v2993
  %v3032 = vunpack.c.l.b16 %v2994
  %v3033 = vunpack.c.l.b16 %v2995
  %v3034 = vunpack.c.l.b16 %v2996
  %v3035 = vunpack.c.l.b16 %v2997
  %v3036 = vunpack.c.l.b16 %v2998
  %v3037 = vunpack.c.l.b16 %v2999
  %v3038 = vunpack.c.l.b16 %v3000
  %v3039 = vunpack.c.l.b16 %v3001
  %v3040 = vunpack.c.l.b16 %v3002
  %v3041 = vunpack.c.l.b16 %v3003
  %v3042 = vunpack.c.l.b16 %v3004
  %v3043 = vunpack.c.l.b16 %v3005
  %v3044 = vunpack.c.l.b16 %v3006
  %v3045 = vpack.c.b16 %v3030, %v3029
  %v3046 = vpack.c.b16 %v3032, %v3031
  %v3047 = vpack.c.b16 %v3034, %v3033
  %v3048 = vpack.c.b16 %v3036, %v3035
  %v3049 = vpack.c.b16 %v3038, %v3037
  %v3050 = vpack.c.b16 %v3040, %v3039
  %v3051 = vpack.c.b16 %v3042, %v3041
  %v3052 = vpack.c.b16 %v3044, %v3043
  %3061 = vmatpush.bf16.msra.mxu0 %v3052
  %3062 = vmatpush.bf16.msra.mxu0 %v3051
  %3063 = vmatpush.bf16.msra.mxu0 %v3050
  %3064 = vmatpush.bf16.msra.mxu0 %v3049
  %3065 = vmatpush.bf16.msra.mxu0 %v3048
  %3066 = vmatpush.bf16.msra.mxu0 %v3047
  %3067 = vmatpush.bf16.msra.mxu0 %v3046
  %3068 = vmatpush.bf16.msra.mxu0 %v3045
  %3069 = vmatmul.bf16.gmra.mxu0 %v3011
  %v3070 = vpop.f32.mrf.mxu0
  %v3071 = vadd.f32 0.0, %v3070
  %v3072 = vpop.f32.mrf.mxu0
  %v3073 = vadd.f32 0.0, %v3072
  %3074 = vdwg.mxu0
  %v3075 = vadd.f32 %v2988, %v3071
  %v3076 = vadd.f32 %v2989, %v3073
  %s3077 = scalar_lea.vmem %s3, 896
  %v3078 = vld [vmem:[%s3077] sm:$0xf]
  %v3079 = vld [vmem:[%s3077 + $0x4] sm:$0xf]
  %v3080 = vld [vmem:[%s3077 + $0x8] sm:$0xf]
  %v3081 = vld [vmem:[%s3077 + $0xc] sm:$0xf]
  %v3082 = vld [vmem:[%s3077 + $0x10] sm:$0xf]
  %v3083 = vld [vmem:[%s3077 + $0x14] sm:$0xf]
  %v3084 = vld [vmem:[%s3077 + $0x18] sm:$0xf]
  %v3085 = vld [vmem:[%s3077 + $0x1c] sm:$0xf]
  %v3086 = vld [vmem:[%s3077 + $0x20] sm:$0xf]
  %v3087 = vld [vmem:[%s3077 + $0x24] sm:$0xf]
  %v3088 = vld [vmem:[%s3077 + $0x28] sm:$0xf]
  %v3089 = vld [vmem:[%s3077 + $0x2c] sm:$0xf]
  %v3090 = vld [vmem:[%s3077 + $0x30] sm:$0xf]
  %v3091 = vld [vmem:[%s3077 + $0x34] sm:$0xf]
  %v3092 = vld [vmem:[%s3077 + $0x38] sm:$0xf]
  %v3093 = vld [vmem:[%s3077 + $0x3c] sm:$0xf]
  %v3096 = vunpack.c.l.b16 %v1860
  %v3097 = vunpack.c.l.b16 %v1861
  %v3098 = vpack.c.b16 %v3097, %v3096
  %v3116 = vunpack.c.l.b16 %v3078
  %v3117 = vunpack.c.l.b16 %v3079
  %v3118 = vunpack.c.l.b16 %v3080
  %v3119 = vunpack.c.l.b16 %v3081
  %v3120 = vunpack.c.l.b16 %v3082
  %v3121 = vunpack.c.l.b16 %v3083
  %v3122 = vunpack.c.l.b16 %v3084
  %v3123 = vunpack.c.l.b16 %v3085
  %v3124 = vunpack.c.l.b16 %v3086
  %v3125 = vunpack.c.l.b16 %v3087
  %v3126 = vunpack.c.l.b16 %v3088
  %v3127 = vunpack.c.l.b16 %v3089
  %v3128 = vunpack.c.l.b16 %v3090
  %v3129 = vunpack.c.l.b16 %v3091
  %v3130 = vunpack.c.l.b16 %v3092
  %v3131 = vunpack.c.l.b16 %v3093
  %v3132 = vpack.c.b16 %v3117, %v3116
  %v3133 = vpack.c.b16 %v3119, %v3118
  %v3134 = vpack.c.b16 %v3121, %v3120
  %v3135 = vpack.c.b16 %v3123, %v3122
  %v3136 = vpack.c.b16 %v3125, %v3124
  %v3137 = vpack.c.b16 %v3127, %v3126
  %v3138 = vpack.c.b16 %v3129, %v3128
  %v3139 = vpack.c.b16 %v3131, %v3130
  %3148 = vmatpush.bf16.msra.mxu0 %v3139
  %3149 = vmatpush.bf16.msra.mxu0 %v3138
  %3150 = vmatpush.bf16.msra.mxu0 %v3137
  %3151 = vmatpush.bf16.msra.mxu0 %v3136
  %3152 = vmatpush.bf16.msra.mxu0 %v3135
  %3153 = vmatpush.bf16.msra.mxu0 %v3134
  %3154 = vmatpush.bf16.msra.mxu0 %v3133
  %3155 = vmatpush.bf16.msra.mxu0 %v3132
  %3156 = vmatmul.bf16.gmra.mxu0 %v3098
  %v3157 = vpop.f32.mrf.mxu0
  %v3158 = vadd.f32 0.0, %v3157
  %v3159 = vpop.f32.mrf.mxu0
  %v3160 = vadd.f32 0.0, %v3159
  %3161 = vdwg.mxu0
  %v3162 = vadd.f32 %v3075, %v3158
  %v3163 = vadd.f32 %v3076, %v3160
  %s3164 = scalar_lea.vmem %s3, 960
  %v3165 = vld [vmem:[%s3164] sm:$0xf]
  %v3166 = vld [vmem:[%s3164 + $0x4] sm:$0xf]
  %v3167 = vld [vmem:[%s3164 + $0x8] sm:$0xf]
  %v3168 = vld [vmem:[%s3164 + $0xc] sm:$0xf]
  %v3169 = vld [vmem:[%s3164 + $0x10] sm:$0xf]
  %v3170 = vld [vmem:[%s3164 + $0x14] sm:$0xf]
  %v3171 = vld [vmem:[%s3164 + $0x18] sm:$0xf]
  %v3172 = vld [vmem:[%s3164 + $0x1c] sm:$0xf]
  %v3173 = vld [vmem:[%s3164 + $0x20] sm:$0xf]
  %v3174 = vld [vmem:[%s3164 + $0x24] sm:$0xf]
  %v3175 = vld [vmem:[%s3164 + $0x28] sm:$0xf]
  %v3176 = vld [vmem:[%s3164 + $0x2c] sm:$0xf]
  %v3177 = vld [vmem:[%s3164 + $0x30] sm:$0xf]
  %v3178 = vld [vmem:[%s3164 + $0x34] sm:$0xf]
  %v3179 = vld [vmem:[%s3164 + $0x38] sm:$0xf]
  %v3180 = vld [vmem:[%s3164 + $0x3c] sm:$0xf]
  %v3183 = vunpack.c.l.b16 %v1862
  %v3184 = vunpack.c.l.b16 %v1863
  %v3185 = vpack.c.b16 %v3184, %v3183
  %v3203 = vunpack.c.l.b16 %v3165
  %v3204 = vunpack.c.l.b16 %v3166
  %v3205 = vunpack.c.l.b16 %v3167
  %v3206 = vunpack.c.l.b16 %v3168
  %v3207 = vunpack.c.l.b16 %v3169
  %v3208 = vunpack.c.l.b16 %v3170
  %v3209 = vunpack.c.l.b16 %v3171
  %v3210 = vunpack.c.l.b16 %v3172
  %v3211 = vunpack.c.l.b16 %v3173
  %v3212 = vunpack.c.l.b16 %v3174
  %v3213 = vunpack.c.l.b16 %v3175
  %v3214 = vunpack.c.l.b16 %v3176
  %v3215 = vunpack.c.l.b16 %v3177
  %v3216 = vunpack.c.l.b16 %v3178
  %v3217 = vunpack.c.l.b16 %v3179
  %v3218 = vunpack.c.l.b16 %v3180
  %v3219 = vpack.c.b16 %v3204, %v3203
  %v3220 = vpack.c.b16 %v3206, %v3205
  %v3221 = vpack.c.b16 %v3208, %v3207
  %v3222 = vpack.c.b16 %v3210, %v3209
  %v3223 = vpack.c.b16 %v3212, %v3211
  %v3224 = vpack.c.b16 %v3214, %v3213
  %v3225 = vpack.c.b16 %v3216, %v3215
  %v3226 = vpack.c.b16 %v3218, %v3217
  %3235 = vmatpush.bf16.msra.mxu0 %v3226
  %3236 = vmatpush.bf16.msra.mxu0 %v3225
  %3237 = vmatpush.bf16.msra.mxu0 %v3224
  %3238 = vmatpush.bf16.msra.mxu0 %v3223
  %3239 = vmatpush.bf16.msra.mxu0 %v3222
  %3240 = vmatpush.bf16.msra.mxu0 %v3221
  %3241 = vmatpush.bf16.msra.mxu0 %v3220
  %3242 = vmatpush.bf16.msra.mxu0 %v3219
  %3243 = vmatmul.bf16.gmra.mxu0 %v3185
  %v3244 = vpop.f32.mrf.mxu0
  %v3245 = vadd.f32 0.0, %v3244
  %v3246 = vpop.f32.mrf.mxu0
  %v3247 = vadd.f32 0.0, %v3246
  %3248 = vdwg.mxu0
  %v3249 = vadd.f32 %v3162, %v3245
  %v3250 = vadd.f32 %v3163, %v3247
  %v3251 = vld [vmem:[%s4] sm:$0x1]
  %v3253 = vperm.slane %v3251, 0
  %v3255 = vadd.f32 %v3249, %v3253
  %v3256 = vadd.f32 %v3250, %v3253
  %v3257 = vmax.f32 %v3255, 0.0
  %v3258 = vmax.f32 %v3256, 0.0
  %v3259 = vpack.c.bf16 %v3258, %v3257
  %v3260 = vld [vmem:[%s5] sm:$0xf]
  %v3261 = vld [vmem:[%s5 + $0x4] sm:$0xf]
  %v3262 = vld [vmem:[%s5 + $0x8] sm:$0xf]
  %v3263 = vld [vmem:[%s5 + $0xc] sm:$0xf]
  %v3264 = vld [vmem:[%s5 + $0x10] sm:$0xf]
  %v3265 = vld [vmem:[%s5 + $0x14] sm:$0xf]
  %v3266 = vld [vmem:[%s5 + $0x18] sm:$0xf]
  %v3267 = vld [vmem:[%s5 + $0x1c] sm:$0xf]
  %v3268 = vld [vmem:[%s5 + $0x20] sm:$0xf]
  %v3269 = vld [vmem:[%s5 + $0x24] sm:$0xf]
  %v3270 = vld [vmem:[%s5 + $0x28] sm:$0xf]
  %v3271 = vld [vmem:[%s5 + $0x2c] sm:$0xf]
  %v3272 = vld [vmem:[%s5 + $0x30] sm:$0xf]
  %v3273 = vld [vmem:[%s5 + $0x34] sm:$0xf]
  %v3274 = vld [vmem:[%s5 + $0x38] sm:$0xf]
  %v3275 = vld [vmem:[%s5 + $0x3c] sm:$0xf]
  %v3276 = vld [vmem:[%s6] sm:$0x1]
  %v3278 = vperm.slane %v3276, 0
  %v3296 = vunpack.c.l.b16 %v3260
  %v3297 = vunpack.c.l.b16 %v3261
  %v3298 = vunpack.c.l.b16 %v3262
  %v3299 = vunpack.c.l.b16 %v3263
  %v3300 = vunpack.c.l.b16 %v3264
  %v3301 = vunpack.c.l.b16 %v3265
  %v3302 = vunpack.c.l.b16 %v3266
  %v3303 = vunpack.c.l.b16 %v3267
  %v3304 = vunpack.c.l.b16 %v3268
  %v3305 = vunpack.c.l.b16 %v3269
  %v3306 = vunpack.c.l.b16 %v3270
  %v3307 = vunpack.c.l.b16 %v3271
  %v3308 = vunpack.c.l.b16 %v3272
  %v3309 = vunpack.c.l.b16 %v3273
  %v3310 = vunpack.c.l.b16 %v3274
  %v3311 = vunpack.c.l.b16 %v3275
  %v3312 = vpack.c.b16 %v3297, %v3296
  %v3313 = vpack.c.b16 %v3299, %v3298
  %v3314 = vpack.c.b16 %v3301, %v3300
  %v3315 = vpack.c.b16 %v3303, %v3302
  %v3316 = vpack.c.b16 %v3305, %v3304
  %v3317 = vpack.c.b16 %v3307, %v3306
  %v3318 = vpack.c.b16 %v3309, %v3308
  %v3319 = vpack.c.b16 %v3311, %v3310
  %3328 = vmatpush.bf16.msra.mxu0 %v3319
  %3329 = vmatpush.bf16.msra.mxu0 %v3318
  %3330 = vmatpush.bf16.msra.mxu0 %v3317
  %3331 = vmatpush.bf16.msra.mxu0 %v3316
  %3332 = vmatpush.bf16.msra.mxu0 %v3315
  %3333 = vmatpush.bf16.msra.mxu0 %v3314
  %3334 = vmatpush.bf16.msra.mxu0 %v3313
  %3335 = vmatpush.bf16.msra.mxu0 %v3312
  %3336 = vmatmul.bf16.gmra.mxu0 %v3259
  %v3337 = vpop.f32.mrf.mxu0
  %v3338 = vadd.f32 %v3278, %v3337
  %v3339 = vpop.f32.mrf.mxu0
  %v3340 = vadd.f32 %v3278, %v3339
  %3341 = vdwg.mxu0
  %v3342 = vmax.f32 %v3338, 0.0
  %v3343 = vmax.f32 %v3340, 0.0
  %v3344 = vpack.c.bf16 %v3343, %v3342
  %v3345 = vld [vmem:[%s7] sm:$0xf]
  %v3346 = vld [vmem:[%s7 + $0x4] sm:$0xf]
  %v3347 = vld [vmem:[%s7 + $0x8] sm:$0xf]
  %v3348 = vld [vmem:[%s7 + $0xc] sm:$0xf]
  %v3349 = vld [vmem:[%s7 + $0x10] sm:$0xf]
  %v3350 = vld [vmem:[%s7 + $0x14] sm:$0xf]
  %v3351 = vld [vmem:[%s7 + $0x18] sm:$0xf]
  %v3352 = vld [vmem:[%s7 + $0x1c] sm:$0xf]
  %v3353 = vld [vmem:[%s7 + $0x20] sm:$0xf]
  %v3354 = vld [vmem:[%s7 + $0x24] sm:$0xf]
  %v3355 = vld [vmem:[%s7 + $0x28] sm:$0xf]
  %v3356 = vld [vmem:[%s7 + $0x2c] sm:$0xf]
  %v3357 = vld [vmem:[%s7 + $0x30] sm:$0xf]
  %v3358 = vld [vmem:[%s7 + $0x34] sm:$0xf]
  %v3359 = vld [vmem:[%s7 + $0x38] sm:$0xf]
  %v3360 = vld [vmem:[%s7 + $0x3c] sm:$0xf]
  %v3361 = vld [vmem:[%s8] sm:$0x1]
  %v3363 = vperm.slane %v3361, 0
  %v3381 = vunpack.c.l.b16 %v3345
  %v3382 = vunpack.c.l.b16 %v3346
  %v3383 = vunpack.c.l.b16 %v3347
  %v3384 = vunpack.c.l.b16 %v3348
  %v3385 = vunpack.c.l.b16 %v3349
  %v3386 = vunpack.c.l.b16 %v3350
  %v3387 = vunpack.c.l.b16 %v3351
  %v3388 = vunpack.c.l.b16 %v3352
  %v3389 = vunpack.c.l.b16 %v3353
  %v3390 = vunpack.c.l.b16 %v3354
  %v3391 = vunpack.c.l.b16 %v3355
  %v3392 = vunpack.c.l.b16 %v3356
  %v3393 = vunpack.c.l.b16 %v3357
  %v3394 = vunpack.c.l.b16 %v3358
  %v3395 = vunpack.c.l.b16 %v3359
  %v3396 = vunpack.c.l.b16 %v3360
  %v3397 = vpack.c.b16 %v3382, %v3381
  %v3398 = vpack.c.b16 %v3384, %v3383
  %v3399 = vpack.c.b16 %v3386, %v3385
  %v3400 = vpack.c.b16 %v3388, %v3387
  %v3401 = vpack.c.b16 %v3390, %v3389
  %v3402 = vpack.c.b16 %v3392, %v3391
  %v3403 = vpack.c.b16 %v3394, %v3393
  %v3404 = vpack.c.b16 %v3396, %v3395
  %3413 = vmatpush.bf16.msra.mxu0 %v3404
  %3414 = vmatpush.bf16.msra.mxu0 %v3403
  %3415 = vmatpush.bf16.msra.mxu0 %v3402
  %3416 = vmatpush.bf16.msra.mxu0 %v3401
  %3417 = vmatpush.bf16.msra.mxu0 %v3400
  %3418 = vmatpush.bf16.msra.mxu0 %v3399
  %3419 = vmatpush.bf16.msra.mxu0 %v3398
  %3420 = vmatpush.bf16.msra.mxu0 %v3397
  %3421 = vmatmul.bf16.gmra.mxu0 %v3344
  %v3422 = vpop.f32.mrf.mxu0
  %v3423 = vadd.f32 %v3363, %v3422
  %v3424 = vpop.f32.mrf.mxu0
  %v3425 = vadd.f32 %v3363, %v3424
  %3426 = vdwg.mxu0
  %3427 = vst [vmem:[%s9] sm:$0xff] %v3423
  %3428 = vst [vmem:[%s9 + $0x8] sm:$0xff] %v3425
  // Predicated region
  $region38: #{net_forward.3} parent=0 // pred_check
    _
  $region39: #{net_forward.3} parent=0 // pred_check_branch
    %3430 = sbr.rel (0) target = $region41
  $region40: #{net_forward.3} parent=0 // pred_region
    _
  $region41: #{net_forward.3} parent=0 // pred_fallthru
    _
  // Predicated region
  $region42: #{net_forward.3} parent=0 // pred_check
    _
  $region43: #{net_forward.3} parent=0 // pred_check_branch
    %3432 = sbr.rel (0) target = $region45
  $region44: #{net_forward.3} parent=0 // pred_region
    _
  $region45: #{net_forward.3} parent=0 // pred_fallthru
    _

</llo_original>
